<compile_context>
chip_gen: v5e
topology: v5e:2x2
jax: 0.10.0
libtpu: 0.0.40
codegen_flags: <defaults>
</compile_context>

<pallas_src>
import math
import jax
import jax.numpy as jnp
from jax.experimental import pallas as pl
from jax.experimental.pallas import tpu as pltpu

D_MODEL = 32
NUM_HEADS = 4
D_FF = 64
D_K = D_MODEL // NUM_HEADS
LN_EPS = 1e-5  # PyTorch nn.LayerNorm default


# ---------------- math helpers (pure jnp; used inside and outside kernel) -----

def _layer_norm(x, gamma, beta):
    mu = jnp.mean(x, axis=-1, keepdims=True)
    var = jnp.mean((x - mu) ** 2, axis=-1, keepdims=True)  # biased, like torch
    return (x - mu) * jax.lax.rsqrt(var + LN_EPS) * gamma + beta


def _attn_core(q, k, v, bias, wo_h, bo, bt, sq, sk):
    """q: (bt*sq, D) already scaled by 1/sqrt(d_k); k, v: (bt*sk, D).
    bias: (bt, sq, sk) additive (-1e9 on masked).  wo_h: (H, D_K, D); bo: (1, D).
    Returns (bt*sq, D)."""
    out = None
    for h in range(NUM_HEADS):  # static unroll over 4 heads
        sl = slice(h * D_K, (h + 1) * D_K)
        qh = q[:, sl].reshape(bt, sq, D_K)
        kh = k[:, sl].reshape(bt, sk, D_K)
        vh = v[:, sl].reshape(bt, sk, D_K)
        # batched matmul, contracting the last dims => Q @ K^T with no transpose
        s = jnp.einsum('bqd,bkd->bqk', qh, kh,
                       preferred_element_type=jnp.float32) + bias
        s = s - jnp.max(s, axis=-1, keepdims=True)           # stable softmax
        p = jnp.exp(s)
        p = p / jnp.sum(p, axis=-1, keepdims=True)
        c = jnp.einsum('bqk,bkd->bqd', p, vh,
                       preferred_element_type=jnp.float32)   # (bt, sq, D_K)
        # combine_heads + W_o without concatenate: sum of per-head partials
        part = jnp.dot(c.reshape(bt * sq, D_K), wo_h[h],
                       preferred_element_type=jnp.float32)
        out = part if out is None else out + part
    return out + bo


# ------------------------------- Pallas kernel --------------------------------

def decoder_layer_kernel(x_ref, enc_ref, tmask_ref, smask_ref,
                         swqkv_ref, sbqkv_ref, swo_ref, sbo_ref,
                         cwq_ref, cbq_ref, cwkv_ref, cbkv_ref, cwo_ref, cbo_ref,
                         w1_ref, b1_ref, w2_ref, b2_ref,
                         lng_ref, lnb_ref, out_ref):
    bt, s, d = x_ref.shape
    s_enc = enc_ref.shape[1]
    m = bt * s

    x = x_ref[...].reshape(m, d)                  # (B_TILE*S, D)
    enc = enc_ref[...].reshape(bt * s_enc, d)     # (B_TILE*S_enc, D)

    # Additive mask bias, computed ONCE per attention (hoisted out of head loop).
    # NOTE: for a fully-masked row this differs from torch.masked_fill semantics
    # (unmasked-score softmax vs. uniform); no such rows occur for causal/src masks.
    tbias = jnp.where(tmask_ref[...] == 0.0, -1e9, 0.0)     # (bt, S, S)
    sbias = jnp.where(smask_ref[...] == 0.0, -1e9, 0.0)     # (bt, S, S_enc)

    lng, lnb = lng_ref[...], lnb_ref[...]

    # ---- self-attention: fused QKV projection (Q columns pre-scaled) ----------
    qkv = jnp.dot(x, swqkv_ref[...],
                  preferred_element_type=jnp.float32) + sbqkv_ref[...]   # (m, 3D)
    a1 = _attn_core(qkv[:, :d], qkv[:, d:2 * d], qkv[:, 2 * d:],
                    tbias, swo_ref[...], sbo_ref[...], bt, s, s)
    x1 = _layer_norm(x + a1, lng[0], lnb[0])      # dropout == identity (eval)

    # ---- cross-attention: Q from x1, fused KV from encoder output -------------
    qc = jnp.dot(x1, cwq_ref[...],
                 preferred_element_type=jnp.float32) + cbq_ref[...]      # (m, D)
    kv = jnp.dot(enc, cwkv_ref[...],
                 preferred_element_type=jnp.float32) + cbkv_ref[...]     # (mk, 2D)
    a2 = _attn_core(qc, kv[:, :d], kv[:, d:],
                    sbias, cwo_ref[...], cbo_ref[...], bt, s, s_enc)
    x2 = _layer_norm(x1 + a2, lng[1], lnb[1])

    # ---- position-wise feed forward -------------------------------------------
    hdn = jnp.maximum(jnp.dot(x2, w1_ref[...],
                              preferred_element_type=jnp.float32) + b1_ref[...], 0.0)
    ff = jnp.dot(hdn, w2_ref[...],
                 preferred_element_type=jnp.float32) + b2_ref[...]
    x3 = _layer_norm(x2 + ff, lng[2], lnb[2])

    out_ref[...] = x3.reshape(bt, s, d).astype(out_ref.dtype)


# ------------------------------- wrapper ---------------------------------------

def _pick_b_tile(batch, max_tile=8):
    """Largest divisor of batch <= max_tile, preferring >=2 grid steps (v7x has
    2 TensorCores; on v5e/v6e the grid is a sequential loop either way)."""
    divisors = [t for t in range(1, min(batch, max_tile) + 1) if batch % t == 0]
    multi_step = [t for t in divisors if batch // t >= 2]
    return max(multi_step) if multi_step else max(divisors)


def prepare_params(nat):
    """One-time host-side transform: fold 1/sqrt(d_k) into Wq/bq, fuse QKV / KV
    weight matrices, split W_o rows per head."""
    scale = 1.0 / math.sqrt(D_K)
    sp, cp = nat["self"], nat["cross"]
    return {
        "self_wqkv": jnp.concatenate([sp["wq"] * scale, sp["wk"], sp["wv"]], axis=1),
        "self_bqkv": jnp.concatenate([sp["bq"] * scale, sp["bk"], sp["bv"]], axis=1),
        "self_wo_h": sp["wo"].reshape(NUM_HEADS, D_K, D_MODEL),
        "self_bo": sp["bo"],
        "cross_wq": cp["wq"] * scale,
        "cross_bq": cp["bq"] * scale,
        "cross_wkv": jnp.concatenate([cp["wk"], cp["wv"]], axis=1),
        "cross_bkv": jnp.concatenate([cp["bk"], cp["bv"]], axis=1),
        "cross_wo_h": cp["wo"].reshape(NUM_HEADS, D_K, D_MODEL),
        "cross_bo": cp["bo"],
        "fc1_w": nat["fc1_w"], "fc1_b": nat["fc1_b"],
        "fc2_w": nat["fc2_w"], "fc2_b": nat["fc2_b"],
        "ln_g": nat["ln_g"], "ln_b": nat["ln_b"],
    }


def decoder_layer(x, enc_output, src_mask, tgt_mask, kp, b_tile=None):
    B, S, D = x.shape
    S_enc = enc_output.shape[1]
    bt = _pick_b_tile(B) if b_tile is None else b_tile
    assert B % bt == 0

    def full(arr):
        n = arr.ndim
        return pl.BlockSpec(arr.shape, lambda i, _n=n: (0,) * _n)

    weight_args = (kp["self_wqkv"], kp["self_bqkv"], kp["self_wo_h"], kp["self_bo"],
                   kp["cross_wq"], kp["cross_bq"], kp["cross_wkv"], kp["cross_bkv"],
                   kp["cross_wo_h"], kp["cross_bo"],
                   kp["fc1_w"], kp["fc1_b"], kp["fc2_w"], kp["fc2_b"],
                   kp["ln_g"], kp["ln_b"])

    in_specs = [
        pl.BlockSpec((bt, S, D), lambda i: (i, 0, 0)),        # x
        pl.BlockSpec((bt, S_enc, D), lambda i: (i, 0, 0)),    # enc_output
        pl.BlockSpec((bt, S, S), lambda i: (i, 0, 0)),        # tgt_mask
        pl.BlockSpec((bt, S, S_enc), lambda i: (i, 0, 0)),    # src_mask
    ] + [full(w) for w in weight_args]

    out_spec = pl.BlockSpec((bt, S, D), lambda i: (i, 0, 0))

    return pl.pallas_call(
        decoder_layer_kernel,
        out_shape=jax.ShapeDtypeStruct((B, S, D), x.dtype),
        grid=(B // bt,),
        in_specs=in_specs,
        out_specs=out_spec,
        compiler_params=pltpu.CompilerParams(dimension_semantics=("parallel",)),
    )(x, enc_output, tgt_mask, src_mask, *weight_args)


# --------------------------- pure-JAX reference --------------------------------
# Faithful to the PyTorch module (unfused weights, explicit transpose/concat).

def reference(x, enc_output, src_mask, tgt_mask, nat):
    def mha(q_in, k_in, v_in, p, mask):
        Q = q_in @ p["wq"] + p["bq"]
        K = k_in @ p["wk"] + p["bk"]
        V = v_in @ p["wv"] + p["bv"]
        B, Sq, _ = Q.shape
        Sk = K.shape[1]
        Qh = Q.reshape(B, Sq, NUM_HEADS, D_K).transpose(0, 2, 1, 3)
        Kh = K.reshape(B, Sk, NUM_HEADS, D_K).transpose(0, 2, 1, 3)
        Vh = V.reshape(B, Sk, NUM_HEADS, D_K).transpose(0, 2, 1, 3)
        s = jnp.einsum('bhqd,bhkd->bhqk', Qh, Kh) / math.sqrt(D_K)
        s = jnp.where(mask[:, None, :, :] == 0, -1e9, s)
        p_attn = jax.nn.softmax(s, axis=-1)
        ctx = jnp.einsum('bhqk,bhkd->bhqd', p_attn, Vh)
        ctx = ctx.transpose(0, 2, 1, 3).reshape(B, Sq, D_MODEL)
        return ctx @ p["wo"] + p["bo"]

    a1 = mha(x, x, x, nat["self"], tgt_mask)
    x1 = _layer_norm(x + a1, nat["ln_g"][0], nat["ln_b"][0])
    a2 = mha(x1, enc_output, enc_output, nat["cross"], src_mask)
    x2 = _layer_norm(x1 + a2, nat["ln_g"][1], nat["ln_b"][1])
    h = jnp.maximum(x2 @ nat["fc1_w"] + nat["fc1_b"], 0.0)
    ff = h @ nat["fc2_w"] + nat["fc2_b"]
    return _layer_norm(x2 + ff, nat["ln_g"][2], nat["ln_b"][2])


# ------------------------------------ init --------------------------------------

def init_params(key):
    ks = jax.random.split(key, 6)

    def lin(k, fan_in, shape):
        bound = 1.0 / math.sqrt(fan_in)
        return jax.random.uniform(k, shape, jnp.float32, -bound, bound)

    def attn_params(keys):
        return {
            "wq": lin(keys[0], D_MODEL, (D_MODEL, D_MODEL)),
            "bq": lin(keys[1], D_MODEL, (1, D_MODEL)),
            "wk": lin(keys[2], D_MODEL, (D_MODEL, D_MODEL)),
            "bk": lin(keys[3], D_MODEL, (1, D_MODEL)),
            "wv": lin(keys[4], D_MODEL, (D_MODEL, D_MODEL)),
            "bv": lin(keys[5], D_MODEL, (1, D_MODEL)),
            "wo": lin(keys[6], D_MODEL, (D_MODEL, D_MODEL)),
            "bo": lin(keys[7], D_MODEL, (1, D_MODEL)),
        }

    return {
        "self": attn_params(jax.random.split(ks[0], 8)),
        "cross": attn_params(jax.random.split(ks[1], 8)),
        "fc1_w": lin(ks[2], D_MODEL, (D_MODEL, D_FF)),
        "fc1_b": lin(ks[3], D_MODEL, (1, D_FF)),
        "fc2_w": lin(ks[4], D_FF, (D_FF, D_MODEL)),
        "fc2_b": lin(ks[5], D_FF, (1, D_MODEL)),
        "ln_g": jnp.ones((3, D_MODEL), jnp.float32),   # PyTorch LayerNorm default init
        "ln_b": jnp.zeros((3, D_MODEL), jnp.float32),
    }


# ------------------------------------ main --------------------------------------

if __name__ == "__main__":
    B, S, S_ENC = 4, 8, 8
    key = jax.random.PRNGKey(0)
    kx, kenc, kp = jax.random.split(key, 3)

    x = jax.random.normal(kx, (B, S, D_MODEL), jnp.float32)
    enc_out = jax.random.normal(kenc, (B, S_ENC, D_MODEL), jnp.float32)

    # causal target mask, full source mask (with one masked key for variety)
    tgt_mask = jnp.broadcast_to(jnp.tril(jnp.ones((S, S), jnp.float32)), (B, S, S))
    src_mask = jnp.ones((B, S, S_ENC), jnp.float32).at[1, :, -1].set(0.0)

    # TODO(synk): dropout has no deterministic Pallas equivalent; treated as identity (eval mode).
    nat = init_params(kp)
    kparams = prepare_params(nat)   # one-time host-side weight fusion / scale fold

    out = decoder_layer(x, enc_out, src_mask, tgt_mask, kparams)
    out = jax.block_until_ready(out)

    ref = reference(x, enc_out, src_mask, tgt_mask, nat)
    assert out.shape == (B, S, D_MODEL)
    max_err = float(jnp.max(jnp.abs(out - ref)))
    assert jnp.allclose(out, ref, atol=2e-4, rtol=2e-4), max_err

    print("KERNEL_OK")
</pallas_src>

<mosaic_0001>
module attributes {stable_mosaic.version = 11 : i64} {
  func.func @decoder_layer_kernel(%arg0: i32, %arg1: memref<2x8x32xf32, #tpu.memory_space<vmem>>, %arg2: memref<2x8x32xf32, #tpu.memory_space<vmem>>, %arg3: memref<2x8x8xf32, #tpu.memory_space<vmem>>, %arg4: memref<2x8x8xf32, #tpu.memory_space<vmem>>, %arg5: memref<32x96xf32, #tpu.memory_space<vmem>>, %arg6: memref<1x96xf32, #tpu.memory_space<vmem>>, %arg7: memref<4x8x32xf32, #tpu.memory_space<vmem>>, %arg8: memref<1x32xf32, #tpu.memory_space<vmem>>, %arg9: memref<32x32xf32, #tpu.memory_space<vmem>>, %arg10: memref<1x32xf32, #tpu.memory_space<vmem>>, %arg11: memref<32x64xf32, #tpu.memory_space<vmem>>, %arg12: memref<1x64xf32, #tpu.memory_space<vmem>>, %arg13: memref<4x8x32xf32, #tpu.memory_space<vmem>>, %arg14: memref<1x32xf32, #tpu.memory_space<vmem>>, %arg15: memref<32x64xf32, #tpu.memory_space<vmem>>, %arg16: memref<1x64xf32, #tpu.memory_space<vmem>>, %arg17: memref<64x32xf32, #tpu.memory_space<vmem>>, %arg18: memref<1x32xf32, #tpu.memory_space<vmem>>, %arg19: memref<3x32xf32, #tpu.memory_space<vmem>>, %arg20: memref<3x32xf32, #tpu.memory_space<vmem>>, %arg21: memref<2x8x32xf32, #tpu.memory_space<vmem>>) attributes {dimension_semantics = [#tpu.dimension_semantics<parallel>], iteration_bounds = array<i64: 2>, scalar_prefetch = 0 : i64, scratch_operands = 0 : i64, tpu.core_type = #tpu.core_type<tc>, window_params = [{transform_indices = @transform_0, window_bounds = array<i64: 2, 8, 32>}, {transform_indices = @transform_1, window_bounds = array<i64: 2, 8, 32>}, {transform_indices = @transform_2, window_bounds = array<i64: 2, 8, 8>}, {transform_indices = @transform_3, window_bounds = array<i64: 2, 8, 8>}, {pipeline_mode = #tpu.pipeline_mode<synchronous>, transform_indices = @transform_4, window_bounds = array<i64: 32, 96>}, {pipeline_mode = #tpu.pipeline_mode<synchronous>, transform_indices = @transform_5, window_bounds = array<i64: 1, 96>}, {pipeline_mode = #tpu.pipeline_mode<synchronous>, transform_indices = @transform_6, window_bounds = array<i64: 4, 8, 32>}, {pipeline_mode = #tpu.pipeline_mode<synchronous>, transform_indices = @transform_7, window_bounds = array<i64: 1, 32>}, {pipeline_mode = #tpu.pipeline_mode<synchronous>, transform_indices = @transform_8, window_bounds = array<i64: 32, 32>}, {pipeline_mode = #tpu.pipeline_mode<synchronous>, transform_indices = @transform_9, window_bounds = array<i64: 1, 32>}, {pipeline_mode = #tpu.pipeline_mode<synchronous>, transform_indices = @transform_10, window_bounds = array<i64: 32, 64>}, {pipeline_mode = #tpu.pipeline_mode<synchronous>, transform_indices = @transform_11, window_bounds = array<i64: 1, 64>}, {pipeline_mode = #tpu.pipeline_mode<synchronous>, transform_indices = @transform_12, window_bounds = array<i64: 4, 8, 32>}, {pipeline_mode = #tpu.pipeline_mode<synchronous>, transform_indices = @transform_13, window_bounds = array<i64: 1, 32>}, {pipeline_mode = #tpu.pipeline_mode<synchronous>, transform_indices = @transform_14, window_bounds = array<i64: 32, 64>}, {pipeline_mode = #tpu.pipeline_mode<synchronous>, transform_indices = @transform_15, window_bounds = array<i64: 1, 64>}, {pipeline_mode = #tpu.pipeline_mode<synchronous>, transform_indices = @transform_16, window_bounds = array<i64: 64, 32>}, {pipeline_mode = #tpu.pipeline_mode<synchronous>, transform_indices = @transform_17, window_bounds = array<i64: 1, 32>}, {pipeline_mode = #tpu.pipeline_mode<synchronous>, transform_indices = @transform_18, window_bounds = array<i64: 3, 32>}, {pipeline_mode = #tpu.pipeline_mode<synchronous>, transform_indices = @transform_19, window_bounds = array<i64: 3, 32>}, {transform_indices = @transform_20, window_bounds = array<i64: 2, 8, 32>}]} {
    %c0 = arith.constant 0 : index
    %c0_0 = arith.constant 0 : index
    %c0_1 = arith.constant 0 : index
    %0 = vector.load %arg1[%c0, %c0_0, %c0_1] : memref<2x8x32xf32, #tpu.memory_space<vmem>>, vector<2x8x32xf32>
    %1 = vector.shape_cast %0 : vector<2x8x32xf32> to vector<16x32xf32>
    %c0_2 = arith.constant 0 : index
    %c0_3 = arith.constant 0 : index
    %c0_4 = arith.constant 0 : index
    %2 = vector.load %arg2[%c0_2, %c0_3, %c0_4] : memref<2x8x32xf32, #tpu.memory_space<vmem>>, vector<2x8x32xf32>
    %3 = vector.shape_cast %2 : vector<2x8x32xf32> to vector<16x32xf32>
    %c0_5 = arith.constant 0 : index
    %c0_6 = arith.constant 0 : index
    %c0_7 = arith.constant 0 : index
    %4 = vector.load %arg3[%c0_5, %c0_6, %c0_7] : memref<2x8x8xf32, #tpu.memory_space<vmem>>, vector<2x8x8xf32>
    %cst = arith.constant 0.000000e+00 : f32
    %5 = vector.broadcast %cst : f32 to vector<2x8x8xf32>
    %6 = arith.cmpf oeq, %4, %5 : vector<2x8x8xf32>
    %cst_8 = arith.constant -1.000000e+09 : f32
    %cst_9 = arith.constant 0.000000e+00 : f32
    %7 = vector.broadcast %cst_8 : f32 to vector<2x8x8xf32>
    %8 = vector.broadcast %cst_9 : f32 to vector<2x8x8xf32>
    %9 = arith.select %6, %7, %8 : vector<2x8x8xi1>, vector<2x8x8xf32>
    %c0_10 = arith.constant 0 : index
    %c0_11 = arith.constant 0 : index
    %c0_12 = arith.constant 0 : index
    %10 = vector.load %arg4[%c0_10, %c0_11, %c0_12] : memref<2x8x8xf32, #tpu.memory_space<vmem>>, vector<2x8x8xf32>
    %cst_13 = arith.constant 0.000000e+00 : f32
    %11 = vector.broadcast %cst_13 : f32 to vector<2x8x8xf32>
    %12 = arith.cmpf oeq, %10, %11 : vector<2x8x8xf32>
    %cst_14 = arith.constant -1.000000e+09 : f32
    %cst_15 = arith.constant 0.000000e+00 : f32
    %13 = vector.broadcast %cst_14 : f32 to vector<2x8x8xf32>
    %14 = vector.broadcast %cst_15 : f32 to vector<2x8x8xf32>
    %15 = arith.select %12, %13, %14 : vector<2x8x8xi1>, vector<2x8x8xf32>
    %c0_16 = arith.constant 0 : index
    %c0_17 = arith.constant 0 : index
    %16 = vector.load %arg19[%c0_16, %c0_17] : memref<3x32xf32, #tpu.memory_space<vmem>>, vector<3x32xf32>
    %c0_18 = arith.constant 0 : index
    %c0_19 = arith.constant 0 : index
    %17 = vector.load %arg20[%c0_18, %c0_19] : memref<3x32xf32, #tpu.memory_space<vmem>>, vector<3x32xf32>
    %c0_20 = arith.constant 0 : index
    %c0_21 = arith.constant 0 : index
    %18 = vector.load %arg5[%c0_20, %c0_21] : memref<32x96xf32, #tpu.memory_space<vmem>>, vector<32x96xf32>
    %cst_22 = arith.constant dense<0.000000e+00> : vector<16x96xf32>
    %19 = tpu.matmul %1, %18, %cst_22 {dimension_numbers = #tpu.dot_dimension_numbers<[1], [0], [0], [1], [0, 0, 1, 1], [], []>} : vector<16x32xf32>, vector<32x96xf32>, vector<16x96xf32> -> vector<16x96xf32>
    %c0_23 = arith.constant 0 : index
    %c0_24 = arith.constant 0 : index
    %20 = vector.load %arg6[%c0_23, %c0_24] : memref<1x96xf32, #tpu.memory_space<vmem>>, vector<1x96xf32>
    %21 = vector.broadcast %20 : vector<1x96xf32> to vector<16x96xf32>
    %22 = arith.addf %19, %21 : vector<16x96xf32>
    %23 = vector.extract_strided_slice %22 {offsets = [0, 0], sizes = [16, 32], strides = [1, 1]} : vector<16x96xf32> to vector<16x32xf32>
    %24 = vector.extract_strided_slice %22 {offsets = [0, 32], sizes = [16, 32], strides = [1, 1]} : vector<16x96xf32> to vector<16x32xf32>
    %25 = vector.extract_strided_slice %22 {offsets = [0, 64], sizes = [16, 32], strides = [1, 1]} : vector<16x96xf32> to vector<16x32xf32>
    %c0_25 = arith.constant 0 : index
    %c0_26 = arith.constant 0 : index
    %c0_27 = arith.constant 0 : index
    %26 = vector.load %arg7[%c0_25, %c0_26, %c0_27] : memref<4x8x32xf32, #tpu.memory_space<vmem>>, vector<4x8x32xf32>
    %c0_28 = arith.constant 0 : index
    %c0_29 = arith.constant 0 : index
    %27 = vector.load %arg8[%c0_28, %c0_29] : memref<1x32xf32, #tpu.memory_space<vmem>>, vector<1x32xf32>
    %28 = vector.extract_strided_slice %23 {offsets = [0, 0], sizes = [16, 8], strides = [1, 1]} : vector<16x32xf32> to vector<16x8xf32>
    %29 = vector.shape_cast %28 : vector<16x8xf32> to vector<2x8x8xf32>
    %30 = vector.extract_strided_slice %24 {offsets = [0, 0], sizes = [16, 8], strides = [1, 1]} : vector<16x32xf32> to vector<16x8xf32>
    %31 = vector.shape_cast %30 : vector<16x8xf32> to vector<2x8x8xf32>
    %32 = vector.extract_strided_slice %25 {offsets = [0, 0], sizes = [16, 8], strides = [1, 1]} : vector<16x32xf32> to vector<16x8xf32>
    %33 = vector.shape_cast %32 : vector<16x8xf32> to vector<2x8x8xf32>
    "tpu.trace_start"() <{level = 10 : i32, message = "bqd,bkd->bqk"}> : () -> ()
    %cst_30 = arith.constant dense<0.000000e+00> : vector<2x8x8xf32>
    %34 = tpu.matmul %29, %31, %cst_30 {dimension_numbers = #tpu.dot_dimension_numbers<[2], [2], [1], [1], [0, 0, 0, 1, 1, 1], [0], [0]>} : vector<2x8x8xf32>, vector<2x8x8xf32>, vector<2x8x8xf32> -> vector<2x8x8xf32>
    "tpu.trace_stop"() : () -> ()
    %35 = arith.addf %34, %9 : vector<2x8x8xf32>
    %cst_31 = arith.constant dense<0xFF800000> : vector<2x8xf32>
    %36 = vector.multi_reduction <maximumf>, %35, %cst_31 [2] : vector<2x8x8xf32> to vector<2x8xf32>
    %37 = vector.shape_cast %36 : vector<2x8xf32> to vector<2x8x1xf32>
    %38 = vector.broadcast %37 : vector<2x8x1xf32> to vector<2x8x8xf32>
    %39 = arith.subf %35, %38 : vector<2x8x8xf32>
    %40 = math.exp %39 : vector<2x8x8xf32>
    %cst_32 = arith.constant dense<0.000000e+00> : vector<2x8xf32>
    %41 = vector.multi_reduction <add>, %40, %cst_32 [2] : vector<2x8x8xf32> to vector<2x8xf32>
    %42 = vector.shape_cast %41 : vector<2x8xf32> to vector<2x8x1xf32>
    %43 = vector.broadcast %42 : vector<2x8x1xf32> to vector<2x8x8xf32>
    %44 = arith.divf %40, %43 : vector<2x8x8xf32>
    "tpu.trace_start"() <{level = 10 : i32, message = "bqk,bkd->bqd"}> : () -> ()
    %cst_33 = arith.constant dense<0.000000e+00> : vector<2x8x8xf32>
    %45 = tpu.matmul %44, %33, %cst_33 {dimension_numbers = #tpu.dot_dimension_numbers<[2], [1], [1], [2], [0, 0, 0, 1, 1, 2], [0], [0]>} : vector<2x8x8xf32>, vector<2x8x8xf32>, vector<2x8x8xf32> -> vector<2x8x8xf32>
    "tpu.trace_stop"() : () -> ()
    %46 = vector.shape_cast %45 : vector<2x8x8xf32> to vector<16x8xf32>
    %47 = vector.extract_strided_slice %26 {offsets = [0, 0, 0], sizes = [1, 8, 32], strides = [1, 1, 1]} : vector<4x8x32xf32> to vector<1x8x32xf32>
    %48 = vector.shape_cast %47 : vector<1x8x32xf32> to vector<8x32xf32>
    %cst_34 = arith.constant dense<0.000000e+00> : vector<16x32xf32>
    %49 = tpu.matmul %46, %48, %cst_34 {dimension_numbers = #tpu.dot_dimension_numbers<[1], [0], [0], [1], [0, 0, 1, 1], [], []>} : vector<16x8xf32>, vector<8x32xf32>, vector<16x32xf32> -> vector<16x32xf32>
    %50 = vector.extract_strided_slice %23 {offsets = [0, 8], sizes = [16, 8], strides = [1, 1]} : vector<16x32xf32> to vector<16x8xf32>
    %51 = vector.shape_cast %50 : vector<16x8xf32> to vector<2x8x8xf32>
    %52 = vector.extract_strided_slice %24 {offsets = [0, 8], sizes = [16, 8], strides = [1, 1]} : vector<16x32xf32> to vector<16x8xf32>
    %53 = vector.shape_cast %52 : vector<16x8xf32> to vector<2x8x8xf32>
    %54 = vector.extract_strided_slice %25 {offsets = [0, 8], sizes = [16, 8], strides = [1, 1]} : vector<16x32xf32> to vector<16x8xf32>
    %55 = vector.shape_cast %54 : vector<16x8xf32> to vector<2x8x8xf32>
    "tpu.trace_start"() <{level = 10 : i32, message = "bqd,bkd->bqk"}> : () -> ()
    %cst_35 = arith.constant dense<0.000000e+00> : vector<2x8x8xf32>
    %56 = tpu.matmul %51, %53, %cst_35 {dimension_numbers = #tpu.dot_dimension_numbers<[2], [2], [1], [1], [0, 0, 0, 1, 1, 1], [0], [0]>} : vector<2x8x8xf32>, vector<2x8x8xf32>, vector<2x8x8xf32> -> vector<2x8x8xf32>
    "tpu.trace_stop"() : () -> ()
    %57 = arith.addf %56, %9 : vector<2x8x8xf32>
    %cst_36 = arith.constant dense<0xFF800000> : vector<2x8xf32>
    %58 = vector.multi_reduction <maximumf>, %57, %cst_36 [2] : vector<2x8x8xf32> to vector<2x8xf32>
    %59 = vector.shape_cast %58 : vector<2x8xf32> to vector<2x8x1xf32>
    %60 = vector.broadcast %59 : vector<2x8x1xf32> to vector<2x8x8xf32>
    %61 = arith.subf %57, %60 : vector<2x8x8xf32>
    %62 = math.exp %61 : vector<2x8x8xf32>
    %cst_37 = arith.constant dense<0.000000e+00> : vector<2x8xf32>
    %63 = vector.multi_reduction <add>, %62, %cst_37 [2] : vector<2x8x8xf32> to vector<2x8xf32>
    %64 = vector.shape_cast %63 : vector<2x8xf32> to vector<2x8x1xf32>
    %65 = vector.broadcast %64 : vector<2x8x1xf32> to vector<2x8x8xf32>
    %66 = arith.divf %62, %65 : vector<2x8x8xf32>
    "tpu.trace_start"() <{level = 10 : i32, message = "bqk,bkd->bqd"}> : () -> ()
    %cst_38 = arith.constant dense<0.000000e+00> : vector<2x8x8xf32>
    %67 = tpu.matmul %66, %55, %cst_38 {dimension_numbers = #tpu.dot_dimension_numbers<[2], [1], [1], [2], [0, 0, 0, 1, 1, 2], [0], [0]>} : vector<2x8x8xf32>, vector<2x8x8xf32>, vector<2x8x8xf32> -> vector<2x8x8xf32>
    "tpu.trace_stop"() : () -> ()
    %68 = vector.shape_cast %67 : vector<2x8x8xf32> to vector<16x8xf32>
    %69 = vector.extract_strided_slice %26 {offsets = [1, 0, 0], sizes = [1, 8, 32], strides = [1, 1, 1]} : vector<4x8x32xf32> to vector<1x8x32xf32>
    %70 = vector.shape_cast %69 : vector<1x8x32xf32> to vector<8x32xf32>
    %cst_39 = arith.constant dense<0.000000e+00> : vector<16x32xf32>
    %71 = tpu.matmul %68, %70, %cst_39 {dimension_numbers = #tpu.dot_dimension_numbers<[1], [0], [0], [1], [0, 0, 1, 1], [], []>} : vector<16x8xf32>, vector<8x32xf32>, vector<16x32xf32> -> vector<16x32xf32>
    %72 = arith.addf %49, %71 : vector<16x32xf32>
    %73 = vector.extract_strided_slice %23 {offsets = [0, 16], sizes = [16, 8], strides = [1, 1]} : vector<16x32xf32> to vector<16x8xf32>
    %74 = vector.shape_cast %73 : vector<16x8xf32> to vector<2x8x8xf32>
    %75 = vector.extract_strided_slice %24 {offsets = [0, 16], sizes = [16, 8], strides = [1, 1]} : vector<16x32xf32> to vector<16x8xf32>
    %76 = vector.shape_cast %75 : vector<16x8xf32> to vector<2x8x8xf32>
    %77 = vector.extract_strided_slice %25 {offsets = [0, 16], sizes = [16, 8], strides = [1, 1]} : vector<16x32xf32> to vector<16x8xf32>
    %78 = vector.shape_cast %77 : vector<16x8xf32> to vector<2x8x8xf32>
    "tpu.trace_start"() <{level = 10 : i32, message = "bqd,bkd->bqk"}> : () -> ()
    %cst_40 = arith.constant dense<0.000000e+00> : vector<2x8x8xf32>
    %79 = tpu.matmul %74, %76, %cst_40 {dimension_numbers = #tpu.dot_dimension_numbers<[2], [2], [1], [1], [0, 0, 0, 1, 1, 1], [0], [0]>} : vector<2x8x8xf32>, vector<2x8x8xf32>, vector<2x8x8xf32> -> vector<2x8x8xf32>
    "tpu.trace_stop"() : () -> ()
    %80 = arith.addf %79, %9 : vector<2x8x8xf32>
    %cst_41 = arith.constant dense<0xFF800000> : vector<2x8xf32>
    %81 = vector.multi_reduction <maximumf>, %80, %cst_41 [2] : vector<2x8x8xf32> to vector<2x8xf32>
    %82 = vector.shape_cast %81 : vector<2x8xf32> to vector<2x8x1xf32>
    %83 = vector.broadcast %82 : vector<2x8x1xf32> to vector<2x8x8xf32>
    %84 = arith.subf %80, %83 : vector<2x8x8xf32>
    %85 = math.exp %84 : vector<2x8x8xf32>
    %cst_42 = arith.constant dense<0.000000e+00> : vector<2x8xf32>
    %86 = vector.multi_reduction <add>, %85, %cst_42 [2] : vector<2x8x8xf32> to vector<2x8xf32>
    %87 = vector.shape_cast %86 : vector<2x8xf32> to vector<2x8x1xf32>
    %88 = vector.broadcast %87 : vector<2x8x1xf32> to vector<2x8x8xf32>
    %89 = arith.divf %85, %88 : vector<2x8x8xf32>
    "tpu.trace_start"() <{level = 10 : i32, message = "bqk,bkd->bqd"}> : () -> ()
    %cst_43 = arith.constant dense<0.000000e+00> : vector<2x8x8xf32>
    %90 = tpu.matmul %89, %78, %cst_43 {dimension_numbers = #tpu.dot_dimension_numbers<[2], [1], [1], [2], [0, 0, 0, 1, 1, 2], [0], [0]>} : vector<2x8x8xf32>, vector<2x8x8xf32>, vector<2x8x8xf32> -> vector<2x8x8xf32>
    "tpu.trace_stop"() : () -> ()
    %91 = vector.shape_cast %90 : vector<2x8x8xf32> to vector<16x8xf32>
    %92 = vector.extract_strided_slice %26 {offsets = [2, 0, 0], sizes = [1, 8, 32], strides = [1, 1, 1]} : vector<4x8x32xf32> to vector<1x8x32xf32>
    %93 = vector.shape_cast %92 : vector<1x8x32xf32> to vector<8x32xf32>
    %cst_44 = arith.constant dense<0.000000e+00> : vector<16x32xf32>
    %94 = tpu.matmul %91, %93, %cst_44 {dimension_numbers = #tpu.dot_dimension_numbers<[1], [0], [0], [1], [0, 0, 1, 1], [], []>} : vector<16x8xf32>, vector<8x32xf32>, vector<16x32xf32> -> vector<16x32xf32>
    %95 = arith.addf %72, %94 : vector<16x32xf32>
    %96 = vector.extract_strided_slice %23 {offsets = [0, 24], sizes = [16, 8], strides = [1, 1]} : vector<16x32xf32> to vector<16x8xf32>
    %97 = vector.shape_cast %96 : vector<16x8xf32> to vector<2x8x8xf32>
    %98 = vector.extract_strided_slice %24 {offsets = [0, 24], sizes = [16, 8], strides = [1, 1]} : vector<16x32xf32> to vector<16x8xf32>
    %99 = vector.shape_cast %98 : vector<16x8xf32> to vector<2x8x8xf32>
    %100 = vector.extract_strided_slice %25 {offsets = [0, 24], sizes = [16, 8], strides = [1, 1]} : vector<16x32xf32> to vector<16x8xf32>
    %101 = vector.shape_cast %100 : vector<16x8xf32> to vector<2x8x8xf32>
    "tpu.trace_start"() <{level = 10 : i32, message = "bqd,bkd->bqk"}> : () -> ()
    %cst_45 = arith.constant dense<0.000000e+00> : vector<2x8x8xf32>
    %102 = tpu.matmul %97, %99, %cst_45 {dimension_numbers = #tpu.dot_dimension_numbers<[2], [2], [1], [1], [0, 0, 0, 1, 1, 1], [0], [0]>} : vector<2x8x8xf32>, vector<2x8x8xf32>, vector<2x8x8xf32> -> vector<2x8x8xf32>
    "tpu.trace_stop"() : () -> ()
    %103 = arith.addf %102, %9 : vector<2x8x8xf32>
    %cst_46 = arith.constant dense<0xFF800000> : vector<2x8xf32>
    %104 = vector.multi_reduction <maximumf>, %103, %cst_46 [2] : vector<2x8x8xf32> to vector<2x8xf32>
    %105 = vector.shape_cast %104 : vector<2x8xf32> to vector<2x8x1xf32>
    %106 = vector.broadcast %105 : vector<2x8x1xf32> to vector<2x8x8xf32>
    %107 = arith.subf %103, %106 : vector<2x8x8xf32>
    %108 = math.exp %107 : vector<2x8x8xf32>
    %cst_47 = arith.constant dense<0.000000e+00> : vector<2x8xf32>
    %109 = vector.multi_reduction <add>, %108, %cst_47 [2] : vector<2x8x8xf32> to vector<2x8xf32>
    %110 = vector.shape_cast %109 : vector<2x8xf32> to vector<2x8x1xf32>
    %111 = vector.broadcast %110 : vector<2x8x1xf32> to vector<2x8x8xf32>
    %112 = arith.divf %108, %111 : vector<2x8x8xf32>
    "tpu.trace_start"() <{level = 10 : i32, message = "bqk,bkd->bqd"}> : () -> ()
    %cst_48 = arith.constant dense<0.000000e+00> : vector<2x8x8xf32>
    %113 = tpu.matmul %112, %101, %cst_48 {dimension_numbers = #tpu.dot_dimension_numbers<[2], [1], [1], [2], [0, 0, 0, 1, 1, 2], [0], [0]>} : vector<2x8x8xf32>, vector<2x8x8xf32>, vector<2x8x8xf32> -> vector<2x8x8xf32>
    "tpu.trace_stop"() : () -> ()
    %114 = vector.shape_cast %113 : vector<2x8x8xf32> to vector<16x8xf32>
    %115 = vector.extract_strided_slice %26 {offsets = [3, 0, 0], sizes = [1, 8, 32], strides = [1, 1, 1]} : vector<4x8x32xf32> to vector<1x8x32xf32>
    %116 = vector.shape_cast %115 : vector<1x8x32xf32> to vector<8x32xf32>
    %cst_49 = arith.constant dense<0.000000e+00> : vector<16x32xf32>
    %117 = tpu.matmul %114, %116, %cst_49 {dimension_numbers = #tpu.dot_dimension_numbers<[1], [0], [0], [1], [0, 0, 1, 1], [], []>} : vector<16x8xf32>, vector<8x32xf32>, vector<16x32xf32> -> vector<16x32xf32>
    %118 = arith.addf %95, %117 : vector<16x32xf32>
    %119 = vector.broadcast %27 : vector<1x32xf32> to vector<16x32xf32>
    %120 = arith.addf %118, %119 : vector<16x32xf32>
    %121 = arith.addf %1, %120 : vector<16x32xf32>
    %122 = vector.extract_strided_slice %16 {offsets = [0, 0], sizes = [1, 32], strides = [1, 1]} : vector<3x32xf32> to vector<1x32xf32>
    %123 = vector.shape_cast %122 : vector<1x32xf32> to vector<32xf32>
    %124 = vector.extract_strided_slice %17 {offsets = [0, 0], sizes = [1, 32], strides = [1, 1]} : vector<3x32xf32> to vector<1x32xf32>
    %125 = vector.shape_cast %124 : vector<1x32xf32> to vector<32xf32>
    %cst_50 = arith.constant dense<0.000000e+00> : vector<16xf32>
    %126 = vector.multi_reduction <add>, %121, %cst_50 [1] : vector<16x32xf32> to vector<16xf32>
    %127 = vector.shape_cast %126 : vector<16xf32> to vector<16x1xf32>
    %cst_51 = arith.constant 3.200000e+01 : f32
    %128 = vector.broadcast %cst_51 : f32 to vector<16x1xf32>
    %129 = arith.divf %127, %128 : vector<16x1xf32>
    %130 = vector.broadcast %129 : vector<16x1xf32> to vector<16x32xf32>
    %131 = arith.subf %121, %130 : vector<16x32xf32>
    %132 = arith.mulf %131, %131 : vector<16x32xf32>
    %cst_52 = arith.constant dense<0.000000e+00> : vector<16xf32>
    %133 = vector.multi_reduction <add>, %132, %cst_52 [1] : vector<16x32xf32> to vector<16xf32>
    %134 = vector.shape_cast %133 : vector<16xf32> to vector<16x1xf32>
    %cst_53 = arith.constant 3.200000e+01 : f32
    %135 = vector.broadcast %cst_53 : f32 to vector<16x1xf32>
    %136 = arith.divf %134, %135 : vector<16x1xf32>
    %137 = vector.broadcast %129 : vector<16x1xf32> to vector<16x32xf32>
    %138 = arith.subf %121, %137 : vector<16x32xf32>
    %cst_54 = arith.constant 9.99999974E-6 : f32
    %139 = vector.broadcast %cst_54 : f32 to vector<16x1xf32>
    %140 = arith.addf %136, %139 : vector<16x1xf32>
    %141 = math.rsqrt %140 : vector<16x1xf32>
    %142 = vector.broadcast %141 : vector<16x1xf32> to vector<16x32xf32>
    %143 = arith.mulf %138, %142 : vector<16x32xf32>
    %144 = vector.shape_cast %123 : vector<32xf32> to vector<1x32xf32>
    %145 = vector.broadcast %144 : vector<1x32xf32> to vector<16x32xf32>
    %146 = arith.mulf %143, %145 : vector<16x32xf32>
    %147 = vector.shape_cast %125 : vector<32xf32> to vector<1x32xf32>
    %148 = vector.broadcast %147 : vector<1x32xf32> to vector<16x32xf32>
    %149 = arith.addf %146, %148 : vector<16x32xf32>
    %c0_55 = arith.constant 0 : index
    %c0_56 = arith.constant 0 : index
    %150 = vector.load %arg9[%c0_55, %c0_56] : memref<32x32xf32, #tpu.memory_space<vmem>>, vector<32x32xf32>
    %cst_57 = arith.constant dense<0.000000e+00> : vector<16x32xf32>
    %151 = tpu.matmul %149, %150, %cst_57 {dimension_numbers = #tpu.dot_dimension_numbers<[1], [0], [0], [1], [0, 0, 1, 1], [], []>} : vector<16x32xf32>, vector<32x32xf32>, vector<16x32xf32> -> vector<16x32xf32>
    %c0_58 = arith.constant 0 : index
    %c0_59 = arith.constant 0 : index
    %152 = vector.load %arg10[%c0_58, %c0_59] : memref<1x32xf32, #tpu.memory_space<vmem>>, vector<1x32xf32>
    %153 = vector.broadcast %152 : vector<1x32xf32> to vector<16x32xf32>
    %154 = arith.addf %151, %153 : vector<16x32xf32>
    %c0_60 = arith.constant 0 : index
    %c0_61 = arith.constant 0 : index
    %155 = vector.load %arg11[%c0_60, %c0_61] : memref<32x64xf32, #tpu.memory_space<vmem>>, vector<32x64xf32>
    %cst_62 = arith.constant dense<0.000000e+00> : vector<16x64xf32>
    %156 = tpu.matmul %3, %155, %cst_62 {dimension_numbers = #tpu.dot_dimension_numbers<[1], [0], [0], [1], [0, 0, 1, 1], [], []>} : vector<16x32xf32>, vector<32x64xf32>, vector<16x64xf32> -> vector<16x64xf32>
    %c0_63 = arith.constant 0 : index
    %c0_64 = arith.constant 0 : index
    %157 = vector.load %arg12[%c0_63, %c0_64] : memref<1x64xf32, #tpu.memory_space<vmem>>, vector<1x64xf32>
    %158 = vector.broadcast %157 : vector<1x64xf32> to vector<16x64xf32>
    %159 = arith.addf %156, %158 : vector<16x64xf32>
    %160 = vector.extract_strided_slice %159 {offsets = [0, 0], sizes = [16, 32], strides = [1, 1]} : vector<16x64xf32> to vector<16x32xf32>
    %161 = vector.extract_strided_slice %159 {offsets = [0, 32], sizes = [16, 32], strides = [1, 1]} : vector<16x64xf32> to vector<16x32xf32>
    %c0_65 = arith.constant 0 : index
    %c0_66 = arith.constant 0 : index
    %c0_67 = arith.constant 0 : index
    %162 = vector.load %arg13[%c0_65, %c0_66, %c0_67] : memref<4x8x32xf32, #tpu.memory_space<vmem>>, vector<4x8x32xf32>
    %c0_68 = arith.constant 0 : index
    %c0_69 = arith.constant 0 : index
    %163 = vector.load %arg14[%c0_68, %c0_69] : memref<1x32xf32, #tpu.memory_space<vmem>>, vector<1x32xf32>
    %164 = vector.extract_strided_slice %154 {offsets = [0, 0], sizes = [16, 8], strides = [1, 1]} : vector<16x32xf32> to vector<16x8xf32>
    %165 = vector.shape_cast %164 : vector<16x8xf32> to vector<2x8x8xf32>
    %166 = vector.extract_strided_slice %160 {offsets = [0, 0], sizes = [16, 8], strides = [1, 1]} : vector<16x32xf32> to vector<16x8xf32>
    %167 = vector.shape_cast %166 : vector<16x8xf32> to vector<2x8x8xf32>
    %168 = vector.extract_strided_slice %161 {offsets = [0, 0], sizes = [16, 8], strides = [1, 1]} : vector<16x32xf32> to vector<16x8xf32>
    %169 = vector.shape_cast %168 : vector<16x8xf32> to vector<2x8x8xf32>
    "tpu.trace_start"() <{level = 10 : i32, message = "bqd,bkd->bqk"}> : () -> ()
    %cst_70 = arith.constant dense<0.000000e+00> : vector<2x8x8xf32>
    %170 = tpu.matmul %165, %167, %cst_70 {dimension_numbers = #tpu.dot_dimension_numbers<[2], [2], [1], [1], [0, 0, 0, 1, 1, 1], [0], [0]>} : vector<2x8x8xf32>, vector<2x8x8xf32>, vector<2x8x8xf32> -> vector<2x8x8xf32>
    "tpu.trace_stop"() : () -> ()
    %171 = arith.addf %170, %15 : vector<2x8x8xf32>
    %cst_71 = arith.constant dense<0xFF800000> : vector<2x8xf32>
    %172 = vector.multi_reduction <maximumf>, %171, %cst_71 [2] : vector<2x8x8xf32> to vector<2x8xf32>
    %173 = vector.shape_cast %172 : vector<2x8xf32> to vector<2x8x1xf32>
    %174 = vector.broadcast %173 : vector<2x8x1xf32> to vector<2x8x8xf32>
    %175 = arith.subf %171, %174 : vector<2x8x8xf32>
    %176 = math.exp %175 : vector<2x8x8xf32>
    %cst_72 = arith.constant dense<0.000000e+00> : vector<2x8xf32>
    %177 = vector.multi_reduction <add>, %176, %cst_72 [2] : vector<2x8x8xf32> to vector<2x8xf32>
    %178 = vector.shape_cast %177 : vector<2x8xf32> to vector<2x8x1xf32>
    %179 = vector.broadcast %178 : vector<2x8x1xf32> to vector<2x8x8xf32>
    %180 = arith.divf %176, %179 : vector<2x8x8xf32>
    "tpu.trace_start"() <{level = 10 : i32, message = "bqk,bkd->bqd"}> : () -> ()
    %cst_73 = arith.constant dense<0.000000e+00> : vector<2x8x8xf32>
    %181 = tpu.matmul %180, %169, %cst_73 {dimension_numbers = #tpu.dot_dimension_numbers<[2], [1], [1], [2], [0, 0, 0, 1, 1, 2], [0], [0]>} : vector<2x8x8xf32>, vector<2x8x8xf32>, vector<2x8x8xf32> -> vector<2x8x8xf32>
    "tpu.trace_stop"() : () -> ()
    %182 = vector.shape_cast %181 : vector<2x8x8xf32> to vector<16x8xf32>
    %183 = vector.extract_strided_slice %162 {offsets = [0, 0, 0], sizes = [1, 8, 32], strides = [1, 1, 1]} : vector<4x8x32xf32> to vector<1x8x32xf32>
    %184 = vector.shape_cast %183 : vector<1x8x32xf32> to vector<8x32xf32>
    %cst_74 = arith.constant dense<0.000000e+00> : vector<16x32xf32>
    %185 = tpu.matmul %182, %184, %cst_74 {dimension_numbers = #tpu.dot_dimension_numbers<[1], [0], [0], [1], [0, 0, 1, 1], [], []>} : vector<16x8xf32>, vector<8x32xf32>, vector<16x32xf32> -> vector<16x32xf32>
    %186 = vector.extract_strided_slice %154 {offsets = [0, 8], sizes = [16, 8], strides = [1, 1]} : vector<16x32xf32> to vector<16x8xf32>
    %187 = vector.shape_cast %186 : vector<16x8xf32> to vector<2x8x8xf32>
    %188 = vector.extract_strided_slice %160 {offsets = [0, 8], sizes = [16, 8], strides = [1, 1]} : vector<16x32xf32> to vector<16x8xf32>
    %189 = vector.shape_cast %188 : vector<16x8xf32> to vector<2x8x8xf32>
    %190 = vector.extract_strided_slice %161 {offsets = [0, 8], sizes = [16, 8], strides = [1, 1]} : vector<16x32xf32> to vector<16x8xf32>
    %191 = vector.shape_cast %190 : vector<16x8xf32> to vector<2x8x8xf32>
    "tpu.trace_start"() <{level = 10 : i32, message = "bqd,bkd->bqk"}> : () -> ()
    %cst_75 = arith.constant dense<0.000000e+00> : vector<2x8x8xf32>
    %192 = tpu.matmul %187, %189, %cst_75 {dimension_numbers = #tpu.dot_dimension_numbers<[2], [2], [1], [1], [0, 0, 0, 1, 1, 1], [0], [0]>} : vector<2x8x8xf32>, vector<2x8x8xf32>, vector<2x8x8xf32> -> vector<2x8x8xf32>
    "tpu.trace_stop"() : () -> ()
    %193 = arith.addf %192, %15 : vector<2x8x8xf32>
    %cst_76 = arith.constant dense<0xFF800000> : vector<2x8xf32>
    %194 = vector.multi_reduction <maximumf>, %193, %cst_76 [2] : vector<2x8x8xf32> to vector<2x8xf32>
    %195 = vector.shape_cast %194 : vector<2x8xf32> to vector<2x8x1xf32>
    %196 = vector.broadcast %195 : vector<2x8x1xf32> to vector<2x8x8xf32>
    %197 = arith.subf %193, %196 : vector<2x8x8xf32>
    %198 = math.exp %197 : vector<2x8x8xf32>
    %cst_77 = arith.constant dense<0.000000e+00> : vector<2x8xf32>
    %199 = vector.multi_reduction <add>, %198, %cst_77 [2] : vector<2x8x8xf32> to vector<2x8xf32>
    %200 = vector.shape_cast %199 : vector<2x8xf32> to vector<2x8x1xf32>
    %201 = vector.broadcast %200 : vector<2x8x1xf32> to vector<2x8x8xf32>
    %202 = arith.divf %198, %201 : vector<2x8x8xf32>
    "tpu.trace_start"() <{level = 10 : i32, message = "bqk,bkd->bqd"}> : () -> ()
    %cst_78 = arith.constant dense<0.000000e+00> : vector<2x8x8xf32>
    %203 = tpu.matmul %202, %191, %cst_78 {dimension_numbers = #tpu.dot_dimension_numbers<[2], [1], [1], [2], [0, 0, 0, 1, 1, 2], [0], [0]>} : vector<2x8x8xf32>, vector<2x8x8xf32>, vector<2x8x8xf32> -> vector<2x8x8xf32>
    "tpu.trace_stop"() : () -> ()
    %204 = vector.shape_cast %203 : vector<2x8x8xf32> to vector<16x8xf32>
    %205 = vector.extract_strided_slice %162 {offsets = [1, 0, 0], sizes = [1, 8, 32], strides = [1, 1, 1]} : vector<4x8x32xf32> to vector<1x8x32xf32>
    %206 = vector.shape_cast %205 : vector<1x8x32xf32> to vector<8x32xf32>
    %cst_79 = arith.constant dense<0.000000e+00> : vector<16x32xf32>
    %207 = tpu.matmul %204, %206, %cst_79 {dimension_numbers = #tpu.dot_dimension_numbers<[1], [0], [0], [1], [0, 0, 1, 1], [], []>} : vector<16x8xf32>, vector<8x32xf32>, vector<16x32xf32> -> vector<16x32xf32>
    %208 = arith.addf %185, %207 : vector<16x32xf32>
    %209 = vector.extract_strided_slice %154 {offsets = [0, 16], sizes = [16, 8], strides = [1, 1]} : vector<16x32xf32> to vector<16x8xf32>
    %210 = vector.shape_cast %209 : vector<16x8xf32> to vector<2x8x8xf32>
    %211 = vector.extract_strided_slice %160 {offsets = [0, 16], sizes = [16, 8], strides = [1, 1]} : vector<16x32xf32> to vector<16x8xf32>
    %212 = vector.shape_cast %211 : vector<16x8xf32> to vector<2x8x8xf32>
    %213 = vector.extract_strided_slice %161 {offsets = [0, 16], sizes = [16, 8], strides = [1, 1]} : vector<16x32xf32> to vector<16x8xf32>
    %214 = vector.shape_cast %213 : vector<16x8xf32> to vector<2x8x8xf32>
    "tpu.trace_start"() <{level = 10 : i32, message = "bqd,bkd->bqk"}> : () -> ()
    %cst_80 = arith.constant dense<0.000000e+00> : vector<2x8x8xf32>
    %215 = tpu.matmul %210, %212, %cst_80 {dimension_numbers = #tpu.dot_dimension_numbers<[2], [2], [1], [1], [0, 0, 0, 1, 1, 1], [0], [0]>} : vector<2x8x8xf32>, vector<2x8x8xf32>, vector<2x8x8xf32> -> vector<2x8x8xf32>
    "tpu.trace_stop"() : () -> ()
    %216 = arith.addf %215, %15 : vector<2x8x8xf32>
    %cst_81 = arith.constant dense<0xFF800000> : vector<2x8xf32>
    %217 = vector.multi_reduction <maximumf>, %216, %cst_81 [2] : vector<2x8x8xf32> to vector<2x8xf32>
    %218 = vector.shape_cast %217 : vector<2x8xf32> to vector<2x8x1xf32>
    %219 = vector.broadcast %218 : vector<2x8x1xf32> to vector<2x8x8xf32>
    %220 = arith.subf %216, %219 : vector<2x8x8xf32>
    %221 = math.exp %220 : vector<2x8x8xf32>
    %cst_82 = arith.constant dense<0.000000e+00> : vector<2x8xf32>
    %222 = vector.multi_reduction <add>, %221, %cst_82 [2] : vector<2x8x8xf32> to vector<2x8xf32>
    %223 = vector.shape_cast %222 : vector<2x8xf32> to vector<2x8x1xf32>
    %224 = vector.broadcast %223 : vector<2x8x1xf32> to vector<2x8x8xf32>
    %225 = arith.divf %221, %224 : vector<2x8x8xf32>
    "tpu.trace_start"() <{level = 10 : i32, message = "bqk,bkd->bqd"}> : () -> ()
    %cst_83 = arith.constant dense<0.000000e+00> : vector<2x8x8xf32>
    %226 = tpu.matmul %225, %214, %cst_83 {dimension_numbers = #tpu.dot_dimension_numbers<[2], [1], [1], [2], [0, 0, 0, 1, 1, 2], [0], [0]>} : vector<2x8x8xf32>, vector<2x8x8xf32>, vector<2x8x8xf32> -> vector<2x8x8xf32>
    "tpu.trace_stop"() : () -> ()
    %227 = vector.shape_cast %226 : vector<2x8x8xf32> to vector<16x8xf32>
    %228 = vector.extract_strided_slice %162 {offsets = [2, 0, 0], sizes = [1, 8, 32], strides = [1, 1, 1]} : vector<4x8x32xf32> to vector<1x8x32xf32>
    %229 = vector.shape_cast %228 : vector<1x8x32xf32> to vector<8x32xf32>
    %cst_84 = arith.constant dense<0.000000e+00> : vector<16x32xf32>
    %230 = tpu.matmul %227, %229, %cst_84 {dimension_numbers = #tpu.dot_dimension_numbers<[1], [0], [0], [1], [0, 0, 1, 1], [], []>} : vector<16x8xf32>, vector<8x32xf32>, vector<16x32xf32> -> vector<16x32xf32>
    %231 = arith.addf %208, %230 : vector<16x32xf32>
    %232 = vector.extract_strided_slice %154 {offsets = [0, 24], sizes = [16, 8], strides = [1, 1]} : vector<16x32xf32> to vector<16x8xf32>
    %233 = vector.shape_cast %232 : vector<16x8xf32> to vector<2x8x8xf32>
    %234 = vector.extract_strided_slice %160 {offsets = [0, 24], sizes = [16, 8], strides = [1, 1]} : vector<16x32xf32> to vector<16x8xf32>
    %235 = vector.shape_cast %234 : vector<16x8xf32> to vector<2x8x8xf32>
    %236 = vector.extract_strided_slice %161 {offsets = [0, 24], sizes = [16, 8], strides = [1, 1]} : vector<16x32xf32> to vector<16x8xf32>
    %237 = vector.shape_cast %236 : vector<16x8xf32> to vector<2x8x8xf32>
    "tpu.trace_start"() <{level = 10 : i32, message = "bqd,bkd->bqk"}> : () -> ()
    %cst_85 = arith.constant dense<0.000000e+00> : vector<2x8x8xf32>
    %238 = tpu.matmul %233, %235, %cst_85 {dimension_numbers = #tpu.dot_dimension_numbers<[2], [2], [1], [1], [0, 0, 0, 1, 1, 1], [0], [0]>} : vector<2x8x8xf32>, vector<2x8x8xf32>, vector<2x8x8xf32> -> vector<2x8x8xf32>
    "tpu.trace_stop"() : () -> ()
    %239 = arith.addf %238, %15 : vector<2x8x8xf32>
    %cst_86 = arith.constant dense<0xFF800000> : vector<2x8xf32>
    %240 = vector.multi_reduction <maximumf>, %239, %cst_86 [2] : vector<2x8x8xf32> to vector<2x8xf32>
    %241 = vector.shape_cast %240 : vector<2x8xf32> to vector<2x8x1xf32>
    %242 = vector.broadcast %241 : vector<2x8x1xf32> to vector<2x8x8xf32>
    %243 = arith.subf %239, %242 : vector<2x8x8xf32>
    %244 = math.exp %243 : vector<2x8x8xf32>
    %cst_87 = arith.constant dense<0.000000e+00> : vector<2x8xf32>
    %245 = vector.multi_reduction <add>, %244, %cst_87 [2] : vector<2x8x8xf32> to vector<2x8xf32>
    %246 = vector.shape_cast %245 : vector<2x8xf32> to vector<2x8x1xf32>
    %247 = vector.broadcast %246 : vector<2x8x1xf32> to vector<2x8x8xf32>
    %248 = arith.divf %244, %247 : vector<2x8x8xf32>
    "tpu.trace_start"() <{level = 10 : i32, message = "bqk,bkd->bqd"}> : () -> ()
    %cst_88 = arith.constant dense<0.000000e+00> : vector<2x8x8xf32>
    %249 = tpu.matmul %248, %237, %cst_88 {dimension_numbers = #tpu.dot_dimension_numbers<[2], [1], [1], [2], [0, 0, 0, 1, 1, 2], [0], [0]>} : vector<2x8x8xf32>, vector<2x8x8xf32>, vector<2x8x8xf32> -> vector<2x8x8xf32>
    "tpu.trace_stop"() : () -> ()
    %250 = vector.shape_cast %249 : vector<2x8x8xf32> to vector<16x8xf32>
    %251 = vector.extract_strided_slice %162 {offsets = [3, 0, 0], sizes = [1, 8, 32], strides = [1, 1, 1]} : vector<4x8x32xf32> to vector<1x8x32xf32>
    %252 = vector.shape_cast %251 : vector<1x8x32xf32> to vector<8x32xf32>
    %cst_89 = arith.constant dense<0.000000e+00> : vector<16x32xf32>
    %253 = tpu.matmul %250, %252, %cst_89 {dimension_numbers = #tpu.dot_dimension_numbers<[1], [0], [0], [1], [0, 0, 1, 1], [], []>} : vector<16x8xf32>, vector<8x32xf32>, vector<16x32xf32> -> vector<16x32xf32>
    %254 = arith.addf %231, %253 : vector<16x32xf32>
    %255 = vector.broadcast %163 : vector<1x32xf32> to vector<16x32xf32>
    %256 = arith.addf %254, %255 : vector<16x32xf32>
    %257 = arith.addf %149, %256 : vector<16x32xf32>
    %258 = vector.extract_strided_slice %16 {offsets = [1, 0], sizes = [1, 32], strides = [1, 1]} : vector<3x32xf32> to vector<1x32xf32>
    %259 = vector.shape_cast %258 : vector<1x32xf32> to vector<32xf32>
    %260 = vector.extract_strided_slice %17 {offsets = [1, 0], sizes = [1, 32], strides = [1, 1]} : vector<3x32xf32> to vector<1x32xf32>
    %261 = vector.shape_cast %260 : vector<1x32xf32> to vector<32xf32>
    %cst_90 = arith.constant dense<0.000000e+00> : vector<16xf32>
    %262 = vector.multi_reduction <add>, %257, %cst_90 [1] : vector<16x32xf32> to vector<16xf32>
    %263 = vector.shape_cast %262 : vector<16xf32> to vector<16x1xf32>
    %cst_91 = arith.constant 3.200000e+01 : f32
    %264 = vector.broadcast %cst_91 : f32 to vector<16x1xf32>
    %265 = arith.divf %263, %264 : vector<16x1xf32>
    %266 = vector.broadcast %265 : vector<16x1xf32> to vector<16x32xf32>
    %267 = arith.subf %257, %266 : vector<16x32xf32>
    %268 = arith.mulf %267, %267 : vector<16x32xf32>
    %cst_92 = arith.constant dense<0.000000e+00> : vector<16xf32>
    %269 = vector.multi_reduction <add>, %268, %cst_92 [1] : vector<16x32xf32> to vector<16xf32>
    %270 = vector.shape_cast %269 : vector<16xf32> to vector<16x1xf32>
    %cst_93 = arith.constant 3.200000e+01 : f32
    %271 = vector.broadcast %cst_93 : f32 to vector<16x1xf32>
    %272 = arith.divf %270, %271 : vector<16x1xf32>
    %273 = vector.broadcast %265 : vector<16x1xf32> to vector<16x32xf32>
    %274 = arith.subf %257, %273 : vector<16x32xf32>
    %cst_94 = arith.constant 9.99999974E-6 : f32
    %275 = vector.broadcast %cst_94 : f32 to vector<16x1xf32>
    %276 = arith.addf %272, %275 : vector<16x1xf32>
    %277 = math.rsqrt %276 : vector<16x1xf32>
    %278 = vector.broadcast %277 : vector<16x1xf32> to vector<16x32xf32>
    %279 = arith.mulf %274, %278 : vector<16x32xf32>
    %280 = vector.shape_cast %259 : vector<32xf32> to vector<1x32xf32>
    %281 = vector.broadcast %280 : vector<1x32xf32> to vector<16x32xf32>
    %282 = arith.mulf %279, %281 : vector<16x32xf32>
    %283 = vector.shape_cast %261 : vector<32xf32> to vector<1x32xf32>
    %284 = vector.broadcast %283 : vector<1x32xf32> to vector<16x32xf32>
    %285 = arith.addf %282, %284 : vector<16x32xf32>
    %c0_95 = arith.constant 0 : index
    %c0_96 = arith.constant 0 : index
    %286 = vector.load %arg15[%c0_95, %c0_96] : memref<32x64xf32, #tpu.memory_space<vmem>>, vector<32x64xf32>
    %cst_97 = arith.constant dense<0.000000e+00> : vector<16x64xf32>
    %287 = tpu.matmul %285, %286, %cst_97 {dimension_numbers = #tpu.dot_dimension_numbers<[1], [0], [0], [1], [0, 0, 1, 1], [], []>} : vector<16x32xf32>, vector<32x64xf32>, vector<16x64xf32> -> vector<16x64xf32>
    %c0_98 = arith.constant 0 : index
    %c0_99 = arith.constant 0 : index
    %288 = vector.load %arg16[%c0_98, %c0_99] : memref<1x64xf32, #tpu.memory_space<vmem>>, vector<1x64xf32>
    %289 = vector.broadcast %288 : vector<1x64xf32> to vector<16x64xf32>
    %290 = arith.addf %287, %289 : vector<16x64xf32>
    %cst_100 = arith.constant 0.000000e+00 : f32
    %291 = vector.broadcast %cst_100 : f32 to vector<16x64xf32>
    %292 = arith.maximumf %290, %291 : vector<16x64xf32>
    %c0_101 = arith.constant 0 : index
    %c0_102 = arith.constant 0 : index
    %293 = vector.load %arg17[%c0_101, %c0_102] : memref<64x32xf32, #tpu.memory_space<vmem>>, vector<64x32xf32>
    %cst_103 = arith.constant dense<0.000000e+00> : vector<16x32xf32>
    %294 = tpu.matmul %292, %293, %cst_103 {dimension_numbers = #tpu.dot_dimension_numbers<[1], [0], [0], [1], [0, 0, 1, 1], [], []>} : vector<16x64xf32>, vector<64x32xf32>, vector<16x32xf32> -> vector<16x32xf32>
    %c0_104 = arith.constant 0 : index
    %c0_105 = arith.constant 0 : index
    %295 = vector.load %arg18[%c0_104, %c0_105] : memref<1x32xf32, #tpu.memory_space<vmem>>, vector<1x32xf32>
    %296 = vector.broadcast %295 : vector<1x32xf32> to vector<16x32xf32>
    %297 = arith.addf %294, %296 : vector<16x32xf32>
    %298 = arith.addf %285, %297 : vector<16x32xf32>
    %299 = vector.extract_strided_slice %16 {offsets = [2, 0], sizes = [1, 32], strides = [1, 1]} : vector<3x32xf32> to vector<1x32xf32>
    %300 = vector.shape_cast %299 : vector<1x32xf32> to vector<32xf32>
    %301 = vector.extract_strided_slice %17 {offsets = [2, 0], sizes = [1, 32], strides = [1, 1]} : vector<3x32xf32> to vector<1x32xf32>
    %302 = vector.shape_cast %301 : vector<1x32xf32> to vector<32xf32>
    %cst_106 = arith.constant dense<0.000000e+00> : vector<16xf32>
    %303 = vector.multi_reduction <add>, %298, %cst_106 [1] : vector<16x32xf32> to vector<16xf32>
    %304 = vector.shape_cast %303 : vector<16xf32> to vector<16x1xf32>
    %cst_107 = arith.constant 3.200000e+01 : f32
    %305 = vector.broadcast %cst_107 : f32 to vector<16x1xf32>
    %306 = arith.divf %304, %305 : vector<16x1xf32>
    %307 = vector.broadcast %306 : vector<16x1xf32> to vector<16x32xf32>
    %308 = arith.subf %298, %307 : vector<16x32xf32>
    %309 = arith.mulf %308, %308 : vector<16x32xf32>
    %cst_108 = arith.constant dense<0.000000e+00> : vector<16xf32>
    %310 = vector.multi_reduction <add>, %309, %cst_108 [1] : vector<16x32xf32> to vector<16xf32>
    %311 = vector.shape_cast %310 : vector<16xf32> to vector<16x1xf32>
    %cst_109 = arith.constant 3.200000e+01 : f32
    %312 = vector.broadcast %cst_109 : f32 to vector<16x1xf32>
    %313 = arith.divf %311, %312 : vector<16x1xf32>
    %314 = vector.broadcast %306 : vector<16x1xf32> to vector<16x32xf32>
    %315 = arith.subf %298, %314 : vector<16x32xf32>
    %cst_110 = arith.constant 9.99999974E-6 : f32
    %316 = vector.broadcast %cst_110 : f32 to vector<16x1xf32>
    %317 = arith.addf %313, %316 : vector<16x1xf32>
    %318 = math.rsqrt %317 : vector<16x1xf32>
    %319 = vector.broadcast %318 : vector<16x1xf32> to vector<16x32xf32>
    %320 = arith.mulf %315, %319 : vector<16x32xf32>
    %321 = vector.shape_cast %300 : vector<32xf32> to vector<1x32xf32>
    %322 = vector.broadcast %321 : vector<1x32xf32> to vector<16x32xf32>
    %323 = arith.mulf %320, %322 : vector<16x32xf32>
    %324 = vector.shape_cast %302 : vector<32xf32> to vector<1x32xf32>
    %325 = vector.broadcast %324 : vector<1x32xf32> to vector<16x32xf32>
    %326 = arith.addf %323, %325 : vector<16x32xf32>
    %327 = vector.shape_cast %326 : vector<16x32xf32> to vector<2x8x32xf32>
    %c0_111 = arith.constant 0 : index
    %c0_112 = arith.constant 0 : index
    %c0_113 = arith.constant 0 : index
    %328 = vector.load %arg21[%c0_111, %c0_112, %c0_113] : memref<2x8x32xf32, #tpu.memory_space<vmem>>, vector<2x8x32xf32>
    tpu.vector_store %arg21[%c0_111, %c0_112, %c0_113], %327 {strides = array<i32>} : memref<2x8x32xf32, #tpu.memory_space<vmem>>, vector<2x8x32xf32>,
    return
  }
  func.func @transform_0(%arg0: i32) -> (i32, i32, i32) {
    %c0_i32 = arith.constant 0 : i32
    %c0_i32_0 = arith.constant 0 : i32
    %c0_i32_1 = arith.constant 0 : i32
    return %arg0, %c0_i32, %c0_i32_0 : i32, i32, i32
  }
  func.func @transform_1(%arg0: i32) -> (i32, i32, i32) {
    %c0_i32 = arith.constant 0 : i32
    %c0_i32_0 = arith.constant 0 : i32
    %c0_i32_1 = arith.constant 0 : i32
    return %arg0, %c0_i32, %c0_i32_0 : i32, i32, i32
  }
  func.func @transform_2(%arg0: i32) -> (i32, i32, i32) {
    %c0_i32 = arith.constant 0 : i32
    %c0_i32_0 = arith.constant 0 : i32
    %c0_i32_1 = arith.constant 0 : i32
    return %arg0, %c0_i32, %c0_i32_0 : i32, i32, i32
  }
  func.func @transform_3(%arg0: i32) -> (i32, i32, i32) {
    %c0_i32 = arith.constant 0 : i32
    %c0_i32_0 = arith.constant 0 : i32
    %c0_i32_1 = arith.constant 0 : i32
    return %arg0, %c0_i32, %c0_i32_0 : i32, i32, i32
  }
  func.func @transform_4(%arg0: i32) -> (i32, i32) {
    %c0_i32 = arith.constant 0 : i32
    %c0_i32_0 = arith.constant 0 : i32
    %c0_i32_1 = arith.constant 0 : i32
    return %c0_i32, %c0_i32_0 : i32, i32
  }
  func.func @transform_5(%arg0: i32) -> (i32, i32) {
    %c0_i32 = arith.constant 0 : i32
    %c0_i32_0 = arith.constant 0 : i32
    %c0_i32_1 = arith.constant 0 : i32
    return %c0_i32, %c0_i32_0 : i32, i32
  }
  func.func @transform_6(%arg0: i32) -> (i32, i32, i32) {
    %c0_i32 = arith.constant 0 : i32
    %c0_i32_0 = arith.constant 0 : i32
    %c0_i32_1 = arith.constant 0 : i32
    %c0_i32_2 = arith.constant 0 : i32
    return %c0_i32, %c0_i32_0, %c0_i32_1 : i32, i32, i32
  }
  func.func @transform_7(%arg0: i32) -> (i32, i32) {
    %c0_i32 = arith.constant 0 : i32
    %c0_i32_0 = arith.constant 0 : i32
    %c0_i32_1 = arith.constant 0 : i32
    return %c0_i32, %c0_i32_0 : i32, i32
  }
  func.func @transform_8(%arg0: i32) -> (i32, i32) {
    %c0_i32 = arith.constant 0 : i32
    %c0_i32_0 = arith.constant 0 : i32
    %c0_i32_1 = arith.constant 0 : i32
    return %c0_i32, %c0_i32_0 : i32, i32
  }
  func.func @transform_9(%arg0: i32) -> (i32, i32) {
    %c0_i32 = arith.constant 0 : i32
    %c0_i32_0 = arith.constant 0 : i32
    %c0_i32_1 = arith.constant 0 : i32
    return %c0_i32, %c0_i32_0 : i32, i32
  }
  func.func @transform_10(%arg0: i32) -> (i32, i32) {
    %c0_i32 = arith.constant 0 : i32
    %c0_i32_0 = arith.constant 0 : i32
    %c0_i32_1 = arith.constant 0 : i32
    return %c0_i32, %c0_i32_0 : i32, i32
  }
  func.func @transform_11(%arg0: i32) -> (i32, i32) {
    %c0_i32 = arith.constant 0 : i32
    %c0_i32_0 = arith.constant 0 : i32
    %c0_i32_1 = arith.constant 0 : i32
    return %c0_i32, %c0_i32_0 : i32, i32
  }
  func.func @transform_12(%arg0: i32) -> (i32, i32, i32) {
    %c0_i32 = arith.constant 0 : i32
    %c0_i32_0 = arith.constant 0 : i32
    %c0_i32_1 = arith.constant 0 : i32
    %c0_i32_2 = arith.constant 0 : i32
    return %c0_i32, %c0_i32_0, %c0_i32_1 : i32, i32, i32
  }
  func.func @transform_13(%arg0: i32) -> (i32, i32) {
    %c0_i32 = arith.constant 0 : i32
    %c0_i32_0 = arith.constant 0 : i32
    %c0_i32_1 = arith.constant 0 : i32
    return %c0_i32, %c0_i32_0 : i32, i32
  }
  func.func @transform_14(%arg0: i32) -> (i32, i32) {
    %c0_i32 = arith.constant 0 : i32
    %c0_i32_0 = arith.constant 0 : i32
    %c0_i32_1 = arith.constant 0 : i32
    return %c0_i32, %c0_i32_0 : i32, i32
  }
  func.func @transform_15(%arg0: i32) -> (i32, i32) {
    %c0_i32 = arith.constant 0 : i32
    %c0_i32_0 = arith.constant 0 : i32
    %c0_i32_1 = arith.constant 0 : i32
    return %c0_i32, %c0_i32_0 : i32, i32
  }
  func.func @transform_16(%arg0: i32) -> (i32, i32) {
    %c0_i32 = arith.constant 0 : i32
    %c0_i32_0 = arith.constant 0 : i32
    %c0_i32_1 = arith.constant 0 : i32
    return %c0_i32, %c0_i32_0 : i32, i32
  }
  func.func @transform_17(%arg0: i32) -> (i32, i32) {
    %c0_i32 = arith.constant 0 : i32
    %c0_i32_0 = arith.constant 0 : i32
    %c0_i32_1 = arith.constant 0 : i32
    return %c0_i32, %c0_i32_0 : i32, i32
  }
  func.func @transform_18(%arg0: i32) -> (i32, i32) {
    %c0_i32 = arith.constant 0 : i32
    %c0_i32_0 = arith.constant 0 : i32
    %c0_i32_1 = arith.constant 0 : i32
    return %c0_i32, %c0_i32_0 : i32, i32
  }
  func.func @transform_19(%arg0: i32) -> (i32, i32) {
    %c0_i32 = arith.constant 0 : i32
    %c0_i32_0 = arith.constant 0 : i32
    %c0_i32_1 = arith.constant 0 : i32
    return %c0_i32, %c0_i32_0 : i32, i32
  }
  func.func @transform_20(%arg0: i32) -> (i32, i32, i32) {
    %c0_i32 = arith.constant 0 : i32
    %c0_i32_0 = arith.constant 0 : i32
    %c0_i32_1 = arith.constant 0 : i32
    return %arg0, %c0_i32, %c0_i32_0 : i32, i32, i32
  }
}

</mosaic_0001>

<llo_original>
// kernel: tpu_custom_call.1
$region0: #{tpu_custom_call.1}
  #allocation0 [shape = 'u32[]', space=smem, size = 0x4, offset = 0x4, fixed_abs, tag = 'smem constant byte address 0x4 - core index']
  #allocation1 [shape = 'u32[72,128]{1,0:T(1,128)}', space=vmem, size = 0x9000, scoped, tag = 'internal scratch']
  %s0 = inlined_call_operand.vmem [shape: f32[4,8,32], index: 0, kind: input, shape index: {}]
  %s1 = inlined_call_operand.vmem [shape: f32[4,8,32], index: 1, kind: input, shape index: {}]
  %s2 = inlined_call_operand.vmem [shape: f32[4,8,8], index: 2, kind: input, shape index: {}]
  %s3 = inlined_call_operand.hbm [shape: f32[4,8,8], index: 3, kind: input, shape index: {}]
  %s4 = inlined_call_operand.hbm [shape: f32[32,96], index: 4, kind: input, shape index: {}]
  %s5 = inlined_call_operand.vmem [shape: f32[1,96], index: 5, kind: input, shape index: {}]
  %s6 = inlined_call_operand.hbm [shape: f32[4,8,32], index: 6, kind: input, shape index: {}]
  %s7 = inlined_call_operand.hbm [shape: f32[1,32], index: 7, kind: input, shape index: {}]
  %s8 = inlined_call_operand.hbm [shape: f32[32,32], index: 8, kind: input, shape index: {}]
  %s9 = inlined_call_operand.hbm [shape: f32[1,32], index: 9, kind: input, shape index: {}]
  %s10 = inlined_call_operand.hbm [shape: f32[32,64], index: 10, kind: input, shape index: {}]
  %s11 = inlined_call_operand.hbm [shape: f32[1,64], index: 11, kind: input, shape index: {}]
  %s12 = inlined_call_operand.hbm [shape: f32[4,8,32], index: 12, kind: input, shape index: {}]
  %s13 = inlined_call_operand.vmem [shape: f32[1,32], index: 13, kind: input, shape index: {}]
  %s14 = inlined_call_operand.hbm [shape: f32[32,64], index: 14, kind: input, shape index: {}]
  %s15 = inlined_call_operand.vmem [shape: f32[1,64], index: 15, kind: input, shape index: {}]
  %s16 = inlined_call_operand.vmem [shape: f32[64,32], index: 16, kind: input, shape index: {}]
  %s17 = inlined_call_operand.vmem [shape: f32[1,32], index: 17, kind: input, shape index: {}]
  %s18 = inlined_call_operand.vmem [shape: f32[3,32], index: 18, kind: input, shape index: {}]
  %s19 = inlined_call_operand.vmem [shape: f32[3,32], index: 19, kind: input, shape index: {}]
  %s20 = inlined_call_operand.hbm [shape: f32[4,8,32], index: 20, kind: output, shape index: {}]
  %s21 = sld [smem:[#allocation0]]
  $region153: #{tpu_custom_call.1} parent=0
    _
  %s23 = ssub.s32 1, %s21
  %s24 = scalar_select 0, %s23, %s21
  $region1: #{tpu_custom_call.1} parent=0
    #allocation2 [shape = 'u8[16384]{0}', space=vmem, size = 0x4000, scoped, tag = 'input window, operand 3']
    #allocation3 [shape = 's32[2]{0}', space=sflag, size = 0x8, scoped, tag = 'scoped memory for tpu_custom_call.1']
    #allocation4 [shape = 's32[2]{0}', space=sflag, size = 0x8, scoped, tag = 'scoped memory for tpu_custom_call.1']
    #allocation5 [shape = 'u8[16384]{0}', space=vmem, size = 0x4000, scoped, tag = 'input window, operand 4, single buffered']
    #allocation6 [shape = 's32[1]{0}', space=sflag, size = 0x4, scoped, tag = 'scoped memory for tpu_custom_call.1']
    #allocation7 [shape = 'u8[16384]{0}', space=vmem, size = 0x4000, scoped, tag = 'input window, operand 6, single buffered']
    #allocation8 [shape = 'u8[512]{0}', space=vmem, size = 0x400, scoped, tag = 'input window, operand 7, single buffered']
    #allocation9 [shape = 's32[1]{0}', space=sflag, size = 0x4, scoped, tag = 'scoped memory for tpu_custom_call.1']
    #allocation10 [shape = 'u8[16384]{0}', space=vmem, size = 0x4000, scoped, tag = 'input window, operand 8, single buffered']
    #allocation11 [shape = 'u8[512]{0}', space=vmem, size = 0x400, scoped, tag = 'input window, operand 9, single buffered']
    #allocation12 [shape = 's32[1]{0}', space=sflag, size = 0x4, scoped, tag = 'scoped memory for tpu_custom_call.1']
    #allocation13 [shape = 'u8[16384]{0}', space=vmem, size = 0x4000, scoped, tag = 'input window, operand 10, single buffered']
    #allocation14 [shape = 'u8[512]{0}', space=vmem, size = 0x400, scoped, tag = 'input window, operand 11, single buffered']
    #allocation15 [shape = 's32[1]{0}', space=sflag, size = 0x4, scoped, tag = 'scoped memory for tpu_custom_call.1']
    #allocation16 [shape = 'u8[16384]{0}', space=vmem, size = 0x4000, scoped, tag = 'input window, operand 12, single buffered']
    #allocation17 [shape = 'u8[16384]{0}', space=vmem, size = 0x4000, scoped, tag = 'input window, operand 14, single buffered']
    #allocation18 [shape = 's32[1]{0}', space=sflag, size = 0x4, scoped, tag = 'scoped memory for tpu_custom_call.1']
    #allocation19 [shape = 'u8[16384]{0}', space=vmem, size = 0x4000, scoped, tag = 'output window, operand 0']
    %25 = vsyncpa [#allocation3], 0
    %s26 = scalar_lea.sflag [#allocation3], 1
    %27 = vsyncpa %s26, 0
    %28 = vsyncpa [#allocation6], 0
    %29 = vsyncpa [#allocation9], 0
    %30 = vsyncpa [#allocation12], 0
    %31 = vsyncpa [#allocation15], 0
    %32 = vsyncpa [#allocation18], 0
    %33 = vsyncpa [#allocation4], 0
    %s34 = scalar_lea.sflag [#allocation4], 1
    %35 = vsyncpa %s34, 0
    loop: start=0, step=1, limit=4
    $region2: #{tpu_custom_call.1} parent=1 // loop_pre_header
      _
    $region3: #{tpu_custom_call.1} parent=1 // loop_header
      %s37 = sphi 0, %s41
      %p38 = scmp.ge.s32.totalorder %s37, 4
      %s47 = sphi 0, %s49
      %s50 = sphi 0, %s47
      %s51 = sphi 0, %s50
      %s67 = sphi 0, %s51
      %s73 = sphi 0, %s75
      %s76 = sphi 0, %s73
      %s77 = sphi 0, %s76
      %s93 = sphi 0, %s77
      %s99 = sphi 0, %s101
      %s102 = sphi 0, %s99
      %s103 = sphi 0, %s102
      %s119 = sphi 0, %s103
      %s125 = sphi 0, %s127
      %s128 = sphi 0, %s125
      %s129 = sphi 0, %s128
      %s145 = sphi 0, %s129
      %s149 = sphi 0, %s149
      %s151 = sphi 0, %s149
      %s152 = sphi 0, %s151
      %s166 = sphi 0, %s152
      %s170 = sphi 0, %s170
      %s172 = sphi 0, %s170
      %s173 = sphi 0, %s172
      %s187 = sphi 0, %s173
      %s191 = sphi 0, %s191
      %s193 = sphi 0, %s191
      %s194 = sphi 0, %s193
      %s208 = sphi 0, %s194
      %s212 = sphi 0, %s212
      %s214 = sphi 0, %s212
      %s215 = sphi 0, %s214
      %s229 = sphi 0, %s215
      %s233 = sphi 0, %s233
      %s235 = sphi 0, %s233
      %s236 = sphi 0, %s235
      %s250 = sphi 0, %s236
      %s254 = sphi 0, %s254
      %s256 = sphi 0, %s254
      %s257 = sphi 0, %s256
      %s271 = sphi 0, %s257
      %s275 = sphi 0, %s275
      %s277 = sphi 0, %s275
      %s278 = sphi 0, %s277
      %s292 = sphi 0, %s278
      %s296 = sphi 0, %s296
      %s298 = sphi 0, %s296
      %s299 = sphi 0, %s298
      %s313 = sphi 0, %s299
      %s317 = sphi 0, %s317
      %s319 = sphi 0, %s317
      %s320 = sphi 0, %s319
      %s334 = sphi 0, %s320
      %s338 = sphi 0, %s338
      %s340 = sphi 0, %s338
      %s341 = sphi 0, %s340
      %s355 = sphi 0, %s341
      %s359 = sphi 0, %s359
      %s361 = sphi 0, %s359
      %s362 = sphi 0, %s361
      %s376 = sphi 0, %s362
      %s380 = sphi 0, %s380
      %s382 = sphi 0, %s380
      %s383 = sphi 0, %s382
      %s397 = sphi 0, %s383
      %s401 = sphi 0, %s401
      %s403 = sphi 0, %s401
      %s404 = sphi 0, %s403
      %s418 = sphi 0, %s404
      %s422 = sphi 0, %s422
      %s424 = sphi 0, %s422
      %s425 = sphi 0, %s424
      %s439 = sphi 0, %s425
      %s443 = sphi 0, %s443
      %s445 = sphi 0, %s443
      %s446 = sphi 0, %s445
      %s460 = sphi 0, %s446
      %s464 = sphi 0, %s464
      %s466 = sphi 0, %s464
      %s467 = sphi 0, %s466
      %s481 = sphi 0, %s467
      %s487 = sphi 0, %s489
      %s490 = sphi 0, %s487
      %s491 = sphi 0, %s490
      %s507 = sphi 0, %s491
    $region4: #{tpu_custom_call.1} parent=1 // loop_header_branch
      %40 = sbr.rel (%p38) target = $region8
    $region5: #{tpu_custom_call.1} parent=1 // loop_body
      %s42 = ssub.s32 %s37, 1
      %s43 = ssub.s32 %s37, 2
      %s44 = sadd.s32 %s37, 1
      %s45 = ssub.s32 %s37, %s44
      %p46 = scmp.eq.s32.totalorder %s45, 0
      %s48 = sadd.s32 %s47, 1
      %s49 = scalar_select %p46, %s47, %s48
      %p52 = pneg %p46
      %p53 = scmp.eq.s32.totalorder %s37, 1
      %p54 = por %p52, %p53
      %p55 = scmp.ne.s32.totalorder %s47, %s50
      %p56 = scmp.eq.s32.totalorder %s37, 0
      %p57 = por %p55, %p56
      %p58 = scmp.ne.s32.totalorder %s47, %s50
      %p59 = scmp.eq.s32.totalorder %s42, 1
      %p60 = por %p58, %p59
      %p61 = scmp.ne.s32.totalorder %s50, %s51
      %p62 = scmp.eq.s32.totalorder %s42, 0
      %p63 = por %p61, %p62
      %p64 = scmp.ne.s32.totalorder %s50, %s51
      %p65 = scmp.eq.s32.totalorder %s43, 1
      %p66 = por %p64, %p65
      %p68 = scmp.ne.s32.totalorder %s51, %s67
      %p69 = scmp.eq.s32.totalorder %s43, 0
      %p70 = por %p68, %p69
      %s71 = ssub.s32 %s37, %s44
      %p72 = scmp.eq.s32.totalorder %s71, 0
      %s74 = sadd.s32 %s73, 1
      %s75 = scalar_select %p72, %s73, %s74
      %p78 = pneg %p72
      %p79 = scmp.eq.s32.totalorder %s37, 1
      %p80 = por %p78, %p79
      %p81 = scmp.ne.s32.totalorder %s73, %s76
      %p82 = scmp.eq.s32.totalorder %s37, 0
      %p83 = por %p81, %p82
      %p84 = scmp.ne.s32.totalorder %s73, %s76
      %p85 = scmp.eq.s32.totalorder %s42, 1
      %p86 = por %p84, %p85
      %p87 = scmp.ne.s32.totalorder %s76, %s77
      %p88 = scmp.eq.s32.totalorder %s42, 0
      %p89 = por %p87, %p88
      %p90 = scmp.ne.s32.totalorder %s76, %s77
      %p91 = scmp.eq.s32.totalorder %s43, 1
      %p92 = por %p90, %p91
      %p94 = scmp.ne.s32.totalorder %s77, %s93
      %p95 = scmp.eq.s32.totalorder %s43, 0
      %p96 = por %p94, %p95
      %s97 = ssub.s32 %s37, %s44
      %p98 = scmp.eq.s32.totalorder %s97, 0
      %s100 = sadd.s32 %s99, 1
      %s101 = scalar_select %p98, %s99, %s100
      %p104 = pneg %p98
      %p105 = scmp.eq.s32.totalorder %s37, 1
      %p106 = por %p104, %p105
      %p107 = scmp.ne.s32.totalorder %s99, %s102
      %p108 = scmp.eq.s32.totalorder %s37, 0
      %p109 = por %p107, %p108
      %p110 = scmp.ne.s32.totalorder %s99, %s102
      %p111 = scmp.eq.s32.totalorder %s42, 1
      %p112 = por %p110, %p111
      %p113 = scmp.ne.s32.totalorder %s102, %s103
      %p114 = scmp.eq.s32.totalorder %s42, 0
      %p115 = por %p113, %p114
      %p116 = scmp.ne.s32.totalorder %s102, %s103
      %p117 = scmp.eq.s32.totalorder %s43, 1
      %p118 = por %p116, %p117
      %p120 = scmp.ne.s32.totalorder %s103, %s119
      %p121 = scmp.eq.s32.totalorder %s43, 0
      %p122 = por %p120, %p121
      %s123 = ssub.s32 %s37, %s44
      %p124 = scmp.eq.s32.totalorder %s123, 0
      %s126 = sadd.s32 %s125, 1
      %s127 = scalar_select %p124, %s125, %s126
      %p130 = pneg %p124
      %p131 = scmp.eq.s32.totalorder %s37, 1
      %p132 = por %p130, %p131
      %p133 = scmp.ne.s32.totalorder %s125, %s128
      %p134 = scmp.eq.s32.totalorder %s37, 0
      %p135 = por %p133, %p134
      %p136 = scmp.ne.s32.totalorder %s125, %s128
      %p137 = scmp.eq.s32.totalorder %s42, 1
      %p138 = por %p136, %p137
      %p139 = scmp.ne.s32.totalorder %s128, %s129
      %p140 = scmp.eq.s32.totalorder %s42, 0
      %p141 = por %p139, %p140
      %p142 = scmp.ne.s32.totalorder %s128, %s129
      %p143 = scmp.eq.s32.totalorder %s43, 1
      %p144 = por %p142, %p143
      %p146 = scmp.ne.s32.totalorder %s129, %s145
      %p147 = scmp.eq.s32.totalorder %s43, 0
      %p148 = por %p146, %p147
      %s150 = sadd.s32 %s149, 1
      %p153 = scmp.eq.s32.totalorder %s37, 1
      %p154 = scmp.ne.s32.totalorder %s149, %s151
      %p155 = scmp.eq.s32.totalorder %s37, 0
      %p156 = por %p154, %p155
      %p157 = scmp.ne.s32.totalorder %s149, %s151
      %p158 = scmp.eq.s32.totalorder %s42, 1
      %p159 = por %p157, %p158
      %p160 = scmp.ne.s32.totalorder %s151, %s152
      %p161 = scmp.eq.s32.totalorder %s42, 0
      %p162 = por %p160, %p161
      %p163 = scmp.ne.s32.totalorder %s151, %s152
      %p164 = scmp.eq.s32.totalorder %s43, 1
      %p165 = por %p163, %p164
      %p167 = scmp.ne.s32.totalorder %s152, %s166
      %p168 = scmp.eq.s32.totalorder %s43, 0
      %p169 = por %p167, %p168
      %s171 = sadd.s32 %s170, 1
      %p174 = scmp.eq.s32.totalorder %s37, 1
      %p175 = scmp.ne.s32.totalorder %s170, %s172
      %p176 = scmp.eq.s32.totalorder %s37, 0
      %p177 = por %p175, %p176
      %p178 = scmp.ne.s32.totalorder %s170, %s172
      %p179 = scmp.eq.s32.totalorder %s42, 1
      %p180 = por %p178, %p179
      %p181 = scmp.ne.s32.totalorder %s172, %s173
      %p182 = scmp.eq.s32.totalorder %s42, 0
      %p183 = por %p181, %p182
      %p184 = scmp.ne.s32.totalorder %s172, %s173
      %p185 = scmp.eq.s32.totalorder %s43, 1
      %p186 = por %p184, %p185
      %p188 = scmp.ne.s32.totalorder %s173, %s187
      %p189 = scmp.eq.s32.totalorder %s43, 0
      %p190 = por %p188, %p189
      %s192 = sadd.s32 %s191, 1
      %p195 = scmp.eq.s32.totalorder %s37, 1
      %p196 = scmp.ne.s32.totalorder %s191, %s193
      %p197 = scmp.eq.s32.totalorder %s37, 0
      %p198 = por %p196, %p197
      %p199 = scmp.ne.s32.totalorder %s191, %s193
      %p200 = scmp.eq.s32.totalorder %s42, 1
      %p201 = por %p199, %p200
      %p202 = scmp.ne.s32.totalorder %s193, %s194
      %p203 = scmp.eq.s32.totalorder %s42, 0
      %p204 = por %p202, %p203
      %p205 = scmp.ne.s32.totalorder %s193, %s194
      %p206 = scmp.eq.s32.totalorder %s43, 1
      %p207 = por %p205, %p206
      %p209 = scmp.ne.s32.totalorder %s194, %s208
      %p210 = scmp.eq.s32.totalorder %s43, 0
      %p211 = por %p209, %p210
      %s213 = sadd.s32 %s212, 1
      %p216 = scmp.eq.s32.totalorder %s37, 1
      %p217 = scmp.ne.s32.totalorder %s212, %s214
      %p218 = scmp.eq.s32.totalorder %s37, 0
      %p219 = por %p217, %p218
      %p220 = scmp.ne.s32.totalorder %s212, %s214
      %p221 = scmp.eq.s32.totalorder %s42, 1
      %p222 = por %p220, %p221
      %p223 = scmp.ne.s32.totalorder %s214, %s215
      %p224 = scmp.eq.s32.totalorder %s42, 0
      %p225 = por %p223, %p224
      %p226 = scmp.ne.s32.totalorder %s214, %s215
      %p227 = scmp.eq.s32.totalorder %s43, 1
      %p228 = por %p226, %p227
      %p230 = scmp.ne.s32.totalorder %s215, %s229
      %p231 = scmp.eq.s32.totalorder %s43, 0
      %p232 = por %p230, %p231
      %s234 = sadd.s32 %s233, 1
      %p237 = scmp.eq.s32.totalorder %s37, 1
      %p238 = scmp.ne.s32.totalorder %s233, %s235
      %p239 = scmp.eq.s32.totalorder %s37, 0
      %p240 = por %p238, %p239
      %p241 = scmp.ne.s32.totalorder %s233, %s235
      %p242 = scmp.eq.s32.totalorder %s42, 1
      %p243 = por %p241, %p242
      %p244 = scmp.ne.s32.totalorder %s235, %s236
      %p245 = scmp.eq.s32.totalorder %s42, 0
      %p246 = por %p244, %p245
      %p247 = scmp.ne.s32.totalorder %s235, %s236
      %p248 = scmp.eq.s32.totalorder %s43, 1
      %p249 = por %p247, %p248
      %p251 = scmp.ne.s32.totalorder %s236, %s250
      %p252 = scmp.eq.s32.totalorder %s43, 0
      %p253 = por %p251, %p252
      %s255 = sadd.s32 %s254, 1
      %p258 = scmp.eq.s32.totalorder %s37, 1
      %p259 = scmp.ne.s32.totalorder %s254, %s256
      %p260 = scmp.eq.s32.totalorder %s37, 0
      %p261 = por %p259, %p260
      %p262 = scmp.ne.s32.totalorder %s254, %s256
      %p263 = scmp.eq.s32.totalorder %s42, 1
      %p264 = por %p262, %p263
      %p265 = scmp.ne.s32.totalorder %s256, %s257
      %p266 = scmp.eq.s32.totalorder %s42, 0
      %p267 = por %p265, %p266
      %p268 = scmp.ne.s32.totalorder %s256, %s257
      %p269 = scmp.eq.s32.totalorder %s43, 1
      %p270 = por %p268, %p269
      %p272 = scmp.ne.s32.totalorder %s257, %s271
      %p273 = scmp.eq.s32.totalorder %s43, 0
      %p274 = por %p272, %p273
      %s276 = sadd.s32 %s275, 1
      %p279 = scmp.eq.s32.totalorder %s37, 1
      %p280 = scmp.ne.s32.totalorder %s275, %s277
      %p281 = scmp.eq.s32.totalorder %s37, 0
      %p282 = por %p280, %p281
      %p283 = scmp.ne.s32.totalorder %s275, %s277
      %p284 = scmp.eq.s32.totalorder %s42, 1
      %p285 = por %p283, %p284
      %p286 = scmp.ne.s32.totalorder %s277, %s278
      %p287 = scmp.eq.s32.totalorder %s42, 0
      %p288 = por %p286, %p287
      %p289 = scmp.ne.s32.totalorder %s277, %s278
      %p290 = scmp.eq.s32.totalorder %s43, 1
      %p291 = por %p289, %p290
      %p293 = scmp.ne.s32.totalorder %s278, %s292
      %p294 = scmp.eq.s32.totalorder %s43, 0
      %p295 = por %p293, %p294
      %s297 = sadd.s32 %s296, 1
      %p300 = scmp.eq.s32.totalorder %s37, 1
      %p301 = scmp.ne.s32.totalorder %s296, %s298
      %p302 = scmp.eq.s32.totalorder %s37, 0
      %p303 = por %p301, %p302
      %p304 = scmp.ne.s32.totalorder %s296, %s298
      %p305 = scmp.eq.s32.totalorder %s42, 1
      %p306 = por %p304, %p305
      %p307 = scmp.ne.s32.totalorder %s298, %s299
      %p308 = scmp.eq.s32.totalorder %s42, 0
      %p309 = por %p307, %p308
      %p310 = scmp.ne.s32.totalorder %s298, %s299
      %p311 = scmp.eq.s32.totalorder %s43, 1
      %p312 = por %p310, %p311
      %p314 = scmp.ne.s32.totalorder %s299, %s313
      %p315 = scmp.eq.s32.totalorder %s43, 0
      %p316 = por %p314, %p315
      %s318 = sadd.s32 %s317, 1
      %p321 = scmp.eq.s32.totalorder %s37, 1
      %p322 = scmp.ne.s32.totalorder %s317, %s319
      %p323 = scmp.eq.s32.totalorder %s37, 0
      %p324 = por %p322, %p323
      %p325 = scmp.ne.s32.totalorder %s317, %s319
      %p326 = scmp.eq.s32.totalorder %s42, 1
      %p327 = por %p325, %p326
      %p328 = scmp.ne.s32.totalorder %s319, %s320
      %p329 = scmp.eq.s32.totalorder %s42, 0
      %p330 = por %p328, %p329
      %p331 = scmp.ne.s32.totalorder %s319, %s320
      %p332 = scmp.eq.s32.totalorder %s43, 1
      %p333 = por %p331, %p332
      %p335 = scmp.ne.s32.totalorder %s320, %s334
      %p336 = scmp.eq.s32.totalorder %s43, 0
      %p337 = por %p335, %p336
      %s339 = sadd.s32 %s338, 1
      %p342 = scmp.eq.s32.totalorder %s37, 1
      %p343 = scmp.ne.s32.totalorder %s338, %s340
      %p344 = scmp.eq.s32.totalorder %s37, 0
      %p345 = por %p343, %p344
      %p346 = scmp.ne.s32.totalorder %s338, %s340
      %p347 = scmp.eq.s32.totalorder %s42, 1
      %p348 = por %p346, %p347
      %p349 = scmp.ne.s32.totalorder %s340, %s341
      %p350 = scmp.eq.s32.totalorder %s42, 0
      %p351 = por %p349, %p350
      %p352 = scmp.ne.s32.totalorder %s340, %s341
      %p353 = scmp.eq.s32.totalorder %s43, 1
      %p354 = por %p352, %p353
      %p356 = scmp.ne.s32.totalorder %s341, %s355
      %p357 = scmp.eq.s32.totalorder %s43, 0
      %p358 = por %p356, %p357
      %s360 = sadd.s32 %s359, 1
      %p363 = scmp.eq.s32.totalorder %s37, 1
      %p364 = scmp.ne.s32.totalorder %s359, %s361
      %p365 = scmp.eq.s32.totalorder %s37, 0
      %p366 = por %p364, %p365
      %p367 = scmp.ne.s32.totalorder %s359, %s361
      %p368 = scmp.eq.s32.totalorder %s42, 1
      %p369 = por %p367, %p368
      %p370 = scmp.ne.s32.totalorder %s361, %s362
      %p371 = scmp.eq.s32.totalorder %s42, 0
      %p372 = por %p370, %p371
      %p373 = scmp.ne.s32.totalorder %s361, %s362
      %p374 = scmp.eq.s32.totalorder %s43, 1
      %p375 = por %p373, %p374
      %p377 = scmp.ne.s32.totalorder %s362, %s376
      %p378 = scmp.eq.s32.totalorder %s43, 0
      %p379 = por %p377, %p378
      %s381 = sadd.s32 %s380, 1
      %p384 = scmp.eq.s32.totalorder %s37, 1
      %p385 = scmp.ne.s32.totalorder %s380, %s382
      %p386 = scmp.eq.s32.totalorder %s37, 0
      %p387 = por %p385, %p386
      %p388 = scmp.ne.s32.totalorder %s380, %s382
      %p389 = scmp.eq.s32.totalorder %s42, 1
      %p390 = por %p388, %p389
      %p391 = scmp.ne.s32.totalorder %s382, %s383
      %p392 = scmp.eq.s32.totalorder %s42, 0
      %p393 = por %p391, %p392
      %p394 = scmp.ne.s32.totalorder %s382, %s383
      %p395 = scmp.eq.s32.totalorder %s43, 1
      %p396 = por %p394, %p395
      %p398 = scmp.ne.s32.totalorder %s383, %s397
      %p399 = scmp.eq.s32.totalorder %s43, 0
      %p400 = por %p398, %p399
      %s402 = sadd.s32 %s401, 1
      %p405 = scmp.eq.s32.totalorder %s37, 1
      %p406 = scmp.ne.s32.totalorder %s401, %s403
      %p407 = scmp.eq.s32.totalorder %s37, 0
      %p408 = por %p406, %p407
      %p409 = scmp.ne.s32.totalorder %s401, %s403
      %p410 = scmp.eq.s32.totalorder %s42, 1
      %p411 = por %p409, %p410
      %p412 = scmp.ne.s32.totalorder %s403, %s404
      %p413 = scmp.eq.s32.totalorder %s42, 0
      %p414 = por %p412, %p413
      %p415 = scmp.ne.s32.totalorder %s403, %s404
      %p416 = scmp.eq.s32.totalorder %s43, 1
      %p417 = por %p415, %p416
      %p419 = scmp.ne.s32.totalorder %s404, %s418
      %p420 = scmp.eq.s32.totalorder %s43, 0
      %p421 = por %p419, %p420
      %s423 = sadd.s32 %s422, 1
      %p426 = scmp.eq.s32.totalorder %s37, 1
      %p427 = scmp.ne.s32.totalorder %s422, %s424
      %p428 = scmp.eq.s32.totalorder %s37, 0
      %p429 = por %p427, %p428
      %p430 = scmp.ne.s32.totalorder %s422, %s424
      %p431 = scmp.eq.s32.totalorder %s42, 1
      %p432 = por %p430, %p431
      %p433 = scmp.ne.s32.totalorder %s424, %s425
      %p434 = scmp.eq.s32.totalorder %s42, 0
      %p435 = por %p433, %p434
      %p436 = scmp.ne.s32.totalorder %s424, %s425
      %p437 = scmp.eq.s32.totalorder %s43, 1
      %p438 = por %p436, %p437
      %p440 = scmp.ne.s32.totalorder %s425, %s439
      %p441 = scmp.eq.s32.totalorder %s43, 0
      %p442 = por %p440, %p441
      %s444 = sadd.s32 %s443, 1
      %p447 = scmp.eq.s32.totalorder %s37, 1
      %p448 = scmp.ne.s32.totalorder %s443, %s445
      %p449 = scmp.eq.s32.totalorder %s37, 0
      %p450 = por %p448, %p449
      %p451 = scmp.ne.s32.totalorder %s443, %s445
      %p452 = scmp.eq.s32.totalorder %s42, 1
      %p453 = por %p451, %p452
      %p454 = scmp.ne.s32.totalorder %s445, %s446
      %p455 = scmp.eq.s32.totalorder %s42, 0
      %p456 = por %p454, %p455
      %p457 = scmp.ne.s32.totalorder %s445, %s446
      %p458 = scmp.eq.s32.totalorder %s43, 1
      %p459 = por %p457, %p458
      %p461 = scmp.ne.s32.totalorder %s446, %s460
      %p462 = scmp.eq.s32.totalorder %s43, 0
      %p463 = por %p461, %p462
      %s465 = sadd.s32 %s464, 1
      %p468 = scmp.eq.s32.totalorder %s37, 1
      %p469 = scmp.ne.s32.totalorder %s464, %s466
      %p470 = scmp.eq.s32.totalorder %s37, 0
      %p471 = por %p469, %p470
      %p472 = scmp.ne.s32.totalorder %s464, %s466
      %p473 = scmp.eq.s32.totalorder %s42, 1
      %p474 = por %p472, %p473
      %p475 = scmp.ne.s32.totalorder %s466, %s467
      %p476 = scmp.eq.s32.totalorder %s42, 0
      %p477 = por %p475, %p476
      %p478 = scmp.ne.s32.totalorder %s466, %s467
      %p479 = scmp.eq.s32.totalorder %s43, 1
      %p480 = por %p478, %p479
      %p482 = scmp.ne.s32.totalorder %s467, %s481
      %p483 = scmp.eq.s32.totalorder %s43, 0
      %p484 = por %p482, %p483
      %s485 = ssub.s32 %s37, %s44
      %p486 = scmp.eq.s32.totalorder %s485, 0
      %s488 = sadd.s32 %s487, 1
      %s489 = scalar_select %p486, %s487, %s488
      %p492 = pneg %p486
      %p493 = scmp.eq.s32.totalorder %s37, 1
      %p494 = por %p492, %p493
      %p495 = scmp.ne.s32.totalorder %s487, %s490
      %p496 = scmp.eq.s32.totalorder %s37, 0
      %p497 = por %p495, %p496
      %p498 = scmp.ne.s32.totalorder %s487, %s490
      %p499 = scmp.eq.s32.totalorder %s42, 1
      %p500 = por %p498, %p499
      %p501 = scmp.ne.s32.totalorder %s490, %s491
      %p502 = scmp.eq.s32.totalorder %s42, 0
      %p503 = por %p501, %p502
      %p504 = scmp.ne.s32.totalorder %s490, %s491
      %p505 = scmp.eq.s32.totalorder %s43, 1
      %p506 = por %p504, %p505
      %p508 = scmp.ne.s32.totalorder %s491, %s507
      %p509 = scmp.eq.s32.totalorder %s43, 0
      %p510 = por %p508, %p509
      %p511 = scmp.le.s32.totalorder 1, %s37
      %p512 = scmp.lt.s32.totalorder %s37, 3
      %p513 = pnand %p511, %p512
      %p514 = pneg %p513
      // Predicated region
      $region9: #{tpu_custom_call.1} parent=5 // pred_check
        _
      $region10: #{tpu_custom_call.1} parent=5 // pred_check_branch
        %516 = sbr.rel (%p513) target = $region12
      $region11: #{tpu_custom_call.1} parent=5 // pred_region
        %s517 = ssub.s32 %s37, 1
        // Predicated region
        $region13: #{tpu_custom_call.1} parent=11 // pred_check
          %p518 = pneg %p162
        $region14: #{tpu_custom_call.1} parent=11 // pred_check_branch
          %520 = sbr.rel (%p518) target = $region16
        $region15: #{tpu_custom_call.1} parent=11 // pred_region
          %522 = vsyncadd [#allocation6], 0
          %s523 = sshll.u32 %s4, 4
          %s524 = int_to_ptr.hbm [resolvable:$true] %s523
          %s525 = sshll.u32 [#allocation5], 4
          %s526 = int_to_ptr.vmem [resolvable:$true] %s525
          %531 = dma.hbm_to_vmem [thread:$0]  %s524, 512, %s526, [#allocation6], 128, 128, 8
        $region16: #{tpu_custom_call.1} parent=11 // pred_fallthru
          _
        // Predicated region
        $region17: #{tpu_custom_call.1} parent=11 // pred_check
          %p532 = pneg %p183
        $region18: #{tpu_custom_call.1} parent=11 // pred_check_branch
          %534 = sbr.rel (%p532) target = $region20
        $region19: #{tpu_custom_call.1} parent=11 // pred_region
          _
        $region20: #{tpu_custom_call.1} parent=11 // pred_fallthru
          _
        // Predicated region
        $region21: #{tpu_custom_call.1} parent=11 // pred_check
          %p535 = pneg %p204
        $region22: #{tpu_custom_call.1} parent=11 // pred_check_branch
          %537 = sbr.rel (%p535) target = $region24
        $region23: #{tpu_custom_call.1} parent=11 // pred_region
          %539 = vsyncadd [#allocation6], 0
          %s540 = sshll.u32 %s6, 4
          %s541 = int_to_ptr.hbm [resolvable:$true] %s540
          %s542 = sshll.u32 [#allocation7], 4
          %s543 = int_to_ptr.vmem [resolvable:$true] %s542
          %548 = dma.hbm_to_vmem [thread:$0]  %s541, 512, %s543, [#allocation6], 128, 128, 8
        $region24: #{tpu_custom_call.1} parent=11 // pred_fallthru
          _
        // Predicated region
        $region25: #{tpu_custom_call.1} parent=11 // pred_check
          %p549 = pneg %p225
        $region26: #{tpu_custom_call.1} parent=11 // pred_check_branch
          %551 = sbr.rel (%p549) target = $region28
        $region27: #{tpu_custom_call.1} parent=11 // pred_region
          %553 = vsyncadd [#allocation9], 0
          %s555 = sshll.u32 %s7, 4
          %s556 = int_to_ptr.hbm [resolvable:$true] %s555
          %s557 = sshll.u32 [#allocation8], 4
          %s558 = int_to_ptr.vmem [resolvable:$true] %s557
          %560 = dma.hbm_to_vmem [thread:$0]  %s556, 16, %s558, [#allocation9]
        $region28: #{tpu_custom_call.1} parent=11 // pred_fallthru
          _
        // Predicated region
        $region29: #{tpu_custom_call.1} parent=11 // pred_check
          %p561 = pneg %p246
        $region30: #{tpu_custom_call.1} parent=11 // pred_check_branch
          %563 = sbr.rel (%p561) target = $region32
        $region31: #{tpu_custom_call.1} parent=11 // pred_region
          %565 = vsyncadd [#allocation9], 0
          %s566 = sshll.u32 %s8, 4
          %s567 = int_to_ptr.hbm [resolvable:$true] %s566
          %s568 = sshll.u32 [#allocation10], 4
          %s569 = int_to_ptr.vmem [resolvable:$true] %s568
          %574 = dma.hbm_to_vmem [thread:$0]  %s567, 512, %s569, [#allocation9], 128, 128, 8
        $region32: #{tpu_custom_call.1} parent=11 // pred_fallthru
          _
        // Predicated region
        $region33: #{tpu_custom_call.1} parent=11 // pred_check
          %p575 = pneg %p267
        $region34: #{tpu_custom_call.1} parent=11 // pred_check_branch
          %577 = sbr.rel (%p575) target = $region36
        $region35: #{tpu_custom_call.1} parent=11 // pred_region
          %579 = vsyncadd [#allocation12], 0
          %s581 = sshll.u32 %s9, 4
          %s582 = int_to_ptr.hbm [resolvable:$true] %s581
          %s583 = sshll.u32 [#allocation11], 4
          %s584 = int_to_ptr.vmem [resolvable:$true] %s583
          %586 = dma.hbm_to_vmem [thread:$0]  %s582, 16, %s584, [#allocation12]
        $region36: #{tpu_custom_call.1} parent=11 // pred_fallthru
          _
        // Predicated region
        $region37: #{tpu_custom_call.1} parent=11 // pred_check
          %p587 = pneg %p288
        $region38: #{tpu_custom_call.1} parent=11 // pred_check_branch
          %589 = sbr.rel (%p587) target = $region40
        $region39: #{tpu_custom_call.1} parent=11 // pred_region
          %591 = vsyncadd [#allocation12], 0
          %s592 = sshll.u32 %s10, 4
          %s593 = int_to_ptr.hbm [resolvable:$true] %s592
          %s594 = sshll.u32 [#allocation13], 4
          %s595 = int_to_ptr.vmem [resolvable:$true] %s594
          %600 = dma.hbm_to_vmem [thread:$0]  %s593, 512, %s595, [#allocation12], 128, 128, 8
        $region40: #{tpu_custom_call.1} parent=11 // pred_fallthru
          _
        // Predicated region
        $region41: #{tpu_custom_call.1} parent=11 // pred_check
          %p601 = pneg %p309
        $region42: #{tpu_custom_call.1} parent=11 // pred_check_branch
          %603 = sbr.rel (%p601) target = $region44
        $region43: #{tpu_custom_call.1} parent=11 // pred_region
          %605 = vsyncadd [#allocation15], 0
          %s607 = sshll.u32 %s11, 4
          %s608 = int_to_ptr.hbm [resolvable:$true] %s607
          %s609 = sshll.u32 [#allocation14], 4
          %s610 = int_to_ptr.vmem [resolvable:$true] %s609
          %612 = dma.hbm_to_vmem [thread:$0]  %s608, 16, %s610, [#allocation15]
        $region44: #{tpu_custom_call.1} parent=11 // pred_fallthru
          _
        // Predicated region
        $region45: #{tpu_custom_call.1} parent=11 // pred_check
          %p613 = pneg %p330
        $region46: #{tpu_custom_call.1} parent=11 // pred_check_branch
          %615 = sbr.rel (%p613) target = $region48
        $region47: #{tpu_custom_call.1} parent=11 // pred_region
          %617 = vsyncadd [#allocation15], 0
          %s618 = sshll.u32 %s12, 4
          %s619 = int_to_ptr.hbm [resolvable:$true] %s618
          %s620 = sshll.u32 [#allocation16], 4
          %s621 = int_to_ptr.vmem [resolvable:$true] %s620
          %626 = dma.hbm_to_vmem [thread:$0]  %s619, 512, %s621, [#allocation15], 128, 128, 8
        $region48: #{tpu_custom_call.1} parent=11 // pred_fallthru
          _
        // Predicated region
        $region49: #{tpu_custom_call.1} parent=11 // pred_check
          %p627 = pneg %p351
        $region50: #{tpu_custom_call.1} parent=11 // pred_check_branch
          %629 = sbr.rel (%p627) target = $region52
        $region51: #{tpu_custom_call.1} parent=11 // pred_region
          _
        $region52: #{tpu_custom_call.1} parent=11 // pred_fallthru
          _
        // Predicated region
        $region53: #{tpu_custom_call.1} parent=11 // pred_check
          %p630 = pneg %p372
        $region54: #{tpu_custom_call.1} parent=11 // pred_check_branch
          %632 = sbr.rel (%p630) target = $region56
        $region55: #{tpu_custom_call.1} parent=11 // pred_region
          %634 = vsyncadd [#allocation18], 0
          %s635 = sshll.u32 %s14, 4
          %s636 = int_to_ptr.hbm [resolvable:$true] %s635
          %s637 = sshll.u32 [#allocation17], 4
          %s638 = int_to_ptr.vmem [resolvable:$true] %s637
          %643 = dma.hbm_to_vmem [thread:$0]  %s636, 512, %s638, [#allocation18], 128, 128, 8
        $region56: #{tpu_custom_call.1} parent=11 // pred_fallthru
          _
        // Predicated region
        $region57: #{tpu_custom_call.1} parent=11 // pred_check
          %p644 = pneg %p393
        $region58: #{tpu_custom_call.1} parent=11 // pred_check_branch
          %646 = sbr.rel (%p644) target = $region60
        $region59: #{tpu_custom_call.1} parent=11 // pred_region
          _
        $region60: #{tpu_custom_call.1} parent=11 // pred_fallthru
          _
        // Predicated region
        $region61: #{tpu_custom_call.1} parent=11 // pred_check
          %p647 = pneg %p414
        $region62: #{tpu_custom_call.1} parent=11 // pred_check_branch
          %649 = sbr.rel (%p647) target = $region64
        $region63: #{tpu_custom_call.1} parent=11 // pred_region
          _
        $region64: #{tpu_custom_call.1} parent=11 // pred_fallthru
          _
        // Predicated region
        $region65: #{tpu_custom_call.1} parent=11 // pred_check
          %p650 = pneg %p435
        $region66: #{tpu_custom_call.1} parent=11 // pred_check_branch
          %652 = sbr.rel (%p650) target = $region68
        $region67: #{tpu_custom_call.1} parent=11 // pred_region
          _
        $region68: #{tpu_custom_call.1} parent=11 // pred_fallthru
          _
        // Predicated region
        $region69: #{tpu_custom_call.1} parent=11 // pred_check
          %p653 = pneg %p456
        $region70: #{tpu_custom_call.1} parent=11 // pred_check_branch
          %655 = sbr.rel (%p653) target = $region72
        $region71: #{tpu_custom_call.1} parent=11 // pred_region
          _
        $region72: #{tpu_custom_call.1} parent=11 // pred_fallthru
          _
        // Predicated region
        $region73: #{tpu_custom_call.1} parent=11 // pred_check
          %p656 = pneg %p477
        $region74: #{tpu_custom_call.1} parent=11 // pred_check_branch
          %658 = sbr.rel (%p656) target = $region76
        $region75: #{tpu_custom_call.1} parent=11 // pred_region
          _
        $region76: #{tpu_custom_call.1} parent=11 // pred_fallthru
          _
      $region12: #{tpu_custom_call.1} parent=5 // pred_fallthru
        _
      %p659 = scmp.lt.s32.totalorder %s37, 2
      // Predicated region
      $region77: #{tpu_custom_call.1} parent=5 // pred_check
        %p660 = pneg %p659
      $region78: #{tpu_custom_call.1} parent=5 // pred_check_branch
        %662 = sbr.rel (%p660) target = $region80
      $region79: #{tpu_custom_call.1} parent=5 // pred_region
        // Predicated region
        $region81: #{tpu_custom_call.1} parent=79 // pred_check
          %p663 = pneg %p57
        $region82: #{tpu_custom_call.1} parent=79 // pred_check_branch
          %665 = sbr.rel (%p663) target = $region84
        $region83: #{tpu_custom_call.1} parent=79 // pred_region
          %s666 = smul.u32 2, %s37
          %p667 = scmp.lt.s32.totalorder %s666, 3
          %s668 = scalar_select %p667, %s666, 3
          %s669 = smul.addr %s668, 8
          %s670 = scalar_lea.vmem %s0, %s669
          %s671 = smul.u32 2, %s37
        $region84: #{tpu_custom_call.1} parent=79 // pred_fallthru
          _
        // Predicated region
        $region85: #{tpu_custom_call.1} parent=79 // pred_check
          %p672 = pneg %p83
        $region86: #{tpu_custom_call.1} parent=79 // pred_check_branch
          %674 = sbr.rel (%p672) target = $region88
        $region87: #{tpu_custom_call.1} parent=79 // pred_region
          %s675 = smul.u32 2, %s37
          %p676 = scmp.lt.s32.totalorder %s675, 3
          %s677 = scalar_select %p676, %s675, 3
          %s678 = smul.addr %s677, 8
          %s679 = scalar_lea.vmem %s1, %s678
          %s680 = smul.u32 2, %s37
        $region88: #{tpu_custom_call.1} parent=79 // pred_fallthru
          _
        // Predicated region
        $region89: #{tpu_custom_call.1} parent=79 // pred_check
          %p681 = pneg %p109
        $region90: #{tpu_custom_call.1} parent=79 // pred_check_branch
          %683 = sbr.rel (%p681) target = $region92
        $region91: #{tpu_custom_call.1} parent=79 // pred_region
          %s684 = smul.u32 2, %s37
          %p685 = scmp.lt.s32.totalorder %s684, 3
          %s686 = scalar_select %p685, %s684, 3
          %s687 = smul.addr %s686, 8
          %s688 = scalar_lea.vmem %s2, %s687
          %s689 = smul.u32 2, %s37
        $region92: #{tpu_custom_call.1} parent=79 // pred_fallthru
          _
        // Predicated region
        $region93: #{tpu_custom_call.1} parent=79 // pred_check
          %p690 = pneg %p135
        $region94: #{tpu_custom_call.1} parent=79 // pred_check_branch
          %692 = sbr.rel (%p690) target = $region96
        $region95: #{tpu_custom_call.1} parent=79 // pred_region
          %s693 = sand.u32 %s125, 1
          %s694 = scalar_lea.sflag [#allocation3], %s693
          %s695 = sand.u32 %s125, 1
          %s696 = smul.addr %s695, 16
          %s697 = scalar_lea.vmem [#allocation2], %s696
          %s698 = smul.u32 2, %s37
          %700 = vsyncadd %s694, 0
          %s701 = smul.addr %s698, 8
          %s702 = scalar_lea.hbm %s3, %s701
          %s703 = sshll.u32 %s702, 4
          %s704 = int_to_ptr.hbm [resolvable:$true] %s703
          %s705 = sshll.u32 %s697, 4
          %s706 = int_to_ptr.vmem [resolvable:$true] %s705
          %711 = dma.hbm_to_vmem [thread:$0]  %s704, 256, %s706, %s694, 128, 128, 8
        $region96: #{tpu_custom_call.1} parent=79 // pred_fallthru
          _
      $region80: #{tpu_custom_call.1} parent=5 // pred_fallthru
        _
      %p712 = scmp.le.s32.totalorder 1, %s37
      %p713 = scmp.lt.s32.totalorder %s37, 3
      %p714 = pnand %p712, %p713
      %p715 = pneg %p714
      // Predicated region
      $region97: #{tpu_custom_call.1} parent=5 // pred_check
        _
      $region98: #{tpu_custom_call.1} parent=5 // pred_check_branch
        %717 = sbr.rel (%p714) target = $region100
      $region99: #{tpu_custom_call.1} parent=5 // pred_region
        %s718 = ssub.s32 %s37, 1
        %s719 = sand.u32 %s128, 1
        %s720 = scalar_lea.sflag [#allocation3], %s719
        %s721 = sand.u32 %s128, 1
        %s722 = smul.addr %s721, 16
        %s723 = scalar_lea.vmem [#allocation2], %s722
        // Predicated region
        $region101: #{tpu_custom_call.1} parent=99 // pred_check
          %p724 = pneg %p141
        $region102: #{tpu_custom_call.1} parent=99 // pred_check_branch
          %726 = sbr.rel (%p724) target = $region104
        $region103: #{tpu_custom_call.1} parent=99 // pred_region
          %728 = dma.done %s720, 256
        $region104: #{tpu_custom_call.1} parent=99 // pred_fallthru
          _
        // Predicated region
        $region105: #{tpu_custom_call.1} parent=99 // pred_check
          %p729 = pneg %p162
        $region106: #{tpu_custom_call.1} parent=99 // pred_check_branch
          %731 = sbr.rel (%p729) target = $region108
        $region107: #{tpu_custom_call.1} parent=99 // pred_region
          %733 = dma.done [#allocation6], 512
        $region108: #{tpu_custom_call.1} parent=99 // pred_fallthru
          _
        // Predicated region
        $region109: #{tpu_custom_call.1} parent=99 // pred_check
          %p734 = pneg %p204
        $region110: #{tpu_custom_call.1} parent=99 // pred_check_branch
          %736 = sbr.rel (%p734) target = $region112
        $region111: #{tpu_custom_call.1} parent=99 // pred_region
          %738 = dma.done [#allocation6], 512
        $region112: #{tpu_custom_call.1} parent=99 // pred_fallthru
          _
        // Predicated region
        $region113: #{tpu_custom_call.1} parent=99 // pred_check
          %p739 = pneg %p225
        $region114: #{tpu_custom_call.1} parent=99 // pred_check_branch
          %741 = sbr.rel (%p739) target = $region116
        $region115: #{tpu_custom_call.1} parent=99 // pred_region
          %743 = dma.done [#allocation9], 16
        $region116: #{tpu_custom_call.1} parent=99 // pred_fallthru
          _
        // Predicated region
        $region117: #{tpu_custom_call.1} parent=99 // pred_check
          %p744 = pneg %p246
        $region118: #{tpu_custom_call.1} parent=99 // pred_check_branch
          %746 = sbr.rel (%p744) target = $region120
        $region119: #{tpu_custom_call.1} parent=99 // pred_region
          %748 = dma.done [#allocation9], 512
        $region120: #{tpu_custom_call.1} parent=99 // pred_fallthru
          _
        // Predicated region
        $region121: #{tpu_custom_call.1} parent=99 // pred_check
          %p749 = pneg %p267
        $region122: #{tpu_custom_call.1} parent=99 // pred_check_branch
          %751 = sbr.rel (%p749) target = $region124
        $region123: #{tpu_custom_call.1} parent=99 // pred_region
          %753 = dma.done [#allocation12], 16
        $region124: #{tpu_custom_call.1} parent=99 // pred_fallthru
          _
        // Predicated region
        $region125: #{tpu_custom_call.1} parent=99 // pred_check
          %p754 = pneg %p288
        $region126: #{tpu_custom_call.1} parent=99 // pred_check_branch
          %756 = sbr.rel (%p754) target = $region128
        $region127: #{tpu_custom_call.1} parent=99 // pred_region
          %758 = dma.done [#allocation12], 512
        $region128: #{tpu_custom_call.1} parent=99 // pred_fallthru
          _
        // Predicated region
        $region129: #{tpu_custom_call.1} parent=99 // pred_check
          %p759 = pneg %p309
        $region130: #{tpu_custom_call.1} parent=99 // pred_check_branch
          %761 = sbr.rel (%p759) target = $region132
        $region131: #{tpu_custom_call.1} parent=99 // pred_region
          %763 = dma.done [#allocation15], 16
        $region132: #{tpu_custom_call.1} parent=99 // pred_fallthru
          _
        // Predicated region
        $region133: #{tpu_custom_call.1} parent=99 // pred_check
          %p764 = pneg %p330
        $region134: #{tpu_custom_call.1} parent=99 // pred_check_branch
          %766 = sbr.rel (%p764) target = $region136
        $region135: #{tpu_custom_call.1} parent=99 // pred_region
          %768 = dma.done [#allocation15], 512
        $region136: #{tpu_custom_call.1} parent=99 // pred_fallthru
          _
        // Predicated region
        $region137: #{tpu_custom_call.1} parent=99 // pred_check
          %p769 = pneg %p372
        $region138: #{tpu_custom_call.1} parent=99 // pred_check_branch
          %771 = sbr.rel (%p769) target = $region140
        $region139: #{tpu_custom_call.1} parent=99 // pred_region
          %773 = dma.done [#allocation18], 512
        $region140: #{tpu_custom_call.1} parent=99 // pred_fallthru
          _
        %s774 = smul.u32 2, %s42
        %p775 = scmp.lt.s32.totalorder %s774, 3
        %s776 = scalar_select %p775, %s774, 3
        %s777 = smul.addr %s776, 8
        %s778 = scalar_lea.vmem %s0, %s777
        %p779 = pneg %p63
        %p780 = pneg %p60
        %s781 = smul.u32 2, %s42
        %p782 = scmp.lt.s32.totalorder %s781, 3
        %s783 = scalar_select %p782, %s781, 3
        %s784 = smul.addr %s783, 8
        %s785 = scalar_lea.vmem %s1, %s784
        %p786 = pneg %p89
        %p787 = pneg %p86
        %s788 = smul.u32 2, %s42
        %p789 = scmp.lt.s32.totalorder %s788, 3
        %s790 = scalar_select %p789, %s788, 3
        %s791 = smul.addr %s790, 8
        %s792 = scalar_lea.vmem %s2, %s791
        %p793 = pneg %p115
        %p794 = pneg %p112
        %s795 = sand.u32 %s128, 1
        %s796 = scalar_lea.sflag [#allocation3], %s795
        %s797 = sand.u32 %s128, 1
        %s798 = smul.addr %s797, 16
        %s799 = scalar_lea.vmem [#allocation2], %s798
        %p800 = pneg %p141
        %p801 = pneg %p138
        %p802 = pneg %p162
        %p803 = pneg %p159
        %p804 = pneg %p183
        %p805 = pneg %p180
        %p806 = pneg %p204
        %p807 = pneg %p201
        %p808 = pneg %p225
        %p809 = pneg %p222
        %p810 = pneg %p246
        %p811 = pneg %p243
        %p812 = pneg %p267
        %p813 = pneg %p264
        %p814 = pneg %p288
        %p815 = pneg %p285
        %p816 = pneg %p309
        %p817 = pneg %p306
        %p818 = pneg %p330
        %p819 = pneg %p327
        %p820 = pneg %p351
        %p821 = pneg %p348
        %p822 = pneg %p372
        %p823 = pneg %p369
        %p824 = pneg %p393
        %p825 = pneg %p390
        %p826 = pneg %p414
        %p827 = pneg %p411
        %p828 = pneg %p435
        %p829 = pneg %p432
        %p830 = pneg %p456
        %p831 = pneg %p453
        %p832 = pneg %p477
        %p833 = pneg %p474
        %p834 = pneg %p503
        %p835 = pneg %p500
        %s836 = sand.u32 %s490, 1
        %s837 = scalar_lea.sflag [#allocation4], %s836
        %s838 = sand.u32 %s490, 1
        %s839 = smul.addr %s838, 16
        %s840 = scalar_lea.vmem [#allocation19], %s839
        %s841 = smul.u32 2, %s42
        %p842 = scmp.lt.s32.totalorder %s841, 3
        %s843 = scalar_select %p842, %s841, 3
        %s844 = smul.addr %s843, 8
        %s845 = scalar_lea.vmem %s0, %s844
        %s846 = smul.u32 2, %s42
        %s847 = smul.u32 2, %s42
        %p848 = scmp.lt.s32.totalorder %s847, 3
        %s849 = scalar_select %p848, %s847, 3
        %s850 = smul.addr %s849, 8
        %s851 = scalar_lea.vmem %s1, %s850
        %s852 = smul.u32 2, %s42
        %s853 = smul.u32 2, %s42
        %p854 = scmp.lt.s32.totalorder %s853, 3
        %s855 = scalar_select %p854, %s853, 3
        %s856 = smul.addr %s855, 8
        %s857 = scalar_lea.vmem %s2, %s856
        %s858 = smul.u32 2, %s42
        %s859 = smul.u32 2, %s42
        %s860 = smul.u32 2, %s42
        %v861 = vld [vmem:[%s845] sm:$0xff]
        %v862 = vld [vmem:[%s845 + $0x8] sm:$0xff]
        %v863 = vld [vmem:[%s851] sm:$0xff]
        %v864 = vld [vmem:[%s851 + $0x8] sm:$0xff]
        %v865 = vld [vmem:[%s857] sm:$0xff]
        %v866 = vld [vmem:[%s857 + $0x8] sm:$0xff]
        %vm867 = vcmp.eq.f32.partialorder %v865, 0.0
        %vm868 = vcmp.eq.f32.partialorder %v866, 0.0
        %v869 = vsel %vm867, -1e+09, 0.0
        %v870 = vsel %vm868, -1e+09, 0.0
        %v871 = vld [vmem:[%s723] sm:$0xff]
        %v872 = vld [vmem:[%s723 + $0x8] sm:$0xff]
        %vm873 = vcmp.eq.f32.partialorder %v871, 0.0
        %vm874 = vcmp.eq.f32.partialorder %v872, 0.0
        %v875 = vsel %vm873, -1e+09, 0.0
        %v876 = vsel %vm874, -1e+09, 0.0
        %v877 = vld [vmem:[%s18] sm:$0x7]
        %v878 = vld [vmem:[%s19] sm:$0x7]
        %v879 = vld [vmem:[#allocation5] sm:$0xff]
        %v880 = vld [vmem:[#allocation5 + $0x8] sm:$0xff]
        %v881 = vld [vmem:[#allocation5 + $0x10] sm:$0xff]
        %v882 = vld [vmem:[#allocation5 + $0x18] sm:$0xff]
        %v883 = vld [vmem:[%s5] sm:$0x1]
        %v885 = vperm.slane %v883, 0
        %vm887 = vcmask 261120
        %v889 = vsel %vm887, %v861, 0
        %v892 = vsel %vm887, %v862, 0
        %894 = vmatpush.msra.mxu0 0.0
        %895 = vmatpush.msra.mxu0 0.0
        %896 = vmatpush.msra.mxu0 0.0
        %897 = vmatpush.msra.mxu0 0.0
        %898 = vmatpush.msra.mxu0 0.0
        %899 = vmatpush.msra.mxu0 0.0
        %900 = vmatpush.msra.mxu0 0.0
        %901 = vmatpush.msra.mxu0 0.0
        %902 = vmatpush.msra.mxu0 0.0
        %903 = vmatpush.msra.mxu0 0.0
        %904 = vmatpush.msra.mxu0 0.0
        %905 = vmatpush.msra.mxu0 0.0
        %906 = vmatpush.msra.mxu0 %v882
        %907 = vmatpush.msra.mxu0 %v881
        %908 = vmatpush.msra.mxu0 %v880
        %909 = vmatpush.msra.mxu0 %v879
        %910 = vmatmul.f32.gmra.mxu0 %v889
        %v911 = vpop.f32.mrf.mxu0
        %v912 = vadd.f32 %v885, %v911
        %913 = vmatmul.f32.gmra.mxu0 %v892
        %v914 = vpop.f32.mrf.mxu0
        %v915 = vadd.f32 %v885, %v914
        %916 = vdwg.mxu0
        %v917 = vld [vmem:[#allocation7] sm:$0xff]
        %v918 = vld [vmem:[#allocation7 + $0x8] sm:$0xff]
        %v919 = vld [vmem:[#allocation7 + $0x10] sm:$0xff]
        %v920 = vld [vmem:[#allocation7 + $0x18] sm:$0xff]
        %v921 = vld [vmem:[#allocation8] sm:$0x1]
        %923 = vrot.lane.b32.xlu0 %v912, 96
        %v924 = vpop.permute.xlu0 %923
        %vm925 = vcmask 64512
        %v926 = vsel %vm925, %v912, 0
        %v928 = vsel %vm925, %v924, 0
        %930 = vmatpush.xpose.msra.mxu0 0.0
        %931 = vmatpush.xpose.msra.mxu0 0.0
        %932 = vmatpush.xpose.msra.mxu0 0.0
        %933 = vmatpush.xpose.msra.mxu0 0.0
        %934 = vmatpush.xpose.msra.mxu0 0.0
        %935 = vmatpush.xpose.msra.mxu0 0.0
        %936 = vmatpush.xpose.msra.mxu0 0.0
        %937 = vmatpush.xpose.msra.mxu0 0.0
        %938 = vmatpush.xpose.msra.mxu0 0.0
        %939 = vmatpush.xpose.msra.mxu0 0.0
        %940 = vmatpush.xpose.msra.mxu0 0.0
        %941 = vmatpush.xpose.msra.mxu0 0.0
        %942 = vmatpush.xpose.msra.mxu0 0.0
        %943 = vmatpush.xpose.msra.mxu0 0.0
        %944 = vmatpush.xpose.msra.mxu0 0.0
        %945 = vmatpush.xpose.msra.mxu0 %v928
        %946 = vmatmul.f32.gmra.mxu0 %v926
        %v947 = vpop.f32.mrf.mxu0
        %v948 = vadd.f32 %v869, %v947
        %949 = vdwg.mxu0
        %951 = vrot.lane.b32.xlu0 %v915, 96
        %v952 = vpop.permute.xlu0 %951
        %v953 = vsel %vm925, %v915, 0
        %v955 = vsel %vm925, %v952, 0
        %957 = vmatpush.xpose.msra.mxu0 0.0
        %958 = vmatpush.xpose.msra.mxu0 0.0
        %959 = vmatpush.xpose.msra.mxu0 0.0
        %960 = vmatpush.xpose.msra.mxu0 0.0
        %961 = vmatpush.xpose.msra.mxu0 0.0
        %962 = vmatpush.xpose.msra.mxu0 0.0
        %963 = vmatpush.xpose.msra.mxu0 0.0
        %964 = vmatpush.xpose.msra.mxu0 0.0
        %965 = vmatpush.xpose.msra.mxu0 0.0
        %966 = vmatpush.xpose.msra.mxu0 0.0
        %967 = vmatpush.xpose.msra.mxu0 0.0
        %968 = vmatpush.xpose.msra.mxu0 0.0
        %969 = vmatpush.xpose.msra.mxu0 0.0
        %970 = vmatpush.xpose.msra.mxu0 0.0
        %971 = vmatpush.xpose.msra.mxu0 0.0
        %972 = vmatpush.xpose.msra.mxu0 %v955
        %973 = vmatmul.f32.gmra.mxu0 %v953
        %v974 = vpop.f32.mrf.mxu0
        %v975 = vadd.f32 %v870, %v974
        %976 = vdwg.mxu0
        %v977 = vsel %vm925, %v948, -inf
        %978 = vmax.xlane.f32.xlu0 %v977
        %v979 = vpop.xlane.xlu0 %978
        %v980 = vsel %vm925, %v975, -inf
        %981 = vmax.xlane.f32.xlu0 %v980
        %v982 = vpop.xlane.xlu0 %981
        %v983 = vsub.f32 %v948, %v979
        %v984 = vsub.f32 %v975, %v982
        %v985 = vmul.f32 %v983, 1.442695
        %v986 = vpow.pop %v985
        %v987 = vmul.f32 %v984, 1.442695
        %v988 = vpow.pop %v987
        %v989 = vsel %vm925, %v986, 0.0
        %990 = vadd.xlane.f32.xlu0 %v989
        %v991 = vpop.xlane.xlu0 %990
        %v992 = vsel %vm925, %v988, 0.0
        %993 = vadd.xlane.f32.xlu0 %v992
        %v994 = vpop.xlane.xlu0 %993
        %v995 = vrcp.pop %v991
        %v996 = vmul.f32 %v991, %v995
        %v997 = vsub.f32 1.0, %v996
        %v998 = vmul.f32 %v995, %v997
        %v999 = vadd.f32 %v995, %v998
        %vm1000 = vweird.f32 %v991
        %vm1001 = vweird.f32 %v995
        %vm1002 = vmor %vm1000, %vm1001
        %v1003 = vsel %vm1002, %v995, %v999
        %v1004 = vand.u32 2147483647, %v991
        %vm1005 = vcmp.eq.f32.partialorder %v1004, 8.507059e+37
        %v1006 = vand.u32 %v991, 2147483648
        %v1007 = vor.u32 1.1754944e-38, %v1006
        %v1008 = vsel %vm1005, %v1007, %v1003
        %v1009 = vmul.f32 %v986, %v1008
        %v1010 = vrcp.pop %v994
        %v1011 = vmul.f32 %v994, %v1010
        %v1012 = vsub.f32 1.0, %v1011
        %v1013 = vmul.f32 %v1010, %v1012
        %v1014 = vadd.f32 %v1010, %v1013
        %vm1015 = vweird.f32 %v994
        %vm1016 = vweird.f32 %v1010
        %vm1017 = vmor %vm1015, %vm1016
        %v1018 = vsel %vm1017, %v1010, %v1014
        %v1019 = vand.u32 2147483647, %v994
        %vm1020 = vcmp.eq.f32.partialorder %v1019, 8.507059e+37
        %v1021 = vand.u32 %v994, 2147483648
        %v1022 = vor.u32 1.1754944e-38, %v1021
        %v1023 = vsel %vm1020, %v1022, %v1018
        %v1024 = vmul.f32 %v988, %v1023
        %1025 = vrot.lane.b32.xlu0 %v912, 64
        %v1026 = vpop.permute.xlu0 %1025
        %v1029 = vsel %vm925, %v1009, 0
        %1031 = vmatpush.msra.mxu0 0.0
        %1032 = vmatpush.msra.mxu0 0.0
        %1033 = vmatpush.msra.mxu0 0.0
        %1034 = vmatpush.msra.mxu0 0.0
        %1035 = vmatpush.msra.mxu0 0.0
        %1036 = vmatpush.msra.mxu0 0.0
        %1037 = vmatpush.msra.mxu0 0.0
        %1038 = vmatpush.msra.mxu0 0.0
        %1039 = vmatpush.msra.mxu0 0.0
        %1040 = vmatpush.msra.mxu0 0.0
        %1041 = vmatpush.msra.mxu0 0.0
        %1042 = vmatpush.msra.mxu0 0.0
        %1043 = vmatpush.msra.mxu0 0.0
        %1044 = vmatpush.msra.mxu0 0.0
        %1045 = vmatpush.msra.mxu0 0.0
        %1046 = vmatpush.msra.mxu0 %v1026
        %1047 = vmatmul.f32.gmra.mxu0 %v1029
        %v1048 = vpop.f32.mrf.mxu0
        %v1049 = vadd.f32 0.0, %v1048
        %1050 = vdwg.mxu0
        %1051 = vrot.lane.b32.xlu0 %v915, 64
        %v1052 = vpop.permute.xlu0 %1051
        %v1055 = vsel %vm925, %v1024, 0
        %1057 = vmatpush.msra.mxu0 0.0
        %1058 = vmatpush.msra.mxu0 0.0
        %1059 = vmatpush.msra.mxu0 0.0
        %1060 = vmatpush.msra.mxu0 0.0
        %1061 = vmatpush.msra.mxu0 0.0
        %1062 = vmatpush.msra.mxu0 0.0
        %1063 = vmatpush.msra.mxu0 0.0
        %1064 = vmatpush.msra.mxu0 0.0
        %1065 = vmatpush.msra.mxu0 0.0
        %1066 = vmatpush.msra.mxu0 0.0
        %1067 = vmatpush.msra.mxu0 0.0
        %1068 = vmatpush.msra.mxu0 0.0
        %1069 = vmatpush.msra.mxu0 0.0
        %1070 = vmatpush.msra.mxu0 0.0
        %1071 = vmatpush.msra.mxu0 0.0
        %1072 = vmatpush.msra.mxu0 %v1052
        %1073 = vmatmul.f32.gmra.mxu0 %v1055
        %v1074 = vpop.f32.mrf.mxu0
        %v1075 = vadd.f32 0.0, %v1074
        %1076 = vdwg.mxu0
        %1077 = vrot.lane.b32.xlu0 %v912, 120
        %v1078 = vpop.permute.xlu0 %1077
        %1079 = vrot.lane.b32.xlu0 %v912, 88
        %v1080 = vpop.permute.xlu0 %1079
        %v1081 = vsel %vm925, %v1078, 0
        %v1083 = vsel %vm925, %v1080, 0
        %1085 = vmatpush.xpose.msra.mxu0 0.0
        %1086 = vmatpush.xpose.msra.mxu0 0.0
        %1087 = vmatpush.xpose.msra.mxu0 0.0
        %1088 = vmatpush.xpose.msra.mxu0 0.0
        %1089 = vmatpush.xpose.msra.mxu0 0.0
        %1090 = vmatpush.xpose.msra.mxu0 0.0
        %1091 = vmatpush.xpose.msra.mxu0 0.0
        %1092 = vmatpush.xpose.msra.mxu0 0.0
        %1093 = vmatpush.xpose.msra.mxu0 0.0
        %1094 = vmatpush.xpose.msra.mxu0 0.0
        %1095 = vmatpush.xpose.msra.mxu0 0.0
        %1096 = vmatpush.xpose.msra.mxu0 0.0
        %1097 = vmatpush.xpose.msra.mxu0 0.0
        %1098 = vmatpush.xpose.msra.mxu0 0.0
        %1099 = vmatpush.xpose.msra.mxu0 0.0
        %1100 = vmatpush.xpose.msra.mxu0 %v1083
        %1101 = vmatmul.f32.gmra.mxu0 %v1081
        %v1102 = vpop.f32.mrf.mxu0
        %v1103 = vadd.f32 %v869, %v1102
        %1104 = vdwg.mxu0
        %1105 = vrot.lane.b32.xlu0 %v915, 120
        %v1106 = vpop.permute.xlu0 %1105
        %1107 = vrot.lane.b32.xlu0 %v915, 88
        %v1108 = vpop.permute.xlu0 %1107
        %v1109 = vsel %vm925, %v1106, 0
        %v1111 = vsel %vm925, %v1108, 0
        %1113 = vmatpush.xpose.msra.mxu0 0.0
        %1114 = vmatpush.xpose.msra.mxu0 0.0
        %1115 = vmatpush.xpose.msra.mxu0 0.0
        %1116 = vmatpush.xpose.msra.mxu0 0.0
        %1117 = vmatpush.xpose.msra.mxu0 0.0
        %1118 = vmatpush.xpose.msra.mxu0 0.0
        %1119 = vmatpush.xpose.msra.mxu0 0.0
        %1120 = vmatpush.xpose.msra.mxu0 0.0
        %1121 = vmatpush.xpose.msra.mxu0 0.0
        %1122 = vmatpush.xpose.msra.mxu0 0.0
        %1123 = vmatpush.xpose.msra.mxu0 0.0
        %1124 = vmatpush.xpose.msra.mxu0 0.0
        %1125 = vmatpush.xpose.msra.mxu0 0.0
        %1126 = vmatpush.xpose.msra.mxu0 0.0
        %1127 = vmatpush.xpose.msra.mxu0 0.0
        %1128 = vmatpush.xpose.msra.mxu0 %v1111
        %1129 = vmatmul.f32.gmra.mxu0 %v1109
        %v1130 = vpop.f32.mrf.mxu0
        %v1131 = vadd.f32 %v870, %v1130
        %1132 = vdwg.mxu0
        %v1133 = vsel %vm925, %v1103, -inf
        %1134 = vmax.xlane.f32.xlu0 %v1133
        %v1135 = vpop.xlane.xlu0 %1134
        %v1136 = vsel %vm925, %v1131, -inf
        %1137 = vmax.xlane.f32.xlu0 %v1136
        %v1138 = vpop.xlane.xlu0 %1137
        %v1139 = vsub.f32 %v1103, %v1135
        %v1140 = vsub.f32 %v1131, %v1138
        %v1141 = vmul.f32 %v1139, 1.442695
        %v1142 = vpow.pop %v1141
        %v1143 = vmul.f32 %v1140, 1.442695
        %v1144 = vpow.pop %v1143
        %v1145 = vsel %vm925, %v1142, 0.0
        %1146 = vadd.xlane.f32.xlu0 %v1145
        %v1147 = vpop.xlane.xlu0 %1146
        %v1148 = vsel %vm925, %v1144, 0.0
        %1149 = vadd.xlane.f32.xlu0 %v1148
        %v1150 = vpop.xlane.xlu0 %1149
        %v1151 = vrcp.pop %v1147
        %v1152 = vmul.f32 %v1147, %v1151
        %v1153 = vsub.f32 1.0, %v1152
        %v1154 = vmul.f32 %v1151, %v1153
        %v1155 = vadd.f32 %v1151, %v1154
        %vm1156 = vweird.f32 %v1147
        %vm1157 = vweird.f32 %v1151
        %vm1158 = vmor %vm1156, %vm1157
        %v1159 = vsel %vm1158, %v1151, %v1155
        %v1160 = vand.u32 2147483647, %v1147
        %vm1161 = vcmp.eq.f32.partialorder %v1160, 8.507059e+37
        %v1162 = vand.u32 %v1147, 2147483648
        %v1163 = vor.u32 1.1754944e-38, %v1162
        %v1164 = vsel %vm1161, %v1163, %v1159
        %v1165 = vmul.f32 %v1142, %v1164
        %v1166 = vrcp.pop %v1150
        %v1167 = vmul.f32 %v1150, %v1166
        %v1168 = vsub.f32 1.0, %v1167
        %v1169 = vmul.f32 %v1166, %v1168
        %v1170 = vadd.f32 %v1166, %v1169
        %vm1171 = vweird.f32 %v1150
        %vm1172 = vweird.f32 %v1166
        %vm1173 = vmor %vm1171, %vm1172
        %v1174 = vsel %vm1173, %v1166, %v1170
        %v1175 = vand.u32 2147483647, %v1150
        %vm1176 = vcmp.eq.f32.partialorder %v1175, 8.507059e+37
        %v1177 = vand.u32 %v1150, 2147483648
        %v1178 = vor.u32 1.1754944e-38, %v1177
        %v1179 = vsel %vm1176, %v1178, %v1174
        %v1180 = vmul.f32 %v1144, %v1179
        %1181 = vrot.lane.b32.xlu0 %v912, 56
        %v1182 = vpop.permute.xlu0 %1181
        %v1185 = vsel %vm925, %v1165, 0
        %1187 = vmatpush.msra.mxu0 0.0
        %1188 = vmatpush.msra.mxu0 0.0
        %1189 = vmatpush.msra.mxu0 0.0
        %1190 = vmatpush.msra.mxu0 0.0
        %1191 = vmatpush.msra.mxu0 0.0
        %1192 = vmatpush.msra.mxu0 0.0
        %1193 = vmatpush.msra.mxu0 0.0
        %1194 = vmatpush.msra.mxu0 0.0
        %1195 = vmatpush.msra.mxu0 0.0
        %1196 = vmatpush.msra.mxu0 0.0
        %1197 = vmatpush.msra.mxu0 0.0
        %1198 = vmatpush.msra.mxu0 0.0
        %1199 = vmatpush.msra.mxu0 0.0
        %1200 = vmatpush.msra.mxu0 0.0
        %1201 = vmatpush.msra.mxu0 0.0
        %1202 = vmatpush.msra.mxu0 %v1182
        %1203 = vmatmul.f32.gmra.mxu0 %v1185
        %v1204 = vpop.f32.mrf.mxu0
        %v1205 = vadd.f32 0.0, %v1204
        %1206 = vdwg.mxu0
        %1207 = vrot.lane.b32.xlu0 %v915, 56
        %v1208 = vpop.permute.xlu0 %1207
        %v1211 = vsel %vm925, %v1180, 0
        %1213 = vmatpush.msra.mxu0 0.0
        %1214 = vmatpush.msra.mxu0 0.0
        %1215 = vmatpush.msra.mxu0 0.0
        %1216 = vmatpush.msra.mxu0 0.0
        %1217 = vmatpush.msra.mxu0 0.0
        %1218 = vmatpush.msra.mxu0 0.0
        %1219 = vmatpush.msra.mxu0 0.0
        %1220 = vmatpush.msra.mxu0 0.0
        %1221 = vmatpush.msra.mxu0 0.0
        %1222 = vmatpush.msra.mxu0 0.0
        %1223 = vmatpush.msra.mxu0 0.0
        %1224 = vmatpush.msra.mxu0 0.0
        %1225 = vmatpush.msra.mxu0 0.0
        %1226 = vmatpush.msra.mxu0 0.0
        %1227 = vmatpush.msra.mxu0 0.0
        %1228 = vmatpush.msra.mxu0 %v1208
        %1229 = vmatmul.f32.gmra.mxu0 %v1211
        %v1230 = vpop.f32.mrf.mxu0
        %v1231 = vadd.f32 0.0, %v1230
        %1232 = vdwg.mxu0
        %v1234 = vsel %vm925, %v1205, 0
        %v1237 = vsel %vm925, %v1231, 0
        %1239 = vmatpush.msra.mxu0 0.0
        %1240 = vmatpush.msra.mxu0 0.0
        %1241 = vmatpush.msra.mxu0 0.0
        %1242 = vmatpush.msra.mxu0 0.0
        %1243 = vmatpush.msra.mxu0 0.0
        %1244 = vmatpush.msra.mxu0 0.0
        %1245 = vmatpush.msra.mxu0 0.0
        %1246 = vmatpush.msra.mxu0 0.0
        %1247 = vmatpush.msra.mxu0 0.0
        %1248 = vmatpush.msra.mxu0 0.0
        %1249 = vmatpush.msra.mxu0 0.0
        %1250 = vmatpush.msra.mxu0 0.0
        %1251 = vmatpush.msra.mxu0 0.0
        %1252 = vmatpush.msra.mxu0 0.0
        %1253 = vmatpush.msra.mxu0 0.0
        %1254 = vmatpush.msra.mxu0 %v918
        %1255 = vmatmul.f32.gmra.mxu0 %v1234
        %v1256 = vpop.f32.mrf.mxu0
        %v1257 = vadd.f32 0.0, %v1256
        %1258 = vmatmul.f32.gmra.mxu0 %v1237
        %v1259 = vpop.f32.mrf.mxu0
        %v1260 = vadd.f32 0.0, %v1259
        %1261 = vdwg.mxu0
        %v1263 = vsel %vm925, %v1049, 0
        %v1266 = vsel %vm925, %v1075, 0
        %1268 = vmatpush.msra.mxu0 0.0
        %1269 = vmatpush.msra.mxu0 0.0
        %1270 = vmatpush.msra.mxu0 0.0
        %1271 = vmatpush.msra.mxu0 0.0
        %1272 = vmatpush.msra.mxu0 0.0
        %1273 = vmatpush.msra.mxu0 0.0
        %1274 = vmatpush.msra.mxu0 0.0
        %1275 = vmatpush.msra.mxu0 0.0
        %1276 = vmatpush.msra.mxu0 0.0
        %1277 = vmatpush.msra.mxu0 0.0
        %1278 = vmatpush.msra.mxu0 0.0
        %1279 = vmatpush.msra.mxu0 0.0
        %1280 = vmatpush.msra.mxu0 0.0
        %1281 = vmatpush.msra.mxu0 0.0
        %1282 = vmatpush.msra.mxu0 0.0
        %1283 = vmatpush.msra.mxu0 %v917
        %1284 = vmatmul.f32.gmra.mxu0 %v1263
        %v1285 = vpop.f32.mrf.mxu0
        %v1286 = vadd.f32 %v1257, %v1285
        %1287 = vmatmul.f32.gmra.mxu0 %v1266
        %v1288 = vpop.f32.mrf.mxu0
        %v1289 = vadd.f32 %v1260, %v1288
        %1290 = vdwg.mxu0
        %1291 = vrot.lane.b32.xlu0 %v912, 112
        %v1292 = vpop.permute.xlu0 %1291
        %1293 = vrot.lane.b32.xlu0 %v912, 80
        %v1294 = vpop.permute.xlu0 %1293
        %v1295 = vsel %vm925, %v1292, 0
        %v1297 = vsel %vm925, %v1294, 0
        %1299 = vmatpush.xpose.msra.mxu0 0.0
        %1300 = vmatpush.xpose.msra.mxu0 0.0
        %1301 = vmatpush.xpose.msra.mxu0 0.0
        %1302 = vmatpush.xpose.msra.mxu0 0.0
        %1303 = vmatpush.xpose.msra.mxu0 0.0
        %1304 = vmatpush.xpose.msra.mxu0 0.0
        %1305 = vmatpush.xpose.msra.mxu0 0.0
        %1306 = vmatpush.xpose.msra.mxu0 0.0
        %1307 = vmatpush.xpose.msra.mxu0 0.0
        %1308 = vmatpush.xpose.msra.mxu0 0.0
        %1309 = vmatpush.xpose.msra.mxu0 0.0
        %1310 = vmatpush.xpose.msra.mxu0 0.0
        %1311 = vmatpush.xpose.msra.mxu0 0.0
        %1312 = vmatpush.xpose.msra.mxu0 0.0
        %1313 = vmatpush.xpose.msra.mxu0 0.0
        %1314 = vmatpush.xpose.msra.mxu0 %v1297
        %1315 = vmatmul.f32.gmra.mxu0 %v1295
        %v1316 = vpop.f32.mrf.mxu0
        %v1317 = vadd.f32 %v869, %v1316
        %1318 = vdwg.mxu0
        %1319 = vrot.lane.b32.xlu0 %v915, 112
        %v1320 = vpop.permute.xlu0 %1319
        %1321 = vrot.lane.b32.xlu0 %v915, 80
        %v1322 = vpop.permute.xlu0 %1321
        %v1323 = vsel %vm925, %v1320, 0
        %v1325 = vsel %vm925, %v1322, 0
        %1327 = vmatpush.xpose.msra.mxu0 0.0
        %1328 = vmatpush.xpose.msra.mxu0 0.0
        %1329 = vmatpush.xpose.msra.mxu0 0.0
        %1330 = vmatpush.xpose.msra.mxu0 0.0
        %1331 = vmatpush.xpose.msra.mxu0 0.0
        %1332 = vmatpush.xpose.msra.mxu0 0.0
        %1333 = vmatpush.xpose.msra.mxu0 0.0
        %1334 = vmatpush.xpose.msra.mxu0 0.0
        %1335 = vmatpush.xpose.msra.mxu0 0.0
        %1336 = vmatpush.xpose.msra.mxu0 0.0
        %1337 = vmatpush.xpose.msra.mxu0 0.0
        %1338 = vmatpush.xpose.msra.mxu0 0.0
        %1339 = vmatpush.xpose.msra.mxu0 0.0
        %1340 = vmatpush.xpose.msra.mxu0 0.0
        %1341 = vmatpush.xpose.msra.mxu0 0.0
        %1342 = vmatpush.xpose.msra.mxu0 %v1325
        %1343 = vmatmul.f32.gmra.mxu0 %v1323
        %v1344 = vpop.f32.mrf.mxu0
        %v1345 = vadd.f32 %v870, %v1344
        %1346 = vdwg.mxu0
        %v1347 = vsel %vm925, %v1317, -inf
        %1348 = vmax.xlane.f32.xlu0 %v1347
        %v1349 = vpop.xlane.xlu0 %1348
        %v1350 = vsel %vm925, %v1345, -inf
        %1351 = vmax.xlane.f32.xlu0 %v1350
        %v1352 = vpop.xlane.xlu0 %1351
        %v1353 = vsub.f32 %v1317, %v1349
        %v1354 = vsub.f32 %v1345, %v1352
        %v1355 = vmul.f32 %v1353, 1.442695
        %v1356 = vpow.pop %v1355
        %v1357 = vmul.f32 %v1354, 1.442695
        %v1358 = vpow.pop %v1357
        %v1359 = vsel %vm925, %v1356, 0.0
        %1360 = vadd.xlane.f32.xlu0 %v1359
        %v1361 = vpop.xlane.xlu0 %1360
        %v1362 = vsel %vm925, %v1358, 0.0
        %1363 = vadd.xlane.f32.xlu0 %v1362
        %v1364 = vpop.xlane.xlu0 %1363
        %v1365 = vrcp.pop %v1361
        %v1366 = vmul.f32 %v1361, %v1365
        %v1367 = vsub.f32 1.0, %v1366
        %v1368 = vmul.f32 %v1365, %v1367
        %v1369 = vadd.f32 %v1365, %v1368
        %vm1370 = vweird.f32 %v1361
        %vm1371 = vweird.f32 %v1365
        %vm1372 = vmor %vm1370, %vm1371
        %v1373 = vsel %vm1372, %v1365, %v1369
        %v1374 = vand.u32 2147483647, %v1361
        %vm1375 = vcmp.eq.f32.partialorder %v1374, 8.507059e+37
        %v1376 = vand.u32 %v1361, 2147483648
        %v1377 = vor.u32 1.1754944e-38, %v1376
        %v1378 = vsel %vm1375, %v1377, %v1373
        %v1379 = vmul.f32 %v1356, %v1378
        %v1380 = vrcp.pop %v1364
        %v1381 = vmul.f32 %v1364, %v1380
        %v1382 = vsub.f32 1.0, %v1381
        %v1383 = vmul.f32 %v1380, %v1382
        %v1384 = vadd.f32 %v1380, %v1383
        %vm1385 = vweird.f32 %v1364
        %vm1386 = vweird.f32 %v1380
        %vm1387 = vmor %vm1385, %vm1386
        %v1388 = vsel %vm1387, %v1380, %v1384
        %v1389 = vand.u32 2147483647, %v1364
        %vm1390 = vcmp.eq.f32.partialorder %v1389, 8.507059e+37
        %v1391 = vand.u32 %v1364, 2147483648
        %v1392 = vor.u32 1.1754944e-38, %v1391
        %v1393 = vsel %vm1390, %v1392, %v1388
        %v1394 = vmul.f32 %v1358, %v1393
        %1395 = vrot.lane.b32.xlu0 %v912, 48
        %v1396 = vpop.permute.xlu0 %1395
        %v1399 = vsel %vm925, %v1379, 0
        %1401 = vmatpush.msra.mxu0 0.0
        %1402 = vmatpush.msra.mxu0 0.0
        %1403 = vmatpush.msra.mxu0 0.0
        %1404 = vmatpush.msra.mxu0 0.0
        %1405 = vmatpush.msra.mxu0 0.0
        %1406 = vmatpush.msra.mxu0 0.0
        %1407 = vmatpush.msra.mxu0 0.0
        %1408 = vmatpush.msra.mxu0 0.0
        %1409 = vmatpush.msra.mxu0 0.0
        %1410 = vmatpush.msra.mxu0 0.0
        %1411 = vmatpush.msra.mxu0 0.0
        %1412 = vmatpush.msra.mxu0 0.0
        %1413 = vmatpush.msra.mxu0 0.0
        %1414 = vmatpush.msra.mxu0 0.0
        %1415 = vmatpush.msra.mxu0 0.0
        %1416 = vmatpush.msra.mxu0 %v1396
        %1417 = vmatmul.f32.gmra.mxu0 %v1399
        %v1418 = vpop.f32.mrf.mxu0
        %v1419 = vadd.f32 0.0, %v1418
        %1420 = vdwg.mxu0
        %1421 = vrot.lane.b32.xlu0 %v915, 48
        %v1422 = vpop.permute.xlu0 %1421
        %v1425 = vsel %vm925, %v1394, 0
        %1427 = vmatpush.msra.mxu0 0.0
        %1428 = vmatpush.msra.mxu0 0.0
        %1429 = vmatpush.msra.mxu0 0.0
        %1430 = vmatpush.msra.mxu0 0.0
        %1431 = vmatpush.msra.mxu0 0.0
        %1432 = vmatpush.msra.mxu0 0.0
        %1433 = vmatpush.msra.mxu0 0.0
        %1434 = vmatpush.msra.mxu0 0.0
        %1435 = vmatpush.msra.mxu0 0.0
        %1436 = vmatpush.msra.mxu0 0.0
        %1437 = vmatpush.msra.mxu0 0.0
        %1438 = vmatpush.msra.mxu0 0.0
        %1439 = vmatpush.msra.mxu0 0.0
        %1440 = vmatpush.msra.mxu0 0.0
        %1441 = vmatpush.msra.mxu0 0.0
        %1442 = vmatpush.msra.mxu0 %v1422
        %1443 = vmatmul.f32.gmra.mxu0 %v1425
        %v1444 = vpop.f32.mrf.mxu0
        %v1445 = vadd.f32 0.0, %v1444
        %1446 = vdwg.mxu0
        %v1448 = vsel %vm925, %v1419, 0
        %v1451 = vsel %vm925, %v1445, 0
        %1453 = vmatpush.msra.mxu0 0.0
        %1454 = vmatpush.msra.mxu0 0.0
        %1455 = vmatpush.msra.mxu0 0.0
        %1456 = vmatpush.msra.mxu0 0.0
        %1457 = vmatpush.msra.mxu0 0.0
        %1458 = vmatpush.msra.mxu0 0.0
        %1459 = vmatpush.msra.mxu0 0.0
        %1460 = vmatpush.msra.mxu0 0.0
        %1461 = vmatpush.msra.mxu0 0.0
        %1462 = vmatpush.msra.mxu0 0.0
        %1463 = vmatpush.msra.mxu0 0.0
        %1464 = vmatpush.msra.mxu0 0.0
        %1465 = vmatpush.msra.mxu0 0.0
        %1466 = vmatpush.msra.mxu0 0.0
        %1467 = vmatpush.msra.mxu0 0.0
        %1468 = vmatpush.msra.mxu0 %v919
        %1469 = vmatmul.f32.gmra.mxu0 %v1448
        %v1470 = vpop.f32.mrf.mxu0
        %v1471 = vadd.f32 0.0, %v1470
        %1472 = vmatmul.f32.gmra.mxu0 %v1451
        %v1473 = vpop.f32.mrf.mxu0
        %v1474 = vadd.f32 0.0, %v1473
        %1475 = vdwg.mxu0
        %v1476 = vadd.f32 %v1286, %v1471
        %v1477 = vadd.f32 %v1289, %v1474
        %1478 = vrot.lane.b32.xlu0 %v912, 104
        %v1479 = vpop.permute.xlu0 %1478
        %1480 = vrot.lane.b32.xlu0 %v912, 72
        %v1481 = vpop.permute.xlu0 %1480
        %v1482 = vsel %vm925, %v1479, 0
        %v1484 = vsel %vm925, %v1481, 0
        %1486 = vmatpush.xpose.msra.mxu0 0.0
        %1487 = vmatpush.xpose.msra.mxu0 0.0
        %1488 = vmatpush.xpose.msra.mxu0 0.0
        %1489 = vmatpush.xpose.msra.mxu0 0.0
        %1490 = vmatpush.xpose.msra.mxu0 0.0
        %1491 = vmatpush.xpose.msra.mxu0 0.0
        %1492 = vmatpush.xpose.msra.mxu0 0.0
        %1493 = vmatpush.xpose.msra.mxu0 0.0
        %1494 = vmatpush.xpose.msra.mxu0 0.0
        %1495 = vmatpush.xpose.msra.mxu0 0.0
        %1496 = vmatpush.xpose.msra.mxu0 0.0
        %1497 = vmatpush.xpose.msra.mxu0 0.0
        %1498 = vmatpush.xpose.msra.mxu0 0.0
        %1499 = vmatpush.xpose.msra.mxu0 0.0
        %1500 = vmatpush.xpose.msra.mxu0 0.0
        %1501 = vmatpush.xpose.msra.mxu0 %v1484
        %1502 = vmatmul.f32.gmra.mxu0 %v1482
        %v1503 = vpop.f32.mrf.mxu0
        %v1504 = vadd.f32 %v869, %v1503
        %1505 = vdwg.mxu0
        %1506 = vrot.lane.b32.xlu0 %v915, 104
        %v1507 = vpop.permute.xlu0 %1506
        %1508 = vrot.lane.b32.xlu0 %v915, 72
        %v1509 = vpop.permute.xlu0 %1508
        %v1510 = vsel %vm925, %v1507, 0
        %v1512 = vsel %vm925, %v1509, 0
        %1514 = vmatpush.xpose.msra.mxu0 0.0
        %1515 = vmatpush.xpose.msra.mxu0 0.0
        %1516 = vmatpush.xpose.msra.mxu0 0.0
        %1517 = vmatpush.xpose.msra.mxu0 0.0
        %1518 = vmatpush.xpose.msra.mxu0 0.0
        %1519 = vmatpush.xpose.msra.mxu0 0.0
        %1520 = vmatpush.xpose.msra.mxu0 0.0
        %1521 = vmatpush.xpose.msra.mxu0 0.0
        %1522 = vmatpush.xpose.msra.mxu0 0.0
        %1523 = vmatpush.xpose.msra.mxu0 0.0
        %1524 = vmatpush.xpose.msra.mxu0 0.0
        %1525 = vmatpush.xpose.msra.mxu0 0.0
        %1526 = vmatpush.xpose.msra.mxu0 0.0
        %1527 = vmatpush.xpose.msra.mxu0 0.0
        %1528 = vmatpush.xpose.msra.mxu0 0.0
        %1529 = vmatpush.xpose.msra.mxu0 %v1512
        %1530 = vmatmul.f32.gmra.mxu0 %v1510
        %v1531 = vpop.f32.mrf.mxu0
        %v1532 = vadd.f32 %v870, %v1531
        %1533 = vdwg.mxu0
        %v1534 = vsel %vm925, %v1504, -inf
        %1535 = vmax.xlane.f32.xlu0 %v1534
        %v1536 = vpop.xlane.xlu0 %1535
        %v1537 = vsel %vm925, %v1532, -inf
        %1538 = vmax.xlane.f32.xlu0 %v1537
        %v1539 = vpop.xlane.xlu0 %1538
        %v1540 = vsub.f32 %v1504, %v1536
        %v1541 = vsub.f32 %v1532, %v1539
        %v1542 = vmul.f32 %v1540, 1.442695
        %v1543 = vpow.pop %v1542
        %v1544 = vmul.f32 %v1541, 1.442695
        %v1545 = vpow.pop %v1544
        %v1546 = vsel %vm925, %v1543, 0.0
        %1547 = vadd.xlane.f32.xlu0 %v1546
        %v1548 = vpop.xlane.xlu0 %1547
        %v1549 = vsel %vm925, %v1545, 0.0
        %1550 = vadd.xlane.f32.xlu0 %v1549
        %v1551 = vpop.xlane.xlu0 %1550
        %v1552 = vrcp.pop %v1548
        %v1553 = vmul.f32 %v1548, %v1552
        %v1554 = vsub.f32 1.0, %v1553
        %v1555 = vmul.f32 %v1552, %v1554
        %v1556 = vadd.f32 %v1552, %v1555
        %vm1557 = vweird.f32 %v1548
        %vm1558 = vweird.f32 %v1552
        %vm1559 = vmor %vm1557, %vm1558
        %v1560 = vsel %vm1559, %v1552, %v1556
        %v1561 = vand.u32 2147483647, %v1548
        %vm1562 = vcmp.eq.f32.partialorder %v1561, 8.507059e+37
        %v1563 = vand.u32 %v1548, 2147483648
        %v1564 = vor.u32 1.1754944e-38, %v1563
        %v1565 = vsel %vm1562, %v1564, %v1560
        %v1566 = vmul.f32 %v1543, %v1565
        %v1567 = vrcp.pop %v1551
        %v1568 = vmul.f32 %v1551, %v1567
        %v1569 = vsub.f32 1.0, %v1568
        %v1570 = vmul.f32 %v1567, %v1569
        %v1571 = vadd.f32 %v1567, %v1570
        %vm1572 = vweird.f32 %v1551
        %vm1573 = vweird.f32 %v1567
        %vm1574 = vmor %vm1572, %vm1573
        %v1575 = vsel %vm1574, %v1567, %v1571
        %v1576 = vand.u32 2147483647, %v1551
        %vm1577 = vcmp.eq.f32.partialorder %v1576, 8.507059e+37
        %v1578 = vand.u32 %v1551, 2147483648
        %v1579 = vor.u32 1.1754944e-38, %v1578
        %v1580 = vsel %vm1577, %v1579, %v1575
        %v1581 = vmul.f32 %v1545, %v1580
        %1582 = vrot.lane.b32.xlu0 %v912, 40
        %v1583 = vpop.permute.xlu0 %1582
        %v1586 = vsel %vm925, %v1566, 0
        %1588 = vmatpush.msra.mxu0 0.0
        %1589 = vmatpush.msra.mxu0 0.0
        %1590 = vmatpush.msra.mxu0 0.0
        %1591 = vmatpush.msra.mxu0 0.0
        %1592 = vmatpush.msra.mxu0 0.0
        %1593 = vmatpush.msra.mxu0 0.0
        %1594 = vmatpush.msra.mxu0 0.0
        %1595 = vmatpush.msra.mxu0 0.0
        %1596 = vmatpush.msra.mxu0 0.0
        %1597 = vmatpush.msra.mxu0 0.0
        %1598 = vmatpush.msra.mxu0 0.0
        %1599 = vmatpush.msra.mxu0 0.0
        %1600 = vmatpush.msra.mxu0 0.0
        %1601 = vmatpush.msra.mxu0 0.0
        %1602 = vmatpush.msra.mxu0 0.0
        %1603 = vmatpush.msra.mxu0 %v1583
        %1604 = vmatmul.f32.gmra.mxu0 %v1586
        %v1605 = vpop.f32.mrf.mxu0
        %v1606 = vadd.f32 0.0, %v1605
        %1607 = vdwg.mxu0
        %1608 = vrot.lane.b32.xlu0 %v915, 40
        %v1609 = vpop.permute.xlu0 %1608
        %v1612 = vsel %vm925, %v1581, 0
        %1614 = vmatpush.msra.mxu0 0.0
        %1615 = vmatpush.msra.mxu0 0.0
        %1616 = vmatpush.msra.mxu0 0.0
        %1617 = vmatpush.msra.mxu0 0.0
        %1618 = vmatpush.msra.mxu0 0.0
        %1619 = vmatpush.msra.mxu0 0.0
        %1620 = vmatpush.msra.mxu0 0.0
        %1621 = vmatpush.msra.mxu0 0.0
        %1622 = vmatpush.msra.mxu0 0.0
        %1623 = vmatpush.msra.mxu0 0.0
        %1624 = vmatpush.msra.mxu0 0.0
        %1625 = vmatpush.msra.mxu0 0.0
        %1626 = vmatpush.msra.mxu0 0.0
        %1627 = vmatpush.msra.mxu0 0.0
        %1628 = vmatpush.msra.mxu0 0.0
        %1629 = vmatpush.msra.mxu0 %v1609
        %1630 = vmatmul.f32.gmra.mxu0 %v1612
        %v1631 = vpop.f32.mrf.mxu0
        %v1632 = vadd.f32 0.0, %v1631
        %1633 = vdwg.mxu0
        %v1635 = vsel %vm925, %v1606, 0
        %v1638 = vsel %vm925, %v1632, 0
        %1640 = vmatpush.msra.mxu0 0.0
        %1641 = vmatpush.msra.mxu0 0.0
        %1642 = vmatpush.msra.mxu0 0.0
        %1643 = vmatpush.msra.mxu0 0.0
        %1644 = vmatpush.msra.mxu0 0.0
        %1645 = vmatpush.msra.mxu0 0.0
        %1646 = vmatpush.msra.mxu0 0.0
        %1647 = vmatpush.msra.mxu0 0.0
        %1648 = vmatpush.msra.mxu0 0.0
        %1649 = vmatpush.msra.mxu0 0.0
        %1650 = vmatpush.msra.mxu0 0.0
        %1651 = vmatpush.msra.mxu0 0.0
        %1652 = vmatpush.msra.mxu0 0.0
        %1653 = vmatpush.msra.mxu0 0.0
        %1654 = vmatpush.msra.mxu0 0.0
        %1655 = vmatpush.msra.mxu0 %v920
        %1656 = vmatmul.f32.gmra.mxu0 %v1635
        %v1657 = vpop.f32.mrf.mxu0
        %v1658 = vadd.f32 0.0, %v1657
        %1659 = vmatmul.f32.gmra.mxu0 %v1638
        %v1660 = vpop.f32.mrf.mxu0
        %v1661 = vadd.f32 0.0, %v1660
        %1662 = vdwg.mxu0
        %v1663 = vadd.f32 %v1476, %v1658
        %v1664 = vadd.f32 %v1477, %v1661
        %v1666 = vperm.slane %v921, 0
        %v1668 = vadd.f32 %v1663, %v1666
        %v1669 = vadd.f32 %v1664, %v1666
        %v1670 = vadd.f32 %v861, %v1668
        %v1671 = vadd.f32 %v862, %v1669
        %v1672 = vsel %vm887, %v1670, 0.0
        %1673 = vadd.xlane.f32.xlu0 %v1672
        %v1674 = vpop.xlane.xlu0 %1673
        %v1675 = vsel %vm887, %v1671, 0.0
        %1676 = vadd.xlane.f32.xlu0 %v1675
        %v1677 = vpop.xlane.xlu0 %1676
        %v1678 = vrcp.pop 32.0
        %v1679 = vmul.f32 32.0, %v1678
        %v1680 = vsub.f32 1.0, %v1679
        %v1681 = vmul.f32 %v1678, %v1680
        %v1682 = vadd.f32 %v1678, %v1681
        %vm1683 = vweird.f32 %v1678
        %v1684 = vsel %vm1683, %v1678, %v1682
        %v1685 = vmul.f32 %v1674, %v1684
        %v1686 = vmul.f32 %v1677, %v1684
        %v1687 = vsub.f32 %v1670, %v1685
        %v1688 = vsub.f32 %v1671, %v1686
        %v1689 = vmul.f32 %v1687, %v1687
        %v1690 = vmul.f32 %v1688, %v1688
        %v1691 = vsel %vm887, %v1689, 0.0
        %1692 = vadd.xlane.f32.xlu0 %v1691
        %v1693 = vpop.xlane.xlu0 %1692
        %v1694 = vsel %vm887, %v1690, 0.0
        %1695 = vadd.xlane.f32.xlu0 %v1694
        %v1696 = vpop.xlane.xlu0 %1695
        %v1697 = vmul.f32 %v1693, %v1684
        %v1698 = vmul.f32 %v1696, %v1684
        %v1699 = vadd.f32 %v1697, 1e-05
        %v1700 = vadd.f32 %v1698, 1e-05
        %v1701 = vrsqrt.pop %v1699
        %v1702 = vmul.f32 %v1701, %v1699
        %v1703 = vmul.f32 %v1702, %v1701
        %v1704 = vmul.f32 0.5, %v1703
        %v1705 = vsub.f32 1.5, %v1704
        %v1706 = vmul.f32 %v1701, %v1705
        %vm1707 = vweird.f32 %v1699
        %vm1708 = vweird.f32 %v1701
        %vm1709 = vmor %vm1707, %vm1708
        %v1710 = vsel %vm1709, %v1701, %v1706
        %v1711 = vrsqrt.pop %v1700
        %v1712 = vmul.f32 %v1711, %v1700
        %v1713 = vmul.f32 %v1712, %v1711
        %v1714 = vmul.f32 0.5, %v1713
        %v1715 = vsub.f32 1.5, %v1714
        %v1716 = vmul.f32 %v1711, %v1715
        %vm1717 = vweird.f32 %v1700
        %vm1718 = vweird.f32 %v1711
        %vm1719 = vmor %vm1717, %vm1718
        %v1720 = vsel %vm1719, %v1711, %v1716
        %v1721 = vmul.f32 %v1687, %v1710
        %v1722 = vmul.f32 %v1688, %v1720
        %v1723 = vperm.slane %v877, 0
        %v1724 = vmul.f32 %v1721, %v1723
        %v1725 = vmul.f32 %v1722, %v1723
        %v1726 = vperm.slane %v878, 0
        %v1727 = vadd.f32 %v1724, %v1726
        %v1728 = vadd.f32 %v1725, %v1726
        %v1729 = vld [vmem:[#allocation10] sm:$0xff]
        %v1730 = vld [vmem:[#allocation10 + $0x8] sm:$0xff]
        %v1731 = vld [vmem:[#allocation10 + $0x10] sm:$0xff]
        %v1732 = vld [vmem:[#allocation10 + $0x18] sm:$0xff]
        %v1733 = vld [vmem:[#allocation11] sm:$0x1]
        %v1735 = vperm.slane %v1733, 0
        %v1738 = vsel %vm887, %v1727, 0
        %v1741 = vsel %vm887, %v1728, 0
        %1743 = vmatpush.msra.mxu0 0.0
        %1744 = vmatpush.msra.mxu0 0.0
        %1745 = vmatpush.msra.mxu0 0.0
        %1746 = vmatpush.msra.mxu0 0.0
        %1747 = vmatpush.msra.mxu0 0.0
        %1748 = vmatpush.msra.mxu0 0.0
        %1749 = vmatpush.msra.mxu0 0.0
        %1750 = vmatpush.msra.mxu0 0.0
        %1751 = vmatpush.msra.mxu0 0.0
        %1752 = vmatpush.msra.mxu0 0.0
        %1753 = vmatpush.msra.mxu0 0.0
        %1754 = vmatpush.msra.mxu0 0.0
        %1755 = vmatpush.msra.mxu0 %v1732
        %1756 = vmatpush.msra.mxu0 %v1731
        %1757 = vmatpush.msra.mxu0 %v1730
        %1758 = vmatpush.msra.mxu0 %v1729
        %1759 = vmatmul.f32.gmra.mxu0 %v1738
        %v1760 = vpop.f32.mrf.mxu0
        %v1761 = vadd.f32 %v1735, %v1760
        %1762 = vmatmul.f32.gmra.mxu0 %v1741
        %v1763 = vpop.f32.mrf.mxu0
        %v1764 = vadd.f32 %v1735, %v1763
        %1765 = vdwg.mxu0
        %v1766 = vld [vmem:[#allocation13] sm:$0xff]
        %v1767 = vld [vmem:[#allocation13 + $0x8] sm:$0xff]
        %v1768 = vld [vmem:[#allocation13 + $0x10] sm:$0xff]
        %v1769 = vld [vmem:[#allocation13 + $0x18] sm:$0xff]
        %v1770 = vld [vmem:[#allocation14] sm:$0x1]
        %v1772 = vperm.slane %v1770, 0
        %v1775 = vsel %vm887, %v863, 0
        %v1778 = vsel %vm887, %v864, 0
        %1780 = vmatpush.msra.mxu0 0.0
        %1781 = vmatpush.msra.mxu0 0.0
        %1782 = vmatpush.msra.mxu0 0.0
        %1783 = vmatpush.msra.mxu0 0.0
        %1784 = vmatpush.msra.mxu0 0.0
        %1785 = vmatpush.msra.mxu0 0.0
        %1786 = vmatpush.msra.mxu0 0.0
        %1787 = vmatpush.msra.mxu0 0.0
        %1788 = vmatpush.msra.mxu0 0.0
        %1789 = vmatpush.msra.mxu0 0.0
        %1790 = vmatpush.msra.mxu0 0.0
        %1791 = vmatpush.msra.mxu0 0.0
        %1792 = vmatpush.msra.mxu0 %v1769
        %1793 = vmatpush.msra.mxu0 %v1768
        %1794 = vmatpush.msra.mxu0 %v1767
        %1795 = vmatpush.msra.mxu0 %v1766
        %1796 = vmatmul.f32.gmra.mxu0 %v1775
        %v1797 = vpop.f32.mrf.mxu0
        %v1798 = vadd.f32 %v1772, %v1797
        %1799 = vmatmul.f32.gmra.mxu0 %v1778
        %v1800 = vpop.f32.mrf.mxu0
        %v1801 = vadd.f32 %v1772, %v1800
        %1802 = vdwg.mxu0
        %v1803 = vld [vmem:[#allocation16] sm:$0xff]
        %v1804 = vld [vmem:[#allocation16 + $0x8] sm:$0xff]
        %v1805 = vld [vmem:[#allocation16 + $0x10] sm:$0xff]
        %v1806 = vld [vmem:[#allocation16 + $0x18] sm:$0xff]
        %v1807 = vld [vmem:[%s13] sm:$0x1]
        %v1809 = vsel %vm925, %v1761, 0
        %v1812 = vsel %vm925, %v1798, 0
        %1814 = vmatpush.xpose.msra.mxu0 0.0
        %1815 = vmatpush.xpose.msra.mxu0 0.0
        %1816 = vmatpush.xpose.msra.mxu0 0.0
        %1817 = vmatpush.xpose.msra.mxu0 0.0
        %1818 = vmatpush.xpose.msra.mxu0 0.0
        %1819 = vmatpush.xpose.msra.mxu0 0.0
        %1820 = vmatpush.xpose.msra.mxu0 0.0
        %1821 = vmatpush.xpose.msra.mxu0 0.0
        %1822 = vmatpush.xpose.msra.mxu0 0.0
        %1823 = vmatpush.xpose.msra.mxu0 0.0
        %1824 = vmatpush.xpose.msra.mxu0 0.0
        %1825 = vmatpush.xpose.msra.mxu0 0.0
        %1826 = vmatpush.xpose.msra.mxu0 0.0
        %1827 = vmatpush.xpose.msra.mxu0 0.0
        %1828 = vmatpush.xpose.msra.mxu0 0.0
        %1829 = vmatpush.xpose.msra.mxu0 %v1812
        %1830 = vmatmul.f32.gmra.mxu0 %v1809
        %v1831 = vpop.f32.mrf.mxu0
        %v1832 = vadd.f32 %v875, %v1831
        %1833 = vdwg.mxu0
        %v1835 = vsel %vm925, %v1764, 0
        %v1838 = vsel %vm925, %v1801, 0
        %1840 = vmatpush.xpose.msra.mxu0 0.0
        %1841 = vmatpush.xpose.msra.mxu0 0.0
        %1842 = vmatpush.xpose.msra.mxu0 0.0
        %1843 = vmatpush.xpose.msra.mxu0 0.0
        %1844 = vmatpush.xpose.msra.mxu0 0.0
        %1845 = vmatpush.xpose.msra.mxu0 0.0
        %1846 = vmatpush.xpose.msra.mxu0 0.0
        %1847 = vmatpush.xpose.msra.mxu0 0.0
        %1848 = vmatpush.xpose.msra.mxu0 0.0
        %1849 = vmatpush.xpose.msra.mxu0 0.0
        %1850 = vmatpush.xpose.msra.mxu0 0.0
        %1851 = vmatpush.xpose.msra.mxu0 0.0
        %1852 = vmatpush.xpose.msra.mxu0 0.0
        %1853 = vmatpush.xpose.msra.mxu0 0.0
        %1854 = vmatpush.xpose.msra.mxu0 0.0
        %1855 = vmatpush.xpose.msra.mxu0 %v1838
        %1856 = vmatmul.f32.gmra.mxu0 %v1835
        %v1857 = vpop.f32.mrf.mxu0
        %v1858 = vadd.f32 %v876, %v1857
        %1859 = vdwg.mxu0
        %v1860 = vsel %vm925, %v1832, -inf
        %1861 = vmax.xlane.f32.xlu0 %v1860
        %v1862 = vpop.xlane.xlu0 %1861
        %v1863 = vsel %vm925, %v1858, -inf
        %1864 = vmax.xlane.f32.xlu0 %v1863
        %v1865 = vpop.xlane.xlu0 %1864
        %v1866 = vsub.f32 %v1832, %v1862
        %v1867 = vsub.f32 %v1858, %v1865
        %v1868 = vmul.f32 %v1866, 1.442695
        %v1869 = vpow.pop %v1868
        %v1870 = vmul.f32 %v1867, 1.442695
        %v1871 = vpow.pop %v1870
        %v1872 = vsel %vm925, %v1869, 0.0
        %1873 = vadd.xlane.f32.xlu0 %v1872
        %v1874 = vpop.xlane.xlu0 %1873
        %v1875 = vsel %vm925, %v1871, 0.0
        %1876 = vadd.xlane.f32.xlu0 %v1875
        %v1877 = vpop.xlane.xlu0 %1876
        %v1878 = vrcp.pop %v1874
        %v1879 = vmul.f32 %v1874, %v1878
        %v1880 = vsub.f32 1.0, %v1879
        %v1881 = vmul.f32 %v1878, %v1880
        %v1882 = vadd.f32 %v1878, %v1881
        %vm1883 = vweird.f32 %v1874
        %vm1884 = vweird.f32 %v1878
        %vm1885 = vmor %vm1883, %vm1884
        %v1886 = vsel %vm1885, %v1878, %v1882
        %v1887 = vand.u32 2147483647, %v1874
        %vm1888 = vcmp.eq.f32.partialorder %v1887, 8.507059e+37
        %v1889 = vand.u32 %v1874, 2147483648
        %v1890 = vor.u32 1.1754944e-38, %v1889
        %v1891 = vsel %vm1888, %v1890, %v1886
        %v1892 = vmul.f32 %v1869, %v1891
        %v1893 = vrcp.pop %v1877
        %v1894 = vmul.f32 %v1877, %v1893
        %v1895 = vsub.f32 1.0, %v1894
        %v1896 = vmul.f32 %v1893, %v1895
        %v1897 = vadd.f32 %v1893, %v1896
        %vm1898 = vweird.f32 %v1877
        %vm1899 = vweird.f32 %v1893
        %vm1900 = vmor %vm1898, %vm1899
        %v1901 = vsel %vm1900, %v1893, %v1897
        %v1902 = vand.u32 2147483647, %v1877
        %vm1903 = vcmp.eq.f32.partialorder %v1902, 8.507059e+37
        %v1904 = vand.u32 %v1877, 2147483648
        %v1905 = vor.u32 1.1754944e-38, %v1904
        %v1906 = vsel %vm1903, %v1905, %v1901
        %v1907 = vmul.f32 %v1871, %v1906
        %1908 = vrot.lane.b32.xlu0 %v1798, 96
        %v1909 = vpop.permute.xlu0 %1908
        %v1912 = vsel %vm925, %v1892, 0
        %1914 = vmatpush.msra.mxu0 0.0
        %1915 = vmatpush.msra.mxu0 0.0
        %1916 = vmatpush.msra.mxu0 0.0
        %1917 = vmatpush.msra.mxu0 0.0
        %1918 = vmatpush.msra.mxu0 0.0
        %1919 = vmatpush.msra.mxu0 0.0
        %1920 = vmatpush.msra.mxu0 0.0
        %1921 = vmatpush.msra.mxu0 0.0
        %1922 = vmatpush.msra.mxu0 0.0
        %1923 = vmatpush.msra.mxu0 0.0
        %1924 = vmatpush.msra.mxu0 0.0
        %1925 = vmatpush.msra.mxu0 0.0
        %1926 = vmatpush.msra.mxu0 0.0
        %1927 = vmatpush.msra.mxu0 0.0
        %1928 = vmatpush.msra.mxu0 0.0
        %1929 = vmatpush.msra.mxu0 %v1909
        %1930 = vmatmul.f32.gmra.mxu0 %v1912
        %v1931 = vpop.f32.mrf.mxu0
        %v1932 = vadd.f32 0.0, %v1931
        %1933 = vdwg.mxu0
        %1934 = vrot.lane.b32.xlu0 %v1801, 96
        %v1935 = vpop.permute.xlu0 %1934
        %v1938 = vsel %vm925, %v1907, 0
        %1940 = vmatpush.msra.mxu0 0.0
        %1941 = vmatpush.msra.mxu0 0.0
        %1942 = vmatpush.msra.mxu0 0.0
        %1943 = vmatpush.msra.mxu0 0.0
        %1944 = vmatpush.msra.mxu0 0.0
        %1945 = vmatpush.msra.mxu0 0.0
        %1946 = vmatpush.msra.mxu0 0.0
        %1947 = vmatpush.msra.mxu0 0.0
        %1948 = vmatpush.msra.mxu0 0.0
        %1949 = vmatpush.msra.mxu0 0.0
        %1950 = vmatpush.msra.mxu0 0.0
        %1951 = vmatpush.msra.mxu0 0.0
        %1952 = vmatpush.msra.mxu0 0.0
        %1953 = vmatpush.msra.mxu0 0.0
        %1954 = vmatpush.msra.mxu0 0.0
        %1955 = vmatpush.msra.mxu0 %v1935
        %1956 = vmatmul.f32.gmra.mxu0 %v1938
        %v1957 = vpop.f32.mrf.mxu0
        %v1958 = vadd.f32 0.0, %v1957
        %1959 = vdwg.mxu0
        %1960 = vrot.lane.b32.xlu0 %v1761, 120
        %v1961 = vpop.permute.xlu0 %1960
        %1962 = vrot.lane.b32.xlu0 %v1798, 120
        %v1963 = vpop.permute.xlu0 %1962
        %v1964 = vsel %vm925, %v1961, 0
        %v1966 = vsel %vm925, %v1963, 0
        %1968 = vmatpush.xpose.msra.mxu0 0.0
        %1969 = vmatpush.xpose.msra.mxu0 0.0
        %1970 = vmatpush.xpose.msra.mxu0 0.0
        %1971 = vmatpush.xpose.msra.mxu0 0.0
        %1972 = vmatpush.xpose.msra.mxu0 0.0
        %1973 = vmatpush.xpose.msra.mxu0 0.0
        %1974 = vmatpush.xpose.msra.mxu0 0.0
        %1975 = vmatpush.xpose.msra.mxu0 0.0
        %1976 = vmatpush.xpose.msra.mxu0 0.0
        %1977 = vmatpush.xpose.msra.mxu0 0.0
        %1978 = vmatpush.xpose.msra.mxu0 0.0
        %1979 = vmatpush.xpose.msra.mxu0 0.0
        %1980 = vmatpush.xpose.msra.mxu0 0.0
        %1981 = vmatpush.xpose.msra.mxu0 0.0
        %1982 = vmatpush.xpose.msra.mxu0 0.0
        %1983 = vmatpush.xpose.msra.mxu0 %v1966
        %1984 = vmatmul.f32.gmra.mxu0 %v1964
        %v1985 = vpop.f32.mrf.mxu0
        %v1986 = vadd.f32 %v875, %v1985
        %1987 = vdwg.mxu0
        %1988 = vrot.lane.b32.xlu0 %v1764, 120
        %v1989 = vpop.permute.xlu0 %1988
        %1990 = vrot.lane.b32.xlu0 %v1801, 120
        %v1991 = vpop.permute.xlu0 %1990
        %v1992 = vsel %vm925, %v1989, 0
        %v1994 = vsel %vm925, %v1991, 0
        %1996 = vmatpush.xpose.msra.mxu0 0.0
        %1997 = vmatpush.xpose.msra.mxu0 0.0
        %1998 = vmatpush.xpose.msra.mxu0 0.0
        %1999 = vmatpush.xpose.msra.mxu0 0.0
        %2000 = vmatpush.xpose.msra.mxu0 0.0
        %2001 = vmatpush.xpose.msra.mxu0 0.0
        %2002 = vmatpush.xpose.msra.mxu0 0.0
        %2003 = vmatpush.xpose.msra.mxu0 0.0
        %2004 = vmatpush.xpose.msra.mxu0 0.0
        %2005 = vmatpush.xpose.msra.mxu0 0.0
        %2006 = vmatpush.xpose.msra.mxu0 0.0
        %2007 = vmatpush.xpose.msra.mxu0 0.0
        %2008 = vmatpush.xpose.msra.mxu0 0.0
        %2009 = vmatpush.xpose.msra.mxu0 0.0
        %2010 = vmatpush.xpose.msra.mxu0 0.0
        %2011 = vmatpush.xpose.msra.mxu0 %v1994
        %2012 = vmatmul.f32.gmra.mxu0 %v1992
        %v2013 = vpop.f32.mrf.mxu0
        %v2014 = vadd.f32 %v876, %v2013
        %2015 = vdwg.mxu0
        %v2016 = vsel %vm925, %v1986, -inf
        %2017 = vmax.xlane.f32.xlu0 %v2016
        %v2018 = vpop.xlane.xlu0 %2017
        %v2019 = vsel %vm925, %v2014, -inf
        %2020 = vmax.xlane.f32.xlu0 %v2019
        %v2021 = vpop.xlane.xlu0 %2020
        %v2022 = vsub.f32 %v1986, %v2018
        %v2023 = vsub.f32 %v2014, %v2021
        %v2024 = vmul.f32 %v2022, 1.442695
        %v2025 = vpow.pop %v2024
        %v2026 = vmul.f32 %v2023, 1.442695
        %v2027 = vpow.pop %v2026
        %v2028 = vsel %vm925, %v2025, 0.0
        %2029 = vadd.xlane.f32.xlu0 %v2028
        %v2030 = vpop.xlane.xlu0 %2029
        %v2031 = vsel %vm925, %v2027, 0.0
        %2032 = vadd.xlane.f32.xlu0 %v2031
        %v2033 = vpop.xlane.xlu0 %2032
        %v2034 = vrcp.pop %v2030
        %v2035 = vmul.f32 %v2030, %v2034
        %v2036 = vsub.f32 1.0, %v2035
        %v2037 = vmul.f32 %v2034, %v2036
        %v2038 = vadd.f32 %v2034, %v2037
        %vm2039 = vweird.f32 %v2030
        %vm2040 = vweird.f32 %v2034
        %vm2041 = vmor %vm2039, %vm2040
        %v2042 = vsel %vm2041, %v2034, %v2038
        %v2043 = vand.u32 2147483647, %v2030
        %vm2044 = vcmp.eq.f32.partialorder %v2043, 8.507059e+37
        %v2045 = vand.u32 %v2030, 2147483648
        %v2046 = vor.u32 1.1754944e-38, %v2045
        %v2047 = vsel %vm2044, %v2046, %v2042
        %v2048 = vmul.f32 %v2025, %v2047
        %v2049 = vrcp.pop %v2033
        %v2050 = vmul.f32 %v2033, %v2049
        %v2051 = vsub.f32 1.0, %v2050
        %v2052 = vmul.f32 %v2049, %v2051
        %v2053 = vadd.f32 %v2049, %v2052
        %vm2054 = vweird.f32 %v2033
        %vm2055 = vweird.f32 %v2049
        %vm2056 = vmor %vm2054, %vm2055
        %v2057 = vsel %vm2056, %v2049, %v2053
        %v2058 = vand.u32 2147483647, %v2033
        %vm2059 = vcmp.eq.f32.partialorder %v2058, 8.507059e+37
        %v2060 = vand.u32 %v2033, 2147483648
        %v2061 = vor.u32 1.1754944e-38, %v2060
        %v2062 = vsel %vm2059, %v2061, %v2057
        %v2063 = vmul.f32 %v2027, %v2062
        %2064 = vrot.lane.b32.xlu0 %v1798, 88
        %v2065 = vpop.permute.xlu0 %2064
        %v2068 = vsel %vm925, %v2048, 0
        %2070 = vmatpush.msra.mxu0 0.0
        %2071 = vmatpush.msra.mxu0 0.0
        %2072 = vmatpush.msra.mxu0 0.0
        %2073 = vmatpush.msra.mxu0 0.0
        %2074 = vmatpush.msra.mxu0 0.0
        %2075 = vmatpush.msra.mxu0 0.0
        %2076 = vmatpush.msra.mxu0 0.0
        %2077 = vmatpush.msra.mxu0 0.0
        %2078 = vmatpush.msra.mxu0 0.0
        %2079 = vmatpush.msra.mxu0 0.0
        %2080 = vmatpush.msra.mxu0 0.0
        %2081 = vmatpush.msra.mxu0 0.0
        %2082 = vmatpush.msra.mxu0 0.0
        %2083 = vmatpush.msra.mxu0 0.0
        %2084 = vmatpush.msra.mxu0 0.0
        %2085 = vmatpush.msra.mxu0 %v2065
        %2086 = vmatmul.f32.gmra.mxu0 %v2068
        %v2087 = vpop.f32.mrf.mxu0
        %v2088 = vadd.f32 0.0, %v2087
        %2089 = vdwg.mxu0
        %2090 = vrot.lane.b32.xlu0 %v1801, 88
        %v2091 = vpop.permute.xlu0 %2090
        %v2094 = vsel %vm925, %v2063, 0
        %2096 = vmatpush.msra.mxu0 0.0
        %2097 = vmatpush.msra.mxu0 0.0
        %2098 = vmatpush.msra.mxu0 0.0
        %2099 = vmatpush.msra.mxu0 0.0
        %2100 = vmatpush.msra.mxu0 0.0
        %2101 = vmatpush.msra.mxu0 0.0
        %2102 = vmatpush.msra.mxu0 0.0
        %2103 = vmatpush.msra.mxu0 0.0
        %2104 = vmatpush.msra.mxu0 0.0
        %2105 = vmatpush.msra.mxu0 0.0
        %2106 = vmatpush.msra.mxu0 0.0
        %2107 = vmatpush.msra.mxu0 0.0
        %2108 = vmatpush.msra.mxu0 0.0
        %2109 = vmatpush.msra.mxu0 0.0
        %2110 = vmatpush.msra.mxu0 0.0
        %2111 = vmatpush.msra.mxu0 %v2091
        %2112 = vmatmul.f32.gmra.mxu0 %v2094
        %v2113 = vpop.f32.mrf.mxu0
        %v2114 = vadd.f32 0.0, %v2113
        %2115 = vdwg.mxu0
        %v2117 = vsel %vm925, %v2088, 0
        %v2120 = vsel %vm925, %v2114, 0
        %2122 = vmatpush.msra.mxu0 0.0
        %2123 = vmatpush.msra.mxu0 0.0
        %2124 = vmatpush.msra.mxu0 0.0
        %2125 = vmatpush.msra.mxu0 0.0
        %2126 = vmatpush.msra.mxu0 0.0
        %2127 = vmatpush.msra.mxu0 0.0
        %2128 = vmatpush.msra.mxu0 0.0
        %2129 = vmatpush.msra.mxu0 0.0
        %2130 = vmatpush.msra.mxu0 0.0
        %2131 = vmatpush.msra.mxu0 0.0
        %2132 = vmatpush.msra.mxu0 0.0
        %2133 = vmatpush.msra.mxu0 0.0
        %2134 = vmatpush.msra.mxu0 0.0
        %2135 = vmatpush.msra.mxu0 0.0
        %2136 = vmatpush.msra.mxu0 0.0
        %2137 = vmatpush.msra.mxu0 %v1804
        %2138 = vmatmul.f32.gmra.mxu0 %v2117
        %v2139 = vpop.f32.mrf.mxu0
        %v2140 = vadd.f32 0.0, %v2139
        %2141 = vmatmul.f32.gmra.mxu0 %v2120
        %v2142 = vpop.f32.mrf.mxu0
        %v2143 = vadd.f32 0.0, %v2142
        %2144 = vdwg.mxu0
        %v2146 = vsel %vm925, %v1932, 0
        %v2149 = vsel %vm925, %v1958, 0
        %2151 = vmatpush.msra.mxu0 0.0
        %2152 = vmatpush.msra.mxu0 0.0
        %2153 = vmatpush.msra.mxu0 0.0
        %2154 = vmatpush.msra.mxu0 0.0
        %2155 = vmatpush.msra.mxu0 0.0
        %2156 = vmatpush.msra.mxu0 0.0
        %2157 = vmatpush.msra.mxu0 0.0
        %2158 = vmatpush.msra.mxu0 0.0
        %2159 = vmatpush.msra.mxu0 0.0
        %2160 = vmatpush.msra.mxu0 0.0
        %2161 = vmatpush.msra.mxu0 0.0
        %2162 = vmatpush.msra.mxu0 0.0
        %2163 = vmatpush.msra.mxu0 0.0
        %2164 = vmatpush.msra.mxu0 0.0
        %2165 = vmatpush.msra.mxu0 0.0
        %2166 = vmatpush.msra.mxu0 %v1803
        %2167 = vmatmul.f32.gmra.mxu0 %v2146
        %v2168 = vpop.f32.mrf.mxu0
        %v2169 = vadd.f32 %v2140, %v2168
        %2170 = vmatmul.f32.gmra.mxu0 %v2149
        %v2171 = vpop.f32.mrf.mxu0
        %v2172 = vadd.f32 %v2143, %v2171
        %2173 = vdwg.mxu0
        %2174 = vrot.lane.b32.xlu0 %v1761, 112
        %v2175 = vpop.permute.xlu0 %2174
        %2176 = vrot.lane.b32.xlu0 %v1798, 112
        %v2177 = vpop.permute.xlu0 %2176
        %v2178 = vsel %vm925, %v2175, 0
        %v2180 = vsel %vm925, %v2177, 0
        %2182 = vmatpush.xpose.msra.mxu0 0.0
        %2183 = vmatpush.xpose.msra.mxu0 0.0
        %2184 = vmatpush.xpose.msra.mxu0 0.0
        %2185 = vmatpush.xpose.msra.mxu0 0.0
        %2186 = vmatpush.xpose.msra.mxu0 0.0
        %2187 = vmatpush.xpose.msra.mxu0 0.0
        %2188 = vmatpush.xpose.msra.mxu0 0.0
        %2189 = vmatpush.xpose.msra.mxu0 0.0
        %2190 = vmatpush.xpose.msra.mxu0 0.0
        %2191 = vmatpush.xpose.msra.mxu0 0.0
        %2192 = vmatpush.xpose.msra.mxu0 0.0
        %2193 = vmatpush.xpose.msra.mxu0 0.0
        %2194 = vmatpush.xpose.msra.mxu0 0.0
        %2195 = vmatpush.xpose.msra.mxu0 0.0
        %2196 = vmatpush.xpose.msra.mxu0 0.0
        %2197 = vmatpush.xpose.msra.mxu0 %v2180
        %2198 = vmatmul.f32.gmra.mxu0 %v2178
        %v2199 = vpop.f32.mrf.mxu0
        %v2200 = vadd.f32 %v875, %v2199
        %2201 = vdwg.mxu0
        %2202 = vrot.lane.b32.xlu0 %v1764, 112
        %v2203 = vpop.permute.xlu0 %2202
        %2204 = vrot.lane.b32.xlu0 %v1801, 112
        %v2205 = vpop.permute.xlu0 %2204
        %v2206 = vsel %vm925, %v2203, 0
        %v2208 = vsel %vm925, %v2205, 0
        %2210 = vmatpush.xpose.msra.mxu0 0.0
        %2211 = vmatpush.xpose.msra.mxu0 0.0
        %2212 = vmatpush.xpose.msra.mxu0 0.0
        %2213 = vmatpush.xpose.msra.mxu0 0.0
        %2214 = vmatpush.xpose.msra.mxu0 0.0
        %2215 = vmatpush.xpose.msra.mxu0 0.0
        %2216 = vmatpush.xpose.msra.mxu0 0.0
        %2217 = vmatpush.xpose.msra.mxu0 0.0
        %2218 = vmatpush.xpose.msra.mxu0 0.0
        %2219 = vmatpush.xpose.msra.mxu0 0.0
        %2220 = vmatpush.xpose.msra.mxu0 0.0
        %2221 = vmatpush.xpose.msra.mxu0 0.0
        %2222 = vmatpush.xpose.msra.mxu0 0.0
        %2223 = vmatpush.xpose.msra.mxu0 0.0
        %2224 = vmatpush.xpose.msra.mxu0 0.0
        %2225 = vmatpush.xpose.msra.mxu0 %v2208
        %2226 = vmatmul.f32.gmra.mxu0 %v2206
        %v2227 = vpop.f32.mrf.mxu0
        %v2228 = vadd.f32 %v876, %v2227
        %2229 = vdwg.mxu0
        %v2230 = vsel %vm925, %v2200, -inf
        %2231 = vmax.xlane.f32.xlu0 %v2230
        %v2232 = vpop.xlane.xlu0 %2231
        %v2233 = vsel %vm925, %v2228, -inf
        %2234 = vmax.xlane.f32.xlu0 %v2233
        %v2235 = vpop.xlane.xlu0 %2234
        %v2236 = vsub.f32 %v2200, %v2232
        %v2237 = vsub.f32 %v2228, %v2235
        %v2238 = vmul.f32 %v2236, 1.442695
        %v2239 = vpow.pop %v2238
        %v2240 = vmul.f32 %v2237, 1.442695
        %v2241 = vpow.pop %v2240
        %v2242 = vsel %vm925, %v2239, 0.0
        %2243 = vadd.xlane.f32.xlu0 %v2242
        %v2244 = vpop.xlane.xlu0 %2243
        %v2245 = vsel %vm925, %v2241, 0.0
        %2246 = vadd.xlane.f32.xlu0 %v2245
        %v2247 = vpop.xlane.xlu0 %2246
        %v2248 = vrcp.pop %v2244
        %v2249 = vmul.f32 %v2244, %v2248
        %v2250 = vsub.f32 1.0, %v2249
        %v2251 = vmul.f32 %v2248, %v2250
        %v2252 = vadd.f32 %v2248, %v2251
        %vm2253 = vweird.f32 %v2244
        %vm2254 = vweird.f32 %v2248
        %vm2255 = vmor %vm2253, %vm2254
        %v2256 = vsel %vm2255, %v2248, %v2252
        %v2257 = vand.u32 2147483647, %v2244
        %vm2258 = vcmp.eq.f32.partialorder %v2257, 8.507059e+37
        %v2259 = vand.u32 %v2244, 2147483648
        %v2260 = vor.u32 1.1754944e-38, %v2259
        %v2261 = vsel %vm2258, %v2260, %v2256
        %v2262 = vmul.f32 %v2239, %v2261
        %v2263 = vrcp.pop %v2247
        %v2264 = vmul.f32 %v2247, %v2263
        %v2265 = vsub.f32 1.0, %v2264
        %v2266 = vmul.f32 %v2263, %v2265
        %v2267 = vadd.f32 %v2263, %v2266
        %vm2268 = vweird.f32 %v2247
        %vm2269 = vweird.f32 %v2263
        %vm2270 = vmor %vm2268, %vm2269
        %v2271 = vsel %vm2270, %v2263, %v2267
        %v2272 = vand.u32 2147483647, %v2247
        %vm2273 = vcmp.eq.f32.partialorder %v2272, 8.507059e+37
        %v2274 = vand.u32 %v2247, 2147483648
        %v2275 = vor.u32 1.1754944e-38, %v2274
        %v2276 = vsel %vm2273, %v2275, %v2271
        %v2277 = vmul.f32 %v2241, %v2276
        %2278 = vrot.lane.b32.xlu0 %v1798, 80
        %v2279 = vpop.permute.xlu0 %2278
        %v2282 = vsel %vm925, %v2262, 0
        %2284 = vmatpush.msra.mxu0 0.0
        %2285 = vmatpush.msra.mxu0 0.0
        %2286 = vmatpush.msra.mxu0 0.0
        %2287 = vmatpush.msra.mxu0 0.0
        %2288 = vmatpush.msra.mxu0 0.0
        %2289 = vmatpush.msra.mxu0 0.0
        %2290 = vmatpush.msra.mxu0 0.0
        %2291 = vmatpush.msra.mxu0 0.0
        %2292 = vmatpush.msra.mxu0 0.0
        %2293 = vmatpush.msra.mxu0 0.0
        %2294 = vmatpush.msra.mxu0 0.0
        %2295 = vmatpush.msra.mxu0 0.0
        %2296 = vmatpush.msra.mxu0 0.0
        %2297 = vmatpush.msra.mxu0 0.0
        %2298 = vmatpush.msra.mxu0 0.0
        %2299 = vmatpush.msra.mxu0 %v2279
        %2300 = vmatmul.f32.gmra.mxu0 %v2282
        %v2301 = vpop.f32.mrf.mxu0
        %v2302 = vadd.f32 0.0, %v2301
        %2303 = vdwg.mxu0
        %2304 = vrot.lane.b32.xlu0 %v1801, 80
        %v2305 = vpop.permute.xlu0 %2304
        %v2308 = vsel %vm925, %v2277, 0
        %2310 = vmatpush.msra.mxu0 0.0
        %2311 = vmatpush.msra.mxu0 0.0
        %2312 = vmatpush.msra.mxu0 0.0
        %2313 = vmatpush.msra.mxu0 0.0
        %2314 = vmatpush.msra.mxu0 0.0
        %2315 = vmatpush.msra.mxu0 0.0
        %2316 = vmatpush.msra.mxu0 0.0
        %2317 = vmatpush.msra.mxu0 0.0
        %2318 = vmatpush.msra.mxu0 0.0
        %2319 = vmatpush.msra.mxu0 0.0
        %2320 = vmatpush.msra.mxu0 0.0
        %2321 = vmatpush.msra.mxu0 0.0
        %2322 = vmatpush.msra.mxu0 0.0
        %2323 = vmatpush.msra.mxu0 0.0
        %2324 = vmatpush.msra.mxu0 0.0
        %2325 = vmatpush.msra.mxu0 %v2305
        %2326 = vmatmul.f32.gmra.mxu0 %v2308
        %v2327 = vpop.f32.mrf.mxu0
        %v2328 = vadd.f32 0.0, %v2327
        %2329 = vdwg.mxu0
        %v2331 = vsel %vm925, %v2302, 0
        %v2334 = vsel %vm925, %v2328, 0
        %2336 = vmatpush.msra.mxu0 0.0
        %2337 = vmatpush.msra.mxu0 0.0
        %2338 = vmatpush.msra.mxu0 0.0
        %2339 = vmatpush.msra.mxu0 0.0
        %2340 = vmatpush.msra.mxu0 0.0
        %2341 = vmatpush.msra.mxu0 0.0
        %2342 = vmatpush.msra.mxu0 0.0
        %2343 = vmatpush.msra.mxu0 0.0
        %2344 = vmatpush.msra.mxu0 0.0
        %2345 = vmatpush.msra.mxu0 0.0
        %2346 = vmatpush.msra.mxu0 0.0
        %2347 = vmatpush.msra.mxu0 0.0
        %2348 = vmatpush.msra.mxu0 0.0
        %2349 = vmatpush.msra.mxu0 0.0
        %2350 = vmatpush.msra.mxu0 0.0
        %2351 = vmatpush.msra.mxu0 %v1805
        %2352 = vmatmul.f32.gmra.mxu0 %v2331
        %v2353 = vpop.f32.mrf.mxu0
        %v2354 = vadd.f32 0.0, %v2353
        %2355 = vmatmul.f32.gmra.mxu0 %v2334
        %v2356 = vpop.f32.mrf.mxu0
        %v2357 = vadd.f32 0.0, %v2356
        %2358 = vdwg.mxu0
        %v2359 = vadd.f32 %v2169, %v2354
        %v2360 = vadd.f32 %v2172, %v2357
        %2361 = vrot.lane.b32.xlu0 %v1761, 104
        %v2362 = vpop.permute.xlu0 %2361
        %2363 = vrot.lane.b32.xlu0 %v1798, 104
        %v2364 = vpop.permute.xlu0 %2363
        %v2365 = vsel %vm925, %v2362, 0
        %v2367 = vsel %vm925, %v2364, 0
        %2369 = vmatpush.xpose.msra.mxu0 0.0
        %2370 = vmatpush.xpose.msra.mxu0 0.0
        %2371 = vmatpush.xpose.msra.mxu0 0.0
        %2372 = vmatpush.xpose.msra.mxu0 0.0
        %2373 = vmatpush.xpose.msra.mxu0 0.0
        %2374 = vmatpush.xpose.msra.mxu0 0.0
        %2375 = vmatpush.xpose.msra.mxu0 0.0
        %2376 = vmatpush.xpose.msra.mxu0 0.0
        %2377 = vmatpush.xpose.msra.mxu0 0.0
        %2378 = vmatpush.xpose.msra.mxu0 0.0
        %2379 = vmatpush.xpose.msra.mxu0 0.0
        %2380 = vmatpush.xpose.msra.mxu0 0.0
        %2381 = vmatpush.xpose.msra.mxu0 0.0
        %2382 = vmatpush.xpose.msra.mxu0 0.0
        %2383 = vmatpush.xpose.msra.mxu0 0.0
        %2384 = vmatpush.xpose.msra.mxu0 %v2367
        %2385 = vmatmul.f32.gmra.mxu0 %v2365
        %v2386 = vpop.f32.mrf.mxu0
        %v2387 = vadd.f32 %v875, %v2386
        %2388 = vdwg.mxu0
        %2389 = vrot.lane.b32.xlu0 %v1764, 104
        %v2390 = vpop.permute.xlu0 %2389
        %2391 = vrot.lane.b32.xlu0 %v1801, 104
        %v2392 = vpop.permute.xlu0 %2391
        %v2393 = vsel %vm925, %v2390, 0
        %v2395 = vsel %vm925, %v2392, 0
        %2397 = vmatpush.xpose.msra.mxu0 0.0
        %2398 = vmatpush.xpose.msra.mxu0 0.0
        %2399 = vmatpush.xpose.msra.mxu0 0.0
        %2400 = vmatpush.xpose.msra.mxu0 0.0
        %2401 = vmatpush.xpose.msra.mxu0 0.0
        %2402 = vmatpush.xpose.msra.mxu0 0.0
        %2403 = vmatpush.xpose.msra.mxu0 0.0
        %2404 = vmatpush.xpose.msra.mxu0 0.0
        %2405 = vmatpush.xpose.msra.mxu0 0.0
        %2406 = vmatpush.xpose.msra.mxu0 0.0
        %2407 = vmatpush.xpose.msra.mxu0 0.0
        %2408 = vmatpush.xpose.msra.mxu0 0.0
        %2409 = vmatpush.xpose.msra.mxu0 0.0
        %2410 = vmatpush.xpose.msra.mxu0 0.0
        %2411 = vmatpush.xpose.msra.mxu0 0.0
        %2412 = vmatpush.xpose.msra.mxu0 %v2395
        %2413 = vmatmul.f32.gmra.mxu0 %v2393
        %v2414 = vpop.f32.mrf.mxu0
        %v2415 = vadd.f32 %v876, %v2414
        %2416 = vdwg.mxu0
        %v2417 = vsel %vm925, %v2387, -inf
        %2418 = vmax.xlane.f32.xlu0 %v2417
        %v2419 = vpop.xlane.xlu0 %2418
        %v2420 = vsel %vm925, %v2415, -inf
        %2421 = vmax.xlane.f32.xlu0 %v2420
        %v2422 = vpop.xlane.xlu0 %2421
        %v2423 = vsub.f32 %v2387, %v2419
        %v2424 = vsub.f32 %v2415, %v2422
        %v2425 = vmul.f32 %v2423, 1.442695
        %v2426 = vpow.pop %v2425
        %v2427 = vmul.f32 %v2424, 1.442695
        %v2428 = vpow.pop %v2427
        %v2429 = vsel %vm925, %v2426, 0.0
        %2430 = vadd.xlane.f32.xlu0 %v2429
        %v2431 = vpop.xlane.xlu0 %2430
        %v2432 = vsel %vm925, %v2428, 0.0
        %2433 = vadd.xlane.f32.xlu0 %v2432
        %v2434 = vpop.xlane.xlu0 %2433
        %v2435 = vrcp.pop %v2431
        %v2436 = vmul.f32 %v2431, %v2435
        %v2437 = vsub.f32 1.0, %v2436
        %v2438 = vmul.f32 %v2435, %v2437
        %v2439 = vadd.f32 %v2435, %v2438
        %vm2440 = vweird.f32 %v2431
        %vm2441 = vweird.f32 %v2435
        %vm2442 = vmor %vm2440, %vm2441
        %v2443 = vsel %vm2442, %v2435, %v2439
        %v2444 = vand.u32 2147483647, %v2431
        %vm2445 = vcmp.eq.f32.partialorder %v2444, 8.507059e+37
        %v2446 = vand.u32 %v2431, 2147483648
        %v2447 = vor.u32 1.1754944e-38, %v2446
        %v2448 = vsel %vm2445, %v2447, %v2443
        %v2449 = vmul.f32 %v2426, %v2448
        %v2450 = vrcp.pop %v2434
        %v2451 = vmul.f32 %v2434, %v2450
        %v2452 = vsub.f32 1.0, %v2451
        %v2453 = vmul.f32 %v2450, %v2452
        %v2454 = vadd.f32 %v2450, %v2453
        %vm2455 = vweird.f32 %v2434
        %vm2456 = vweird.f32 %v2450
        %vm2457 = vmor %vm2455, %vm2456
        %v2458 = vsel %vm2457, %v2450, %v2454
        %v2459 = vand.u32 2147483647, %v2434
        %vm2460 = vcmp.eq.f32.partialorder %v2459, 8.507059e+37
        %v2461 = vand.u32 %v2434, 2147483648
        %v2462 = vor.u32 1.1754944e-38, %v2461
        %v2463 = vsel %vm2460, %v2462, %v2458
        %v2464 = vmul.f32 %v2428, %v2463
        %2465 = vrot.lane.b32.xlu0 %v1798, 72
        %v2466 = vpop.permute.xlu0 %2465
        %v2469 = vsel %vm925, %v2449, 0
        %2471 = vmatpush.msra.mxu0 0.0
        %2472 = vmatpush.msra.mxu0 0.0
        %2473 = vmatpush.msra.mxu0 0.0
        %2474 = vmatpush.msra.mxu0 0.0
        %2475 = vmatpush.msra.mxu0 0.0
        %2476 = vmatpush.msra.mxu0 0.0
        %2477 = vmatpush.msra.mxu0 0.0
        %2478 = vmatpush.msra.mxu0 0.0
        %2479 = vmatpush.msra.mxu0 0.0
        %2480 = vmatpush.msra.mxu0 0.0
        %2481 = vmatpush.msra.mxu0 0.0
        %2482 = vmatpush.msra.mxu0 0.0
        %2483 = vmatpush.msra.mxu0 0.0
        %2484 = vmatpush.msra.mxu0 0.0
        %2485 = vmatpush.msra.mxu0 0.0
        %2486 = vmatpush.msra.mxu0 %v2466
        %2487 = vmatmul.f32.gmra.mxu0 %v2469
        %v2488 = vpop.f32.mrf.mxu0
        %v2489 = vadd.f32 0.0, %v2488
        %2490 = vdwg.mxu0
        %2491 = vrot.lane.b32.xlu0 %v1801, 72
        %v2492 = vpop.permute.xlu0 %2491
        %v2495 = vsel %vm925, %v2464, 0
        %2497 = vmatpush.msra.mxu0 0.0
        %2498 = vmatpush.msra.mxu0 0.0
        %2499 = vmatpush.msra.mxu0 0.0
        %2500 = vmatpush.msra.mxu0 0.0
        %2501 = vmatpush.msra.mxu0 0.0
        %2502 = vmatpush.msra.mxu0 0.0
        %2503 = vmatpush.msra.mxu0 0.0
        %2504 = vmatpush.msra.mxu0 0.0
        %2505 = vmatpush.msra.mxu0 0.0
        %2506 = vmatpush.msra.mxu0 0.0
        %2507 = vmatpush.msra.mxu0 0.0
        %2508 = vmatpush.msra.mxu0 0.0
        %2509 = vmatpush.msra.mxu0 0.0
        %2510 = vmatpush.msra.mxu0 0.0
        %2511 = vmatpush.msra.mxu0 0.0
        %2512 = vmatpush.msra.mxu0 %v2492
        %2513 = vmatmul.f32.gmra.mxu0 %v2495
        %v2514 = vpop.f32.mrf.mxu0
        %v2515 = vadd.f32 0.0, %v2514
        %2516 = vdwg.mxu0
        %v2518 = vsel %vm925, %v2489, 0
        %v2521 = vsel %vm925, %v2515, 0
        %2523 = vmatpush.msra.mxu0 0.0
        %2524 = vmatpush.msra.mxu0 0.0
        %2525 = vmatpush.msra.mxu0 0.0
        %2526 = vmatpush.msra.mxu0 0.0
        %2527 = vmatpush.msra.mxu0 0.0
        %2528 = vmatpush.msra.mxu0 0.0
        %2529 = vmatpush.msra.mxu0 0.0
        %2530 = vmatpush.msra.mxu0 0.0
        %2531 = vmatpush.msra.mxu0 0.0
        %2532 = vmatpush.msra.mxu0 0.0
        %2533 = vmatpush.msra.mxu0 0.0
        %2534 = vmatpush.msra.mxu0 0.0
        %2535 = vmatpush.msra.mxu0 0.0
        %2536 = vmatpush.msra.mxu0 0.0
        %2537 = vmatpush.msra.mxu0 0.0
        %2538 = vmatpush.msra.mxu0 %v1806
        %2539 = vmatmul.f32.gmra.mxu0 %v2518
        %v2540 = vpop.f32.mrf.mxu0
        %v2541 = vadd.f32 0.0, %v2540
        %2542 = vmatmul.f32.gmra.mxu0 %v2521
        %v2543 = vpop.f32.mrf.mxu0
        %v2544 = vadd.f32 0.0, %v2543
        %2545 = vdwg.mxu0
        %v2546 = vadd.f32 %v2359, %v2541
        %v2547 = vadd.f32 %v2360, %v2544
        %v2549 = vperm.slane %v1807, 0
        %v2551 = vadd.f32 %v2546, %v2549
        %v2552 = vadd.f32 %v2547, %v2549
        %v2553 = vadd.f32 %v1727, %v2551
        %v2554 = vadd.f32 %v1728, %v2552
        %v2555 = vsel %vm887, %v2553, 0.0
        %2556 = vadd.xlane.f32.xlu0 %v2555
        %v2557 = vpop.xlane.xlu0 %2556
        %v2558 = vsel %vm887, %v2554, 0.0
        %2559 = vadd.xlane.f32.xlu0 %v2558
        %v2560 = vpop.xlane.xlu0 %2559
        %v2561 = vmul.f32 %v2557, %v1684
        %v2562 = vmul.f32 %v2560, %v1684
        %v2563 = vsub.f32 %v2553, %v2561
        %v2564 = vsub.f32 %v2554, %v2562
        %v2565 = vmul.f32 %v2563, %v2563
        %v2566 = vmul.f32 %v2564, %v2564
        %v2567 = vsel %vm887, %v2565, 0.0
        %2568 = vadd.xlane.f32.xlu0 %v2567
        %v2569 = vpop.xlane.xlu0 %2568
        %v2570 = vsel %vm887, %v2566, 0.0
        %2571 = vadd.xlane.f32.xlu0 %v2570
        %v2572 = vpop.xlane.xlu0 %2571
        %v2573 = vmul.f32 %v2569, %v1684
        %v2574 = vmul.f32 %v2572, %v1684
        %v2575 = vadd.f32 %v2573, 1e-05
        %v2576 = vadd.f32 %v2574, 1e-05
        %v2577 = vrsqrt.pop %v2575
        %v2578 = vmul.f32 %v2577, %v2575
        %v2579 = vmul.f32 %v2578, %v2577
        %v2580 = vmul.f32 0.5, %v2579
        %v2581 = vsub.f32 1.5, %v2580
        %v2582 = vmul.f32 %v2577, %v2581
        %vm2583 = vweird.f32 %v2575
        %vm2584 = vweird.f32 %v2577
        %vm2585 = vmor %vm2583, %vm2584
        %v2586 = vsel %vm2585, %v2577, %v2582
        %v2587 = vrsqrt.pop %v2576
        %v2588 = vmul.f32 %v2587, %v2576
        %v2589 = vmul.f32 %v2588, %v2587
        %v2590 = vmul.f32 0.5, %v2589
        %v2591 = vsub.f32 1.5, %v2590
        %v2592 = vmul.f32 %v2587, %v2591
        %vm2593 = vweird.f32 %v2576
        %vm2594 = vweird.f32 %v2587
        %vm2595 = vmor %vm2593, %vm2594
        %v2596 = vsel %vm2595, %v2587, %v2592
        %v2597 = vmul.f32 %v2563, %v2586
        %v2598 = vmul.f32 %v2564, %v2596
        %v2599 = vperm.slane %v877, 1
        %v2600 = vmul.f32 %v2597, %v2599
        %v2601 = vmul.f32 %v2598, %v2599
        %v2602 = vperm.slane %v878, 1
        %v2603 = vadd.f32 %v2600, %v2602
        %v2604 = vadd.f32 %v2601, %v2602
        %v2605 = vld [vmem:[#allocation17] sm:$0xff]
        %v2606 = vld [vmem:[#allocation17 + $0x8] sm:$0xff]
        %v2607 = vld [vmem:[#allocation17 + $0x10] sm:$0xff]
        %v2608 = vld [vmem:[#allocation17 + $0x18] sm:$0xff]
        %v2609 = vld [vmem:[%s15] sm:$0x1]
        %v2611 = vperm.slane %v2609, 0
        %v2614 = vsel %vm887, %v2603, 0
        %v2617 = vsel %vm887, %v2604, 0
        %2619 = vmatpush.msra.mxu0 0.0
        %2620 = vmatpush.msra.mxu0 0.0
        %2621 = vmatpush.msra.mxu0 0.0
        %2622 = vmatpush.msra.mxu0 0.0
        %2623 = vmatpush.msra.mxu0 0.0
        %2624 = vmatpush.msra.mxu0 0.0
        %2625 = vmatpush.msra.mxu0 0.0
        %2626 = vmatpush.msra.mxu0 0.0
        %2627 = vmatpush.msra.mxu0 0.0
        %2628 = vmatpush.msra.mxu0 0.0
        %2629 = vmatpush.msra.mxu0 0.0
        %2630 = vmatpush.msra.mxu0 0.0
        %2631 = vmatpush.msra.mxu0 %v2608
        %2632 = vmatpush.msra.mxu0 %v2607
        %2633 = vmatpush.msra.mxu0 %v2606
        %2634 = vmatpush.msra.mxu0 %v2605
        %2635 = vmatmul.f32.gmra.mxu0 %v2614
        %v2636 = vpop.f32.mrf.mxu0
        %v2637 = vadd.f32 %v2611, %v2636
        %2638 = vmatmul.f32.gmra.mxu0 %v2617
        %v2639 = vpop.f32.mrf.mxu0
        %v2640 = vadd.f32 %v2611, %v2639
        %2641 = vdwg.mxu0
        %v2642 = vmax.f32 %v2637, 0.0
        %v2643 = vmax.f32 %v2640, 0.0
        %v2644 = vld [vmem:[%s16] sm:$0xff]
        %v2645 = vld [vmem:[%s16 + $0x8] sm:$0xff]
        %v2646 = vld [vmem:[%s16 + $0x10] sm:$0xff]
        %v2647 = vld [vmem:[%s16 + $0x18] sm:$0xff]
        %v2648 = vld [vmem:[%s16 + $0x20] sm:$0xff]
        %v2649 = vld [vmem:[%s16 + $0x28] sm:$0xff]
        %v2650 = vld [vmem:[%s16 + $0x30] sm:$0xff]
        %v2651 = vld [vmem:[%s16 + $0x38] sm:$0xff]
        %v2652 = vld [vmem:[%s17] sm:$0x1]
        %v2654 = vperm.slane %v2652, 0
        %vm2656 = vcmask 523264
        %v2658 = vsel %vm2656, %v2642, 0
        %v2661 = vsel %vm2656, %v2643, 0
        %2663 = vmatpush.msra.mxu0 0.0
        %2664 = vmatpush.msra.mxu0 0.0
        %2665 = vmatpush.msra.mxu0 0.0
        %2666 = vmatpush.msra.mxu0 0.0
        %2667 = vmatpush.msra.mxu0 0.0
        %2668 = vmatpush.msra.mxu0 0.0
        %2669 = vmatpush.msra.mxu0 0.0
        %2670 = vmatpush.msra.mxu0 0.0
        %2671 = vmatpush.msra.mxu0 %v2651
        %2672 = vmatpush.msra.mxu0 %v2650
        %2673 = vmatpush.msra.mxu0 %v2649
        %2674 = vmatpush.msra.mxu0 %v2648
        %2675 = vmatpush.msra.mxu0 %v2647
        %2676 = vmatpush.msra.mxu0 %v2646
        %2677 = vmatpush.msra.mxu0 %v2645
        %2678 = vmatpush.msra.mxu0 %v2644
        %2679 = vmatmul.f32.gmra.mxu0 %v2658
        %v2680 = vpop.f32.mrf.mxu0
        %v2681 = vadd.f32 %v2654, %v2680
        %2682 = vmatmul.f32.gmra.mxu0 %v2661
        %v2683 = vpop.f32.mrf.mxu0
        %v2684 = vadd.f32 %v2654, %v2683
        %2685 = vdwg.mxu0
        %v2686 = vadd.f32 %v2603, %v2681
        %v2687 = vadd.f32 %v2604, %v2684
        %v2688 = vsel %vm887, %v2686, 0.0
        %2689 = vadd.xlane.f32.xlu0 %v2688
        %v2690 = vpop.xlane.xlu0 %2689
        %v2691 = vsel %vm887, %v2687, 0.0
        %2692 = vadd.xlane.f32.xlu0 %v2691
        %v2693 = vpop.xlane.xlu0 %2692
        %v2694 = vmul.f32 %v2690, %v1684
        %v2695 = vmul.f32 %v2693, %v1684
        %v2696 = vsub.f32 %v2686, %v2694
        %v2697 = vsub.f32 %v2687, %v2695
        %v2698 = vmul.f32 %v2696, %v2696
        %v2699 = vmul.f32 %v2697, %v2697
        %v2700 = vsel %vm887, %v2698, 0.0
        %2701 = vadd.xlane.f32.xlu0 %v2700
        %v2702 = vpop.xlane.xlu0 %2701
        %v2703 = vsel %vm887, %v2699, 0.0
        %2704 = vadd.xlane.f32.xlu0 %v2703
        %v2705 = vpop.xlane.xlu0 %2704
        %v2706 = vmul.f32 %v2702, %v1684
        %v2707 = vmul.f32 %v2705, %v1684
        %v2708 = vadd.f32 %v2706, 1e-05
        %v2709 = vadd.f32 %v2707, 1e-05
        %v2710 = vrsqrt.pop %v2708
        %v2711 = vmul.f32 %v2710, %v2708
        %v2712 = vmul.f32 %v2711, %v2710
        %v2713 = vmul.f32 0.5, %v2712
        %v2714 = vsub.f32 1.5, %v2713
        %v2715 = vmul.f32 %v2710, %v2714
        %vm2716 = vweird.f32 %v2708
        %vm2717 = vweird.f32 %v2710
        %vm2718 = vmor %vm2716, %vm2717
        %v2719 = vsel %vm2718, %v2710, %v2715
        %v2720 = vrsqrt.pop %v2709
        %v2721 = vmul.f32 %v2720, %v2709
        %v2722 = vmul.f32 %v2721, %v2720
        %v2723 = vmul.f32 0.5, %v2722
        %v2724 = vsub.f32 1.5, %v2723
        %v2725 = vmul.f32 %v2720, %v2724
        %vm2726 = vweird.f32 %v2709
        %vm2727 = vweird.f32 %v2720
        %vm2728 = vmor %vm2726, %vm2727
        %v2729 = vsel %vm2728, %v2720, %v2725
        %v2730 = vmul.f32 %v2696, %v2719
        %v2731 = vmul.f32 %v2697, %v2729
        %v2732 = vperm.slane %v877, 2
        %v2733 = vmul.f32 %v2730, %v2732
        %v2734 = vmul.f32 %v2731, %v2732
        %v2735 = vperm.slane %v878, 2
        %v2736 = vadd.f32 %v2733, %v2735
        %v2737 = vadd.f32 %v2734, %v2735
        %2738 = vst.msk [vmem:[%s840] sm:$0xff] %vm887, %v2736
        %2739 = vst.msk [vmem:[%s840 + $0x8] sm:$0xff] %vm887, %v2737
        %s2740 = sand.u32 %s490, 1
        %s2741 = scalar_lea.sflag [#allocation4], %s2740
        %s2742 = sand.u32 %s490, 1
        %s2743 = smul.addr %s2742, 16
        %s2744 = scalar_lea.vmem [#allocation19], %s2743
        // Predicated region
        $region141: #{tpu_custom_call.1} parent=99 // pred_check
          %p2745 = pneg %p500
        $region142: #{tpu_custom_call.1} parent=99 // pred_check_branch
          %2747 = sbr.rel (%p2745) target = $region144
        $region143: #{tpu_custom_call.1} parent=99 // pred_region
          %s2748 = smul.u32 2, %s42
          %2750 = vsyncadd %s2741, 0
          %s2751 = smul.addr %s2748, 8
          %s2752 = scalar_lea.hbm %s20, %s2751
          %s2753 = sshll.u32 %s2744, 4
          %s2754 = int_to_ptr.vmem [resolvable:$true] %s2753
          %s2755 = sshll.u32 %s2752, 4
          %s2756 = int_to_ptr.hbm [resolvable:$true] %s2755
          %2761 = dma.vmem_to_hbm [thread:$0]  %s2754, 256, %s2756, %s2741, 128, 128, 8
        $region144: #{tpu_custom_call.1} parent=99 // pred_fallthru
          _
      $region100: #{tpu_custom_call.1} parent=5 // pred_fallthru
        _
      %p2762 = scmp.le.s32.totalorder 2, %s37
      // Predicated region
      $region145: #{tpu_custom_call.1} parent=5 // pred_check
        %p2763 = pneg %p2762
      $region146: #{tpu_custom_call.1} parent=5 // pred_check_branch
        %2765 = sbr.rel (%p2763) target = $region148
      $region147: #{tpu_custom_call.1} parent=5 // pred_region
        %s2766 = ssub.s32 %s37, 2
        // Predicated region
        $region149: #{tpu_custom_call.1} parent=147 // pred_check
          %p2767 = pneg %p506
        $region150: #{tpu_custom_call.1} parent=147 // pred_check_branch
          %2769 = sbr.rel (%p2767) target = $region152
        $region151: #{tpu_custom_call.1} parent=147 // pred_region
          %s2770 = sand.u32 %s491, 1
          %s2771 = scalar_lea.sflag [#allocation4], %s2770
          %s2772 = sand.u32 %s491, 1
          %s2773 = smul.addr %s2772, 16
          %s2774 = scalar_lea.vmem [#allocation19], %s2773
          %2776 = dma.done %s2771, 256
        $region152: #{tpu_custom_call.1} parent=147 // pred_fallthru
          _
      $region148: #{tpu_custom_call.1} parent=5 // pred_fallthru
        _
    $region6: #{tpu_custom_call.1} parent=1 // loop_footer
      %s41 = sadd.s32 1, %s37
    $region7: #{tpu_custom_call.1} parent=1 // loop_footer_branch
      %36 = sbr.rel target = $region3
    $region8: #{tpu_custom_call.1} parent=1 // loop_exit
      _
    %2777 = vsyncpa [#allocation3], 1
    %s2778 = scalar_lea.sflag [#allocation3], 1
    %2779 = vsyncpa %s2778, 1
    %2780 = vsyncpa [#allocation6], 1
    %2781 = vsyncpa [#allocation9], 1
    %2782 = vsyncpa [#allocation12], 1
    %2783 = vsyncpa [#allocation15], 1
    %2784 = vsyncpa [#allocation18], 1
    %2785 = vsyncpa [#allocation4], 1
    %s2786 = scalar_lea.sflag [#allocation4], 1
    %2787 = vsyncpa %s2786, 1

</llo_original>
